<compile_context>
chip_gen: v7x
topology: tpu7x:2x2x1
jax: 0.10.0
libtpu: 0.0.40
codegen_flags: <defaults>
</compile_context>

<pallas_src>
import math
import functools

import jax
import jax.numpy as jnp
from jax.experimental import pallas as pl
from jax.experimental.pallas import tpu as pltpu


def _box_attn_kernel(q_ref, k_ref, v_ref, wg_ref,
                     wq_ref, bq_ref, wk_ref, bk_ref,
                     wv_ref, bv_ref, wo_ref, bo_ref,
                     out_ref, att_ref,
                     *, h, d_k, d_v, nq, nk, b_tile):
    f32 = jnp.float32
    bf16 = jnp.bfloat16

    # ---- Q/K/V projections: big 2-D MXU matmuls over the whole batch tile.
    # bf16 operands (weights arrive pre-cast), f32 accumulation, f32 bias add.
    qp = jnp.dot(q_ref[...].astype(bf16), wq_ref[...],
                 preferred_element_type=f32) + bq_ref[...]          # (Bt*nq, h*d_k)
    kp = jnp.dot(k_ref[...].astype(bf16), wk_ref[...],
                 preferred_element_type=f32) + bk_ref[...]          # (Bt*nk, h*d_k)
    vp = jnp.dot(v_ref[...].astype(bf16), wv_ref[...],
                 preferred_element_type=f32) + bv_ref[...]          # (Bt*nk, h*d_v)

    # Fold the 1/sqrt(d_k) score scale into q once (nq*h*d_k elements instead of
    # scaling every h*nq*nk score).
    qp = qp * (1.0 / math.sqrt(d_k))

    # ---- head split: (Bt*seq, h*d) -> (Bt*h, seq, d) --------------------------
    # Pure relayout expressed as static lane slices + a stack along a leading
    # axis; no per-head matmuls and no per-head stores.  Everything below is
    # batched over g = Bt*h with a single leading batch dim.
    q3 = qp.reshape(b_tile, nq, h * d_k)
    k3 = kp.reshape(b_tile, nk, h * d_k)
    v3 = vp.reshape(b_tile, nk, h * d_v)

    def split_heads(x3, seq, d):
        parts = [x3[:, :, j * d:(j + 1) * d] for j in range(h)]     # (Bt, seq, d) each
        return jnp.stack(parts, axis=1).reshape(b_tile * h, seq, d)

    qh = split_heads(q3, nq, d_k).astype(bf16)                      # (Bt*h, nq, d_k)
    kh = split_heads(k3, nk, d_k).astype(bf16)                      # (Bt*h, nk, d_k)
    vh = split_heads(v3, nk, d_v).astype(bf16)                      # (Bt*h, nk, d_v)

    # ---- scores, batched over (batch, head): contraction on the last axis so
    # there is no explicit K transpose; bf16 operands, f32 accumulation.
    s = jnp.einsum('gqd,gkd->gqk', qh, kh,
                   preferred_element_type=f32)                      # (Bt*h, nq, nk)

    # ---- box-attention combine + softmax (f32 elementwise math) --------------
    # TODO(synk): with nk < 128 the softmax runs at nk/128 lane occupancy; pack
    # more of the problem into the lane axis for production box counts.
    w_g = wg_ref[...].reshape(b_tile * h, nq, nk)                   # leading-dim merge
    w_mn = jnp.log(jnp.maximum(w_g, 1e-6)) + s
    w_mn = w_mn - jnp.max(w_mn, axis=-1, keepdims=True)
    e = jnp.exp(w_mn)
    # Exact normalization: `att` is returned to the caller, rows must sum to 1.
    p = e / jnp.sum(e, axis=-1, keepdims=True)

    # One dense store of the whole attention map (no per-head stores).
    att_ref[...] = p.reshape(b_tile, h, nq, nk).astype(att_ref.dtype)

    # ---- att @ V, batched over (batch, head); dropout is identity (eval) -----
    pv = jnp.einsum('gqk,gkd->gqd', p.astype(bf16), vh,
                    preferred_element_type=f32)                     # (Bt*h, nq, d_v)

    # ---- head merge: (Bt*h, nq, d_v) -> (Bt*nq, h*d_v).  Value-level lane
    # concat (replaces strided masked stores into a VMEM scratch slab).
    pv4 = pv.reshape(b_tile, h, nq, d_v)
    o_cat = jnp.concatenate([pv4[:, j] for j in range(h)], axis=-1)  # (Bt, nq, h*d_v)
    o_cat = o_cat.reshape(b_tile * nq, h * d_v).astype(bf16)

    # ---- output projection on the whole (Bt*nq, h*d_v) slab ------------------
    out = jnp.dot(o_cat, wo_ref[...], preferred_element_type=f32) + bo_ref[...]
    out_ref[...] = out.astype(out_ref.dtype)


def _vmem_budget_bytes():
    """Generation-aware scoped-VMEM budget (also used as vmem_limit_bytes)."""
    try:
        phys = pltpu.get_tpu_info().vmem_capacity_bytes
    except Exception:
        phys = 64 * 1024 * 1024            # conservative: v7x-sized per-core VMEM
    if phys >= 128 * 1024 * 1024:
        return 96 * 1024 * 1024            # v5e / v6e (128 MiB physical)
    return 48 * 1024 * 1024                # v7x (64 MiB physical): leave headroom


def _pick_b_tile(b_s, nq, nk, h, d_model, d_k, d_v, *,
                 vmem_limit_bytes, target_rows=256):
    """Pick how many batch elements to process per grid step.

    Targets >= `target_rows` projection rows per step (MXU feed, amortizes the
    ~0.35us/step overhead; tune to 128 on v5e, 512 on v6e) while accounting for
    resident weights/biases, double-buffered pipelined blocks, and in-kernel
    intermediates.  Keeps at least two grid steps when possible so the
    "parallel" batch axis can shard across both TensorCores on dual-TC chips.
    """
    # Resident weights (bf16) + biases (f32); counted at 2 buffers in case the
    # pl.Buffered(1) single-buffer request is not honoured by this build.
    w_elems = 2 * d_model * h * d_k + 2 * d_model * h * d_v
    b_elems = 2 * h * d_k + h * d_v + d_model
    resident = 2 * (2 * w_elems + 4 * b_elems)

    def footprint(bt):
        blocks = (4 * bt * nq * d_model            # q block (f32 in HBM)
                  + 2 * 4 * bt * nk * d_model      # k + v blocks
                  + 4 * bt * h * nq * nk           # w_g block
                  + 4 * bt * nq * d_model          # out block
                  + 4 * bt * h * nq * nk)          # att block
        inter = (4 * bt * (nq * h * d_k + nk * h * d_k + nk * h * d_v)   # qp/kp/vp f32
                 + 2 * bt * (nq * h * d_k + nk * h * d_k + nk * h * d_v) # bf16 head-split
                 + 3 * 4 * bt * h * nq * nk                              # s / exp / p
                 + 4 * bt * nq * h * d_v)                                # pv
        return resident + 2 * blocks + inter       # pipelined blocks double-buffered

    def legal(bt):
        if b_s % bt:
            return False
        # (8, 128) block rule on the flattened 2-D slabs (last dim == full dim).
        return bt == b_s or ((bt * nq) % 8 == 0 and (bt * nk) % 8 == 0)

    cands = [bt for bt in range(1, b_s + 1)
             if legal(bt) and footprint(bt) <= vmem_limit_bytes]
    if not cands:
        return next(bt for bt in range(1, b_s + 1) if legal(bt))
    multi = [bt for bt in cands if bt <= b_s // 2]   # keep >= 2 grid steps if we can
    pool = multi if multi else cands
    for bt in pool:
        if bt * nq >= target_rows:
            return bt
    return pool[-1]


def box_attention(queries, keys, values, rel_geom_weights, params,
                  *, d_model, d_k, d_v, h, b_tile=None):
    b_s, nq, _ = queries.shape
    nk = keys.shape[1]

    wq, bq, wk, bk, wv, bv, wo, bo = params
    # Weights pre-cast to bf16 (MXU-native operands; halves resident VMEM and
    # weight DMA).  Biases stay f32, 2-D (1, dim) for clean row broadcast.
    wq, wk, wv, wo = (w.astype(jnp.bfloat16) for w in (wq, wk, wv, wo))
    bq, bk, bv, bo = (b.reshape(1, -1).astype(jnp.float32) for b in (bq, bk, bv, bo))

    vmem_limit = _vmem_budget_bytes()
    if b_tile is None:
        b_tile = _pick_b_tile(b_s, nq, nk, h, d_model, d_k, d_v,
                              vmem_limit_bytes=vmem_limit)
    assert b_s % b_tile == 0, "b_tile must divide the batch size"

    # Lane/sublane-friendly flat presentation: (b_s*seq, d_model) slabs.
    q2 = queries.reshape(b_s * nq, d_model)
    k2 = keys.reshape(b_s * nk, d_model)
    v2 = values.reshape(b_s * nk, d_model)

    kernel = functools.partial(_box_attn_kernel,
                               h=h, d_k=d_k, d_v=d_v, nq=nq, nk=nk, b_tile=b_tile)

    out_shape = (
        jax.ShapeDtypeStruct((b_s * nq, d_model), jnp.float32),
        jax.ShapeDtypeStruct((b_s, h, nq, nk), jnp.float32),
    )

    def build(weight_pipeline_mode):
        def wspec(shape):
            kwargs = {}
            if weight_pipeline_mode is not None:
                kwargs["pipeline_mode"] = weight_pipeline_mode
            return pl.BlockSpec(shape, lambda b, _s=shape: tuple(0 for _ in _s),
                                **kwargs)

        grid_spec = pltpu.PrefetchScalarGridSpec(
            num_scalar_prefetch=0,
            grid=(b_s // b_tile,),
            in_specs=[
                pl.BlockSpec((b_tile * nq, d_model), lambda b: (b, 0)),
                pl.BlockSpec((b_tile * nk, d_model), lambda b: (b, 0)),
                pl.BlockSpec((b_tile * nk, d_model), lambda b: (b, 0)),
                pl.BlockSpec((b_tile, h, nq, nk), lambda b: (b, 0, 0, 0)),
                wspec((d_model, h * d_k)), wspec((1, h * d_k)),
                wspec((d_model, h * d_k)), wspec((1, h * d_k)),
                wspec((d_model, h * d_v)), wspec((1, h * d_v)),
                wspec((h * d_v, d_model)), wspec((1, d_model)),
            ],
            out_specs=[
                pl.BlockSpec((b_tile * nq, d_model), lambda b: (b, 0)),
                pl.BlockSpec((b_tile, h, nq, nk), lambda b: (b, 0, 0, 0)),
            ],
        )
        return pl.pallas_call(
            kernel,
            out_shape=out_shape,
            grid_spec=grid_spec,
            compiler_params=pltpu.CompilerParams(
                dimension_semantics=("parallel",),
                vmem_limit_bytes=vmem_limit),
        )

    args = (q2, k2, v2, rel_geom_weights, wq, bq, wk, bk, wv, bv, wo, bo)
    try:
        # Grid-invariant weight/bias blocks: request single buffering so they
        # are not duplicated in VMEM by the default double-buffering.
        out_flat, att = build(pl.Buffered(1))(*args)
    except Exception:
        # pl.Buffered(1) not supported by this JAX/Mosaic build; fall back to
        # default buffering (the VMEM budget already accounts for 2 buffers).
        out_flat, att = build(None)(*args)

    return out_flat.reshape(b_s, nq, d_model), att


def xavier_uniform(key, fan_in, fan_out):
    bound = math.sqrt(6.0 / (fan_in + fan_out))
    # Stored as (in, out) so the kernel computes x @ W.
    return jax.random.uniform(key, (fan_in, fan_out), jnp.float32, -bound, bound)


def reference(queries, keys, values, w_g, params, *, d_model, d_k, d_v, h):
    wq, bq, wk, bk, wv, bv, wo, bo = params
    b_s, nq, _ = queries.shape
    nk = keys.shape[1]
    q = (queries @ wq + bq).reshape(b_s, nq, h, d_k).transpose(0, 2, 1, 3)
    k = (keys @ wk + bk).reshape(b_s, nk, h, d_k).transpose(0, 2, 3, 1)
    v = (values @ wv + bv).reshape(b_s, nk, h, d_v).transpose(0, 2, 1, 3)
    att = jnp.einsum("bhqd,bhdk->bhqk", q, k) / math.sqrt(d_k)
    w_mn = jnp.log(jnp.clip(w_g, 1e-6)) + att
    att = jax.nn.softmax(w_mn, axis=-1)
    out = jnp.einsum("bhqk,bhkd->bhqd", att, v)
    out = out.transpose(0, 2, 1, 3).reshape(b_s, nq, h * d_v)
    out = out @ wo + bo
    return out, att


if __name__ == "__main__":
    d_model, d_k, d_v, h = 32, 8, 8, 4
    b_s, nq, nk = 2, 8, 8

    key = jax.random.PRNGKey(0)
    ks = jax.random.split(key, 8)

    # Deterministic synthetic parameters (xavier_uniform weights, zero biases,
    # matching the module's _init_weights).
    params = (
        xavier_uniform(ks[0], d_model, h * d_k), jnp.zeros((h * d_k,), jnp.float32),
        xavier_uniform(ks[1], d_model, h * d_k), jnp.zeros((h * d_k,), jnp.float32),
        xavier_uniform(ks[2], d_model, h * d_v), jnp.zeros((h * d_v,), jnp.float32),
        xavier_uniform(ks[3], h * d_v, d_model), jnp.zeros((d_model,), jnp.float32),
    )

    queries = jax.random.normal(ks[4], (b_s, nq, d_model), jnp.float32)
    keys = jax.random.normal(ks[5], (b_s, nk, d_model), jnp.float32)
    values = jax.random.normal(ks[6], (b_s, nk, d_model), jnp.float32)
    # Relative geometry weights are non-negative (ReLU'd geometry embeddings upstream).
    rel_geom = jax.nn.relu(jax.random.normal(ks[7], (b_s, h, nq, nk), jnp.float32))

    out, att = box_attention(queries, keys, values, rel_geom, params,
                             d_model=d_model, d_k=d_k, d_v=d_v, h=h)
    out, att = jax.block_until_ready(out), jax.block_until_ready(att)

    out_ref_v, att_ref_v = reference(queries, keys, values, rel_geom, params,
                                     d_model=d_model, d_k=d_k, d_v=d_v, h=h)
    # Tolerances account for bf16 MXU operands everywhere (projections, scores,
    # PV, output projection) with f32 accumulation; the reference is pure f32.
    assert jnp.allclose(out, out_ref_v, atol=5e-2, rtol=5e-2), "out mismatch"
    assert jnp.allclose(att, att_ref_v, atol=3e-2, rtol=3e-2), "att mismatch"

    print("KERNEL_OK")
</pallas_src>

<mosaic_0001>
module attributes {stable_mosaic.version = 11 : i64} {
  func.func @_box_attn_kernel(%arg0: i32, %arg1: memref<8x32xf32, #tpu.memory_space<vmem>>, %arg2: memref<8x32xf32, #tpu.memory_space<vmem>>, %arg3: memref<8x32xf32, #tpu.memory_space<vmem>>, %arg4: memref<1x4x8x8xf32, #tpu.memory_space<vmem>>, %arg5: memref<32x32xbf16, #tpu.memory_space<vmem>>, %arg6: memref<1x32xf32, #tpu.memory_space<vmem>>, %arg7: memref<32x32xbf16, #tpu.memory_space<vmem>>, %arg8: memref<1x32xf32, #tpu.memory_space<vmem>>, %arg9: memref<32x32xbf16, #tpu.memory_space<vmem>>, %arg10: memref<1x32xf32, #tpu.memory_space<vmem>>, %arg11: memref<32x32xbf16, #tpu.memory_space<vmem>>, %arg12: memref<1x32xf32, #tpu.memory_space<vmem>>, %arg13: memref<8x32xf32, #tpu.memory_space<vmem>>, %arg14: memref<1x4x8x8xf32, #tpu.memory_space<vmem>>) attributes {dimension_semantics = [#tpu.dimension_semantics<parallel>], iteration_bounds = array<i64: 2>, scalar_prefetch = 0 : i64, scratch_operands = 0 : i64, tpu.core_type = #tpu.core_type<tc>, window_params = [{transform_indices = @transform_0, window_bounds = array<i64: 8, 32>}, {transform_indices = @transform_1, window_bounds = array<i64: 8, 32>}, {transform_indices = @transform_2, window_bounds = array<i64: 8, 32>}, {transform_indices = @transform_3, window_bounds = array<i64: 1, 4, 8, 8>}, {pipeline_mode = #tpu.pipeline_mode<synchronous>, transform_indices = @transform_4, window_bounds = array<i64: 32, 32>}, {pipeline_mode = #tpu.pipeline_mode<synchronous>, transform_indices = @transform_5, window_bounds = array<i64: 1, 32>}, {pipeline_mode = #tpu.pipeline_mode<synchronous>, transform_indices = @transform_6, window_bounds = array<i64: 32, 32>}, {pipeline_mode = #tpu.pipeline_mode<synchronous>, transform_indices = @transform_7, window_bounds = array<i64: 1, 32>}, {pipeline_mode = #tpu.pipeline_mode<synchronous>, transform_indices = @transform_8, window_bounds = array<i64: 32, 32>}, {pipeline_mode = #tpu.pipeline_mode<synchronous>, transform_indices = @transform_9, window_bounds = array<i64: 1, 32>}, {pipeline_mode = #tpu.pipeline_mode<synchronous>, transform_indices = @transform_10, window_bounds = array<i64: 32, 32>}, {pipeline_mode = #tpu.pipeline_mode<synchronous>, transform_indices = @transform_11, window_bounds = array<i64: 1, 32>}, {transform_indices = @transform_12, window_bounds = array<i64: 8, 32>}, {transform_indices = @transform_13, window_bounds = array<i64: 1, 4, 8, 8>}]} {
    %c0 = arith.constant 0 : index
    %c0_0 = arith.constant 0 : index
    %0 = vector.load %arg1[%c0, %c0_0] : memref<8x32xf32, #tpu.memory_space<vmem>>, vector<8x32xf32>
    %1 = arith.truncf %0 : vector<8x32xf32> to vector<8x32xbf16>
    %c0_1 = arith.constant 0 : index
    %c0_2 = arith.constant 0 : index
    %2 = vector.load %arg5[%c0_1, %c0_2] : memref<32x32xbf16, #tpu.memory_space<vmem>>, vector<32x32xbf16>
    %cst = arith.constant dense<0.000000e+00> : vector<8x32xf32>
    %3 = tpu.matmul %1, %2, %cst {dimension_numbers = #tpu.dot_dimension_numbers<[1], [0], [0], [1], [0, 0, 1, 1], [], []>} : vector<8x32xbf16>, vector<32x32xbf16>, vector<8x32xf32> -> vector<8x32xf32>
    %c0_3 = arith.constant 0 : index
    %c0_4 = arith.constant 0 : index
    %4 = vector.load %arg6[%c0_3, %c0_4] : memref<1x32xf32, #tpu.memory_space<vmem>>, vector<1x32xf32>
    %5 = vector.broadcast %4 : vector<1x32xf32> to vector<8x32xf32>
    %6 = arith.addf %3, %5 : vector<8x32xf32>
    %c0_5 = arith.constant 0 : index
    %c0_6 = arith.constant 0 : index
    %7 = vector.load %arg2[%c0_5, %c0_6] : memref<8x32xf32, #tpu.memory_space<vmem>>, vector<8x32xf32>
    %8 = arith.truncf %7 : vector<8x32xf32> to vector<8x32xbf16>
    %c0_7 = arith.constant 0 : index
    %c0_8 = arith.constant 0 : index
    %9 = vector.load %arg7[%c0_7, %c0_8] : memref<32x32xbf16, #tpu.memory_space<vmem>>, vector<32x32xbf16>
    %cst_9 = arith.constant dense<0.000000e+00> : vector<8x32xf32>
    %10 = tpu.matmul %8, %9, %cst_9 {dimension_numbers = #tpu.dot_dimension_numbers<[1], [0], [0], [1], [0, 0, 1, 1], [], []>} : vector<8x32xbf16>, vector<32x32xbf16>, vector<8x32xf32> -> vector<8x32xf32>
    %c0_10 = arith.constant 0 : index
    %c0_11 = arith.constant 0 : index
    %11 = vector.load %arg8[%c0_10, %c0_11] : memref<1x32xf32, #tpu.memory_space<vmem>>, vector<1x32xf32>
    %12 = vector.broadcast %11 : vector<1x32xf32> to vector<8x32xf32>
    %13 = arith.addf %10, %12 : vector<8x32xf32>
    %c0_12 = arith.constant 0 : index
    %c0_13 = arith.constant 0 : index
    %14 = vector.load %arg3[%c0_12, %c0_13] : memref<8x32xf32, #tpu.memory_space<vmem>>, vector<8x32xf32>
    %15 = arith.truncf %14 : vector<8x32xf32> to vector<8x32xbf16>
    %c0_14 = arith.constant 0 : index
    %c0_15 = arith.constant 0 : index
    %16 = vector.load %arg9[%c0_14, %c0_15] : memref<32x32xbf16, #tpu.memory_space<vmem>>, vector<32x32xbf16>
    %cst_16 = arith.constant dense<0.000000e+00> : vector<8x32xf32>
    %17 = tpu.matmul %15, %16, %cst_16 {dimension_numbers = #tpu.dot_dimension_numbers<[1], [0], [0], [1], [0, 0, 1, 1], [], []>} : vector<8x32xbf16>, vector<32x32xbf16>, vector<8x32xf32> -> vector<8x32xf32>
    %c0_17 = arith.constant 0 : index
    %c0_18 = arith.constant 0 : index
    %18 = vector.load %arg10[%c0_17, %c0_18] : memref<1x32xf32, #tpu.memory_space<vmem>>, vector<1x32xf32>
    %19 = vector.broadcast %18 : vector<1x32xf32> to vector<8x32xf32>
    %20 = arith.addf %17, %19 : vector<8x32xf32>
    %cst_19 = arith.constant 0.353553385 : f32
    %21 = vector.broadcast %cst_19 : f32 to vector<8x32xf32>
    %22 = arith.mulf %6, %21 : vector<8x32xf32>
    %23 = vector.shape_cast %22 : vector<8x32xf32> to vector<1x8x32xf32>
    %24 = vector.shape_cast %13 : vector<8x32xf32> to vector<1x8x32xf32>
    %25 = vector.shape_cast %20 : vector<8x32xf32> to vector<1x8x32xf32>
    %26 = vector.extract_strided_slice %23 {offsets = [0, 0, 0], sizes = [1, 8, 8], strides = [1, 1, 1]} : vector<1x8x32xf32> to vector<1x8x8xf32>
    %27 = vector.extract_strided_slice %23 {offsets = [0, 0, 8], sizes = [1, 8, 8], strides = [1, 1, 1]} : vector<1x8x32xf32> to vector<1x8x8xf32>
    %28 = vector.extract_strided_slice %23 {offsets = [0, 0, 16], sizes = [1, 8, 8], strides = [1, 1, 1]} : vector<1x8x32xf32> to vector<1x8x8xf32>
    %29 = vector.extract_strided_slice %23 {offsets = [0, 0, 24], sizes = [1, 8, 8], strides = [1, 1, 1]} : vector<1x8x32xf32> to vector<1x8x8xf32>
    %30 = vector.shape_cast %26 : vector<1x8x8xf32> to vector<1x1x8x8xf32>
    %31 = vector.shape_cast %27 : vector<1x8x8xf32> to vector<1x1x8x8xf32>
    %32 = vector.shape_cast %28 : vector<1x8x8xf32> to vector<1x1x8x8xf32>
    %33 = vector.shape_cast %29 : vector<1x8x8xf32> to vector<1x1x8x8xf32>
    %34 = tpu.concatenate %30, %31, %32, %33 in 1 : vector<1x1x8x8xf32>, vector<1x1x8x8xf32>, vector<1x1x8x8xf32>, vector<1x1x8x8xf32> -> vector<1x4x8x8xf32>
    %35 = vector.shape_cast %34 : vector<1x4x8x8xf32> to vector<4x8x8xf32>
    %36 = arith.truncf %35 : vector<4x8x8xf32> to vector<4x8x8xbf16>
    %37 = vector.extract_strided_slice %24 {offsets = [0, 0, 0], sizes = [1, 8, 8], strides = [1, 1, 1]} : vector<1x8x32xf32> to vector<1x8x8xf32>
    %38 = vector.extract_strided_slice %24 {offsets = [0, 0, 8], sizes = [1, 8, 8], strides = [1, 1, 1]} : vector<1x8x32xf32> to vector<1x8x8xf32>
    %39 = vector.extract_strided_slice %24 {offsets = [0, 0, 16], sizes = [1, 8, 8], strides = [1, 1, 1]} : vector<1x8x32xf32> to vector<1x8x8xf32>
    %40 = vector.extract_strided_slice %24 {offsets = [0, 0, 24], sizes = [1, 8, 8], strides = [1, 1, 1]} : vector<1x8x32xf32> to vector<1x8x8xf32>
    %41 = vector.shape_cast %37 : vector<1x8x8xf32> to vector<1x1x8x8xf32>
    %42 = vector.shape_cast %38 : vector<1x8x8xf32> to vector<1x1x8x8xf32>
    %43 = vector.shape_cast %39 : vector<1x8x8xf32> to vector<1x1x8x8xf32>
    %44 = vector.shape_cast %40 : vector<1x8x8xf32> to vector<1x1x8x8xf32>
    %45 = tpu.concatenate %41, %42, %43, %44 in 1 : vector<1x1x8x8xf32>, vector<1x1x8x8xf32>, vector<1x1x8x8xf32>, vector<1x1x8x8xf32> -> vector<1x4x8x8xf32>
    %46 = vector.shape_cast %45 : vector<1x4x8x8xf32> to vector<4x8x8xf32>
    %47 = arith.truncf %46 : vector<4x8x8xf32> to vector<4x8x8xbf16>
    %48 = vector.extract_strided_slice %25 {offsets = [0, 0, 0], sizes = [1, 8, 8], strides = [1, 1, 1]} : vector<1x8x32xf32> to vector<1x8x8xf32>
    %49 = vector.extract_strided_slice %25 {offsets = [0, 0, 8], sizes = [1, 8, 8], strides = [1, 1, 1]} : vector<1x8x32xf32> to vector<1x8x8xf32>
    %50 = vector.extract_strided_slice %25 {offsets = [0, 0, 16], sizes = [1, 8, 8], strides = [1, 1, 1]} : vector<1x8x32xf32> to vector<1x8x8xf32>
    %51 = vector.extract_strided_slice %25 {offsets = [0, 0, 24], sizes = [1, 8, 8], strides = [1, 1, 1]} : vector<1x8x32xf32> to vector<1x8x8xf32>
    %52 = vector.shape_cast %48 : vector<1x8x8xf32> to vector<1x1x8x8xf32>
    %53 = vector.shape_cast %49 : vector<1x8x8xf32> to vector<1x1x8x8xf32>
    %54 = vector.shape_cast %50 : vector<1x8x8xf32> to vector<1x1x8x8xf32>
    %55 = vector.shape_cast %51 : vector<1x8x8xf32> to vector<1x1x8x8xf32>
    %56 = tpu.concatenate %52, %53, %54, %55 in 1 : vector<1x1x8x8xf32>, vector<1x1x8x8xf32>, vector<1x1x8x8xf32>, vector<1x1x8x8xf32> -> vector<1x4x8x8xf32>
    %57 = vector.shape_cast %56 : vector<1x4x8x8xf32> to vector<4x8x8xf32>
    %58 = arith.truncf %57 : vector<4x8x8xf32> to vector<4x8x8xbf16>
    "tpu.trace_start"() <{level = 10 : i32, message = "gqd,gkd->gqk"}> : () -> ()
    %cst_20 = arith.constant dense<0.000000e+00> : vector<4x8x8xf32>
    %59 = tpu.matmul %36, %47, %cst_20 {dimension_numbers = #tpu.dot_dimension_numbers<[2], [2], [1], [1], [0, 0, 0, 1, 1, 1], [0], [0]>} : vector<4x8x8xbf16>, vector<4x8x8xbf16>, vector<4x8x8xf32> -> vector<4x8x8xf32>
    "tpu.trace_stop"() : () -> ()
    %c0_21 = arith.constant 0 : index
    %c0_22 = arith.constant 0 : index
    %c0_23 = arith.constant 0 : index
    %c0_24 = arith.constant 0 : index
    %60 = vector.load %arg4[%c0_21, %c0_22, %c0_23, %c0_24] : memref<1x4x8x8xf32, #tpu.memory_space<vmem>>, vector<1x4x8x8xf32>
    %61 = vector.shape_cast %60 : vector<1x4x8x8xf32> to vector<4x8x8xf32>
    %cst_25 = arith.constant 9.99999997E-7 : f32
    %62 = vector.broadcast %cst_25 : f32 to vector<4x8x8xf32>
    %63 = arith.maximumf %61, %62 : vector<4x8x8xf32>
    %64 = math.log %63 : vector<4x8x8xf32>
    %65 = arith.addf %64, %59 : vector<4x8x8xf32>
    %cst_26 = arith.constant dense<0xFF800000> : vector<4x8xf32>
    %66 = vector.multi_reduction <maximumf>, %65, %cst_26 [2] : vector<4x8x8xf32> to vector<4x8xf32>
    %67 = vector.shape_cast %66 : vector<4x8xf32> to vector<4x8x1xf32>
    %68 = vector.broadcast %67 : vector<4x8x1xf32> to vector<4x8x8xf32>
    %69 = arith.subf %65, %68 : vector<4x8x8xf32>
    %70 = math.exp %69 : vector<4x8x8xf32>
    %cst_27 = arith.constant dense<0.000000e+00> : vector<4x8xf32>
    %71 = vector.multi_reduction <add>, %70, %cst_27 [2] : vector<4x8x8xf32> to vector<4x8xf32>
    %72 = vector.shape_cast %71 : vector<4x8xf32> to vector<4x8x1xf32>
    %73 = vector.broadcast %72 : vector<4x8x1xf32> to vector<4x8x8xf32>
    %74 = arith.divf %70, %73 : vector<4x8x8xf32>
    %75 = vector.shape_cast %74 : vector<4x8x8xf32> to vector<1x4x8x8xf32>
    %c0_28 = arith.constant 0 : index
    %c0_29 = arith.constant 0 : index
    %c0_30 = arith.constant 0 : index
    %c0_31 = arith.constant 0 : index
    %76 = vector.load %arg14[%c0_28, %c0_29, %c0_30, %c0_31] : memref<1x4x8x8xf32, #tpu.memory_space<vmem>>, vector<1x4x8x8xf32>
    tpu.vector_store %arg14[%c0_28, %c0_29, %c0_30, %c0_31], %75 {strides = array<i32>} : memref<1x4x8x8xf32, #tpu.memory_space<vmem>>, vector<1x4x8x8xf32>,
    %77 = arith.truncf %74 : vector<4x8x8xf32> to vector<4x8x8xbf16>
    "tpu.trace_start"() <{level = 10 : i32, message = "gqk,gkd->gqd"}> : () -> ()
    %cst_32 = arith.constant dense<0.000000e+00> : vector<4x8x8xf32>
    %78 = tpu.matmul %77, %58, %cst_32 {dimension_numbers = #tpu.dot_dimension_numbers<[2], [1], [1], [2], [0, 0, 0, 1, 1, 2], [0], [0]>} : vector<4x8x8xbf16>, vector<4x8x8xbf16>, vector<4x8x8xf32> -> vector<4x8x8xf32>
    "tpu.trace_stop"() : () -> ()
    %79 = vector.shape_cast %78 : vector<4x8x8xf32> to vector<1x4x8x8xf32>
    %80 = vector.extract_strided_slice %79 {offsets = [0, 0, 0, 0], sizes = [1, 1, 8, 8], strides = [1, 1, 1, 1]} : vector<1x4x8x8xf32> to vector<1x1x8x8xf32>
    %81 = vector.shape_cast %80 : vector<1x1x8x8xf32> to vector<1x8x8xf32>
    %82 = vector.extract_strided_slice %79 {offsets = [0, 1, 0, 0], sizes = [1, 1, 8, 8], strides = [1, 1, 1, 1]} : vector<1x4x8x8xf32> to vector<1x1x8x8xf32>
    %83 = vector.shape_cast %82 : vector<1x1x8x8xf32> to vector<1x8x8xf32>
    %84 = vector.extract_strided_slice %79 {offsets = [0, 2, 0, 0], sizes = [1, 1, 8, 8], strides = [1, 1, 1, 1]} : vector<1x4x8x8xf32> to vector<1x1x8x8xf32>
    %85 = vector.shape_cast %84 : vector<1x1x8x8xf32> to vector<1x8x8xf32>
    %86 = vector.extract_strided_slice %79 {offsets = [0, 3, 0, 0], sizes = [1, 1, 8, 8], strides = [1, 1, 1, 1]} : vector<1x4x8x8xf32> to vector<1x1x8x8xf32>
    %87 = vector.shape_cast %86 : vector<1x1x8x8xf32> to vector<1x8x8xf32>
    %88 = tpu.concatenate %81, %83, %85, %87 in 2 : vector<1x8x8xf32>, vector<1x8x8xf32>, vector<1x8x8xf32>, vector<1x8x8xf32> -> vector<1x8x32xf32>
    %89 = vector.shape_cast %88 : vector<1x8x32xf32> to vector<8x32xf32>
    %90 = arith.truncf %89 : vector<8x32xf32> to vector<8x32xbf16>
    %c0_33 = arith.constant 0 : index
    %c0_34 = arith.constant 0 : index
    %91 = vector.load %arg11[%c0_33, %c0_34] : memref<32x32xbf16, #tpu.memory_space<vmem>>, vector<32x32xbf16>
    %cst_35 = arith.constant dense<0.000000e+00> : vector<8x32xf32>
    %92 = tpu.matmul %90, %91, %cst_35 {dimension_numbers = #tpu.dot_dimension_numbers<[1], [0], [0], [1], [0, 0, 1, 1], [], []>} : vector<8x32xbf16>, vector<32x32xbf16>, vector<8x32xf32> -> vector<8x32xf32>
    %c0_36 = arith.constant 0 : index
    %c0_37 = arith.constant 0 : index
    %93 = vector.load %arg12[%c0_36, %c0_37] : memref<1x32xf32, #tpu.memory_space<vmem>>, vector<1x32xf32>
    %94 = vector.broadcast %93 : vector<1x32xf32> to vector<8x32xf32>
    %95 = arith.addf %92, %94 : vector<8x32xf32>
    %c0_38 = arith.constant 0 : index
    %c0_39 = arith.constant 0 : index
    %96 = vector.load %arg13[%c0_38, %c0_39] : memref<8x32xf32, #tpu.memory_space<vmem>>, vector<8x32xf32>
    tpu.vector_store %arg13[%c0_38, %c0_39], %95 {strides = array<i32>} : memref<8x32xf32, #tpu.memory_space<vmem>>, vector<8x32xf32>,
    return
  }
  func.func @transform_0(%arg0: i32) -> (i32, i32) {
    %c0_i32 = arith.constant 0 : i32
    %c0_i32_0 = arith.constant 0 : i32
    return %arg0, %c0_i32 : i32, i32
  }
  func.func @transform_1(%arg0: i32) -> (i32, i32) {
    %c0_i32 = arith.constant 0 : i32
    %c0_i32_0 = arith.constant 0 : i32
    return %arg0, %c0_i32 : i32, i32
  }
  func.func @transform_2(%arg0: i32) -> (i32, i32) {
    %c0_i32 = arith.constant 0 : i32
    %c0_i32_0 = arith.constant 0 : i32
    return %arg0, %c0_i32 : i32, i32
  }
  func.func @transform_3(%arg0: i32) -> (i32, i32, i32, i32) {
    %c0_i32 = arith.constant 0 : i32
    %c0_i32_0 = arith.constant 0 : i32
    %c0_i32_1 = arith.constant 0 : i32
    %c0_i32_2 = arith.constant 0 : i32
    return %arg0, %c0_i32, %c0_i32_0, %c0_i32_1 : i32, i32, i32, i32
  }
  func.func @transform_4(%arg0: i32) -> (i32, i32) {
    %c0_i32 = arith.constant 0 : i32
    %c0_i32_0 = arith.constant 0 : i32
    %c0_i32_1 = arith.constant 0 : i32
    return %c0_i32, %c0_i32_0 : i32, i32
  }
  func.func @transform_5(%arg0: i32) -> (i32, i32) {
    %c0_i32 = arith.constant 0 : i32
    %c0_i32_0 = arith.constant 0 : i32
    %c0_i32_1 = arith.constant 0 : i32
    return %c0_i32, %c0_i32_0 : i32, i32
  }
  func.func @transform_6(%arg0: i32) -> (i32, i32) {
    %c0_i32 = arith.constant 0 : i32
    %c0_i32_0 = arith.constant 0 : i32
    %c0_i32_1 = arith.constant 0 : i32
    return %c0_i32, %c0_i32_0 : i32, i32
  }
  func.func @transform_7(%arg0: i32) -> (i32, i32) {
    %c0_i32 = arith.constant 0 : i32
    %c0_i32_0 = arith.constant 0 : i32
    %c0_i32_1 = arith.constant 0 : i32
    return %c0_i32, %c0_i32_0 : i32, i32
  }
  func.func @transform_8(%arg0: i32) -> (i32, i32) {
    %c0_i32 = arith.constant 0 : i32
    %c0_i32_0 = arith.constant 0 : i32
    %c0_i32_1 = arith.constant 0 : i32
    return %c0_i32, %c0_i32_0 : i32, i32
  }
  func.func @transform_9(%arg0: i32) -> (i32, i32) {
    %c0_i32 = arith.constant 0 : i32
    %c0_i32_0 = arith.constant 0 : i32
    %c0_i32_1 = arith.constant 0 : i32
    return %c0_i32, %c0_i32_0 : i32, i32
  }
  func.func @transform_10(%arg0: i32) -> (i32, i32) {
    %c0_i32 = arith.constant 0 : i32
    %c0_i32_0 = arith.constant 0 : i32
    %c0_i32_1 = arith.constant 0 : i32
    return %c0_i32, %c0_i32_0 : i32, i32
  }
  func.func @transform_11(%arg0: i32) -> (i32, i32) {
    %c0_i32 = arith.constant 0 : i32
    %c0_i32_0 = arith.constant 0 : i32
    %c0_i32_1 = arith.constant 0 : i32
    return %c0_i32, %c0_i32_0 : i32, i32
  }
  func.func @transform_12(%arg0: i32) -> (i32, i32) {
    %c0_i32 = arith.constant 0 : i32
    %c0_i32_0 = arith.constant 0 : i32
    return %arg0, %c0_i32 : i32, i32
  }
  func.func @transform_13(%arg0: i32) -> (i32, i32, i32, i32) {
    %c0_i32 = arith.constant 0 : i32
    %c0_i32_0 = arith.constant 0 : i32
    %c0_i32_1 = arith.constant 0 : i32
    %c0_i32_2 = arith.constant 0 : i32
    return %arg0, %c0_i32, %c0_i32_0, %c0_i32_1 : i32, i32, i32, i32
  }
}

module attributes {stable_mosaic.version = 11 : i64} {
  func.func @_box_attn_kernel(%arg0: i32, %arg1: memref<8x32xf32, #tpu.memory_space<vmem>>, %arg2: memref<8x32xf32, #tpu.memory_space<vmem>>, %arg3: memref<8x32xf32, #tpu.memory_space<vmem>>, %arg4: memref<1x4x8x8xf32, #tpu.memory_space<vmem>>, %arg5: memref<32x32xbf16, #tpu.memory_space<vmem>>, %arg6: memref<1x32xf32, #tpu.memory_space<vmem>>, %arg7: memref<32x32xbf16, #tpu.memory_space<vmem>>, %arg8: memref<1x32xf32, #tpu.memory_space<vmem>>, %arg9: memref<32x32xbf16, #tpu.memory_space<vmem>>, %arg10: memref<1x32xf32, #tpu.memory_space<vmem>>, %arg11: memref<32x32xbf16, #tpu.memory_space<vmem>>, %arg12: memref<1x32xf32, #tpu.memory_space<vmem>>, %arg13: memref<8x32xf32, #tpu.memory_space<vmem>>, %arg14: memref<1x4x8x8xf32, #tpu.memory_space<vmem>>) attributes {dimension_semantics = [#tpu.dimension_semantics<parallel>], iteration_bounds = array<i64: 2>, scalar_prefetch = 0 : i64, scratch_operands = 0 : i64, tpu.core_type = #tpu.core_type<tc>, window_params = [{transform_indices = @transform_0, window_bounds = array<i64: 8, 32>}, {transform_indices = @transform_1, window_bounds = array<i64: 8, 32>}, {transform_indices = @transform_2, window_bounds = array<i64: 8, 32>}, {transform_indices = @transform_3, window_bounds = array<i64: 1, 4, 8, 8>}, {pipeline_mode = #tpu.pipeline_mode<synchronous>, transform_indices = @transform_4, window_bounds = array<i64: 32, 32>}, {pipeline_mode = #tpu.pipeline_mode<synchronous>, transform_indices = @transform_5, window_bounds = array<i64: 1, 32>}, {pipeline_mode = #tpu.pipeline_mode<synchronous>, transform_indices = @transform_6, window_bounds = array<i64: 32, 32>}, {pipeline_mode = #tpu.pipeline_mode<synchronous>, transform_indices = @transform_7, window_bounds = array<i64: 1, 32>}, {pipeline_mode = #tpu.pipeline_mode<synchronous>, transform_indices = @transform_8, window_bounds = array<i64: 32, 32>}, {pipeline_mode = #tpu.pipeline_mode<synchronous>, transform_indices = @transform_9, window_bounds = array<i64: 1, 32>}, {pipeline_mode = #tpu.pipeline_mode<synchronous>, transform_indices = @transform_10, window_bounds = array<i64: 32, 32>}, {pipeline_mode = #tpu.pipeline_mode<synchronous>, transform_indices = @transform_11, window_bounds = array<i64: 1, 32>}, {transform_indices = @transform_12, window_bounds = array<i64: 8, 32>}, {transform_indices = @transform_13, window_bounds = array<i64: 1, 4, 8, 8>}]} {
    %c0 = arith.constant 0 : index
    %c0_0 = arith.constant 0 : index
    %0 = vector.load %arg1[%c0, %c0_0] : memref<8x32xf32, #tpu.memory_space<vmem>>, vector<8x32xf32>
    %1 = arith.truncf %0 : vector<8x32xf32> to vector<8x32xbf16>
    %c0_1 = arith.constant 0 : index
    %c0_2 = arith.constant 0 : index
    %2 = vector.load %arg5[%c0_1, %c0_2] : memref<32x32xbf16, #tpu.memory_space<vmem>>, vector<32x32xbf16>
    %cst = arith.constant dense<0.000000e+00> : vector<8x32xf32>
    %3 = tpu.matmul %1, %2, %cst {dimension_numbers = #tpu.dot_dimension_numbers<[1], [0], [0], [1], [0, 0, 1, 1], [], []>} : vector<8x32xbf16>, vector<32x32xbf16>, vector<8x32xf32> -> vector<8x32xf32>
    %c0_3 = arith.constant 0 : index
    %c0_4 = arith.constant 0 : index
    %4 = vector.load %arg6[%c0_3, %c0_4] : memref<1x32xf32, #tpu.memory_space<vmem>>, vector<1x32xf32>
    %5 = vector.broadcast %4 : vector<1x32xf32> to vector<8x32xf32>
    %6 = arith.addf %3, %5 : vector<8x32xf32>
    %c0_5 = arith.constant 0 : index
    %c0_6 = arith.constant 0 : index
    %7 = vector.load %arg2[%c0_5, %c0_6] : memref<8x32xf32, #tpu.memory_space<vmem>>, vector<8x32xf32>
    %8 = arith.truncf %7 : vector<8x32xf32> to vector<8x32xbf16>
    %c0_7 = arith.constant 0 : index
    %c0_8 = arith.constant 0 : index
    %9 = vector.load %arg7[%c0_7, %c0_8] : memref<32x32xbf16, #tpu.memory_space<vmem>>, vector<32x32xbf16>
    %cst_9 = arith.constant dense<0.000000e+00> : vector<8x32xf32>
    %10 = tpu.matmul %8, %9, %cst_9 {dimension_numbers = #tpu.dot_dimension_numbers<[1], [0], [0], [1], [0, 0, 1, 1], [], []>} : vector<8x32xbf16>, vector<32x32xbf16>, vector<8x32xf32> -> vector<8x32xf32>
    %c0_10 = arith.constant 0 : index
    %c0_11 = arith.constant 0 : index
    %11 = vector.load %arg8[%c0_10, %c0_11] : memref<1x32xf32, #tpu.memory_space<vmem>>, vector<1x32xf32>
    %12 = vector.broadcast %11 : vector<1x32xf32> to vector<8x32xf32>
    %13 = arith.addf %10, %12 : vector<8x32xf32>
    %c0_12 = arith.constant 0 : index
    %c0_13 = arith.constant 0 : index
    %14 = vector.load %arg3[%c0_12, %c0_13] : memref<8x32xf32, #tpu.memory_space<vmem>>, vector<8x32xf32>
    %15 = arith.truncf %14 : vector<8x32xf32> to vector<8x32xbf16>
    %c0_14 = arith.constant 0 : index
    %c0_15 = arith.constant 0 : index
    %16 = vector.load %arg9[%c0_14, %c0_15] : memref<32x32xbf16, #tpu.memory_space<vmem>>, vector<32x32xbf16>
    %cst_16 = arith.constant dense<0.000000e+00> : vector<8x32xf32>
    %17 = tpu.matmul %15, %16, %cst_16 {dimension_numbers = #tpu.dot_dimension_numbers<[1], [0], [0], [1], [0, 0, 1, 1], [], []>} : vector<8x32xbf16>, vector<32x32xbf16>, vector<8x32xf32> -> vector<8x32xf32>
    %c0_17 = arith.constant 0 : index
    %c0_18 = arith.constant 0 : index
    %18 = vector.load %arg10[%c0_17, %c0_18] : memref<1x32xf32, #tpu.memory_space<vmem>>, vector<1x32xf32>
    %19 = vector.broadcast %18 : vector<1x32xf32> to vector<8x32xf32>
    %20 = arith.addf %17, %19 : vector<8x32xf32>
    %cst_19 = arith.constant 0.353553385 : f32
    %21 = vector.broadcast %cst_19 : f32 to vector<8x32xf32>
    %22 = arith.mulf %6, %21 : vector<8x32xf32>
    %23 = vector.shape_cast %22 : vector<8x32xf32> to vector<1x8x32xf32>
    %24 = vector.shape_cast %13 : vector<8x32xf32> to vector<1x8x32xf32>
    %25 = vector.shape_cast %20 : vector<8x32xf32> to vector<1x8x32xf32>
    %26 = vector.extract_strided_slice %23 {offsets = [0, 0, 0], sizes = [1, 8, 8], strides = [1, 1, 1]} : vector<1x8x32xf32> to vector<1x8x8xf32>
    %27 = vector.extract_strided_slice %23 {offsets = [0, 0, 8], sizes = [1, 8, 8], strides = [1, 1, 1]} : vector<1x8x32xf32> to vector<1x8x8xf32>
    %28 = vector.extract_strided_slice %23 {offsets = [0, 0, 16], sizes = [1, 8, 8], strides = [1, 1, 1]} : vector<1x8x32xf32> to vector<1x8x8xf32>
    %29 = vector.extract_strided_slice %23 {offsets = [0, 0, 24], sizes = [1, 8, 8], strides = [1, 1, 1]} : vector<1x8x32xf32> to vector<1x8x8xf32>
    %30 = vector.shape_cast %26 : vector<1x8x8xf32> to vector<1x1x8x8xf32>
    %31 = vector.shape_cast %27 : vector<1x8x8xf32> to vector<1x1x8x8xf32>
    %32 = vector.shape_cast %28 : vector<1x8x8xf32> to vector<1x1x8x8xf32>
    %33 = vector.shape_cast %29 : vector<1x8x8xf32> to vector<1x1x8x8xf32>
    %34 = tpu.concatenate %30, %31, %32, %33 in 1 : vector<1x1x8x8xf32>, vector<1x1x8x8xf32>, vector<1x1x8x8xf32>, vector<1x1x8x8xf32> -> vector<1x4x8x8xf32>
    %35 = vector.shape_cast %34 : vector<1x4x8x8xf32> to vector<4x8x8xf32>
    %36 = arith.truncf %35 : vector<4x8x8xf32> to vector<4x8x8xbf16>
    %37 = vector.extract_strided_slice %24 {offsets = [0, 0, 0], sizes = [1, 8, 8], strides = [1, 1, 1]} : vector<1x8x32xf32> to vector<1x8x8xf32>
    %38 = vector.extract_strided_slice %24 {offsets = [0, 0, 8], sizes = [1, 8, 8], strides = [1, 1, 1]} : vector<1x8x32xf32> to vector<1x8x8xf32>
    %39 = vector.extract_strided_slice %24 {offsets = [0, 0, 16], sizes = [1, 8, 8], strides = [1, 1, 1]} : vector<1x8x32xf32> to vector<1x8x8xf32>
    %40 = vector.extract_strided_slice %24 {offsets = [0, 0, 24], sizes = [1, 8, 8], strides = [1, 1, 1]} : vector<1x8x32xf32> to vector<1x8x8xf32>
    %41 = vector.shape_cast %37 : vector<1x8x8xf32> to vector<1x1x8x8xf32>
    %42 = vector.shape_cast %38 : vector<1x8x8xf32> to vector<1x1x8x8xf32>
    %43 = vector.shape_cast %39 : vector<1x8x8xf32> to vector<1x1x8x8xf32>
    %44 = vector.shape_cast %40 : vector<1x8x8xf32> to vector<1x1x8x8xf32>
    %45 = tpu.concatenate %41, %42, %43, %44 in 1 : vector<1x1x8x8xf32>, vector<1x1x8x8xf32>, vector<1x1x8x8xf32>, vector<1x1x8x8xf32> -> vector<1x4x8x8xf32>
    %46 = vector.shape_cast %45 : vector<1x4x8x8xf32> to vector<4x8x8xf32>
    %47 = arith.truncf %46 : vector<4x8x8xf32> to vector<4x8x8xbf16>
    %48 = vector.extract_strided_slice %25 {offsets = [0, 0, 0], sizes = [1, 8, 8], strides = [1, 1, 1]} : vector<1x8x32xf32> to vector<1x8x8xf32>
    %49 = vector.extract_strided_slice %25 {offsets = [0, 0, 8], sizes = [1, 8, 8], strides = [1, 1, 1]} : vector<1x8x32xf32> to vector<1x8x8xf32>
    %50 = vector.extract_strided_slice %25 {offsets = [0, 0, 16], sizes = [1, 8, 8], strides = [1, 1, 1]} : vector<1x8x32xf32> to vector<1x8x8xf32>
    %51 = vector.extract_strided_slice %25 {offsets = [0, 0, 24], sizes = [1, 8, 8], strides = [1, 1, 1]} : vector<1x8x32xf32> to vector<1x8x8xf32>
    %52 = vector.shape_cast %48 : vector<1x8x8xf32> to vector<1x1x8x8xf32>
    %53 = vector.shape_cast %49 : vector<1x8x8xf32> to vector<1x1x8x8xf32>
    %54 = vector.shape_cast %50 : vector<1x8x8xf32> to vector<1x1x8x8xf32>
    %55 = vector.shape_cast %51 : vector<1x8x8xf32> to vector<1x1x8x8xf32>
    %56 = tpu.concatenate %52, %53, %54, %55 in 1 : vector<1x1x8x8xf32>, vector<1x1x8x8xf32>, vector<1x1x8x8xf32>, vector<1x1x8x8xf32> -> vector<1x4x8x8xf32>
    %57 = vector.shape_cast %56 : vector<1x4x8x8xf32> to vector<4x8x8xf32>
    %58 = arith.truncf %57 : vector<4x8x8xf32> to vector<4x8x8xbf16>
    "tpu.trace_start"() <{level = 10 : i32, message = "gqd,gkd->gqk"}> : () -> ()
    %cst_20 = arith.constant dense<0.000000e+00> : vector<4x8x8xf32>
    %59 = tpu.matmul %36, %47, %cst_20 {dimension_numbers = #tpu.dot_dimension_numbers<[2], [2], [1], [1], [0, 0, 0, 1, 1, 1], [0], [0]>} : vector<4x8x8xbf16>, vector<4x8x8xbf16>, vector<4x8x8xf32> -> vector<4x8x8xf32>
    "tpu.trace_stop"() : () -> ()
    %c0_21 = arith.constant 0 : index
    %c0_22 = arith.constant 0 : index
    %c0_23 = arith.constant 0 : index
    %c0_24 = arith.constant 0 : index
    %60 = vector.load %arg4[%c0_21, %c0_22, %c0_23, %c0_24] : memref<1x4x8x8xf32, #tpu.memory_space<vmem>>, vector<1x4x8x8xf32>
    %61 = vector.shape_cast %60 : vector<1x4x8x8xf32> to vector<4x8x8xf32>
    %cst_25 = arith.constant 9.99999997E-7 : f32
    %62 = vector.broadcast %cst_25 : f32 to vector<4x8x8xf32>
    %63 = arith.maximumf %61, %62 : vector<4x8x8xf32>
    %64 = math.log %63 : vector<4x8x8xf32>
    %65 = arith.addf %64, %59 : vector<4x8x8xf32>
    %cst_26 = arith.constant dense<0xFF800000> : vector<4x8xf32>
    %66 = vector.multi_reduction <maximumf>, %65, %cst_26 [2] : vector<4x8x8xf32> to vector<4x8xf32>
    %67 = vector.shape_cast %66 : vector<4x8xf32> to vector<4x8x1xf32>
    %68 = vector.broadcast %67 : vector<4x8x1xf32> to vector<4x8x8xf32>
    %69 = arith.subf %65, %68 : vector<4x8x8xf32>
    %70 = math.exp %69 : vector<4x8x8xf32>
    %cst_27 = arith.constant dense<0.000000e+00> : vector<4x8xf32>
    %71 = vector.multi_reduction <add>, %70, %cst_27 [2] : vector<4x8x8xf32> to vector<4x8xf32>
    %72 = vector.shape_cast %71 : vector<4x8xf32> to vector<4x8x1xf32>
    %73 = vector.broadcast %72 : vector<4x8x1xf32> to vector<4x8x8xf32>
    %74 = arith.divf %70, %73 : vector<4x8x8xf32>
    %75 = vector.shape_cast %74 : vector<4x8x8xf32> to vector<1x4x8x8xf32>
    %c0_28 = arith.constant 0 : index
    %c0_29 = arith.constant 0 : index
    %c0_30 = arith.constant 0 : index
    %c0_31 = arith.constant 0 : index
    %76 = vector.load %arg14[%c0_28, %c0_29, %c0_30, %c0_31] : memref<1x4x8x8xf32, #tpu.memory_space<vmem>>, vector<1x4x8x8xf32>
    tpu.vector_store %arg14[%c0_28, %c0_29, %c0_30, %c0_31], %75 {strides = array<i32>} : memref<1x4x8x8xf32, #tpu.memory_space<vmem>>, vector<1x4x8x8xf32>,
    %77 = arith.truncf %74 : vector<4x8x8xf32> to vector<4x8x8xbf16>
    "tpu.trace_start"() <{level = 10 : i32, message = "gqk,gkd->gqd"}> : () -> ()
    %cst_32 = arith.constant dense<0.000000e+00> : vector<4x8x8xf32>
    %78 = tpu.matmul %77, %58, %cst_32 {dimension_numbers = #tpu.dot_dimension_numbers<[2], [1], [1], [2], [0, 0, 0, 1, 1, 2], [0], [0]>} : vector<4x8x8xbf16>, vector<4x8x8xbf16>, vector<4x8x8xf32> -> vector<4x8x8xf32>
    "tpu.trace_stop"() : () -> ()
    %79 = vector.shape_cast %78 : vector<4x8x8xf32> to vector<1x4x8x8xf32>
    %80 = vector.extract_strided_slice %79 {offsets = [0, 0, 0, 0], sizes = [1, 1, 8, 8], strides = [1, 1, 1, 1]} : vector<1x4x8x8xf32> to vector<1x1x8x8xf32>
    %81 = vector.shape_cast %80 : vector<1x1x8x8xf32> to vector<1x8x8xf32>
    %82 = vector.extract_strided_slice %79 {offsets = [0, 1, 0, 0], sizes = [1, 1, 8, 8], strides = [1, 1, 1, 1]} : vector<1x4x8x8xf32> to vector<1x1x8x8xf32>
    %83 = vector.shape_cast %82 : vector<1x1x8x8xf32> to vector<1x8x8xf32>
    %84 = vector.extract_strided_slice %79 {offsets = [0, 2, 0, 0], sizes = [1, 1, 8, 8], strides = [1, 1, 1, 1]} : vector<1x4x8x8xf32> to vector<1x1x8x8xf32>
    %85 = vector.shape_cast %84 : vector<1x1x8x8xf32> to vector<1x8x8xf32>
    %86 = vector.extract_strided_slice %79 {offsets = [0, 3, 0, 0], sizes = [1, 1, 8, 8], strides = [1, 1, 1, 1]} : vector<1x4x8x8xf32> to vector<1x1x8x8xf32>
    %87 = vector.shape_cast %86 : vector<1x1x8x8xf32> to vector<1x8x8xf32>
    %88 = tpu.concatenate %81, %83, %85, %87 in 2 : vector<1x8x8xf32>, vector<1x8x8xf32>, vector<1x8x8xf32>, vector<1x8x8xf32> -> vector<1x8x32xf32>
    %89 = vector.shape_cast %88 : vector<1x8x32xf32> to vector<8x32xf32>
    %90 = arith.truncf %89 : vector<8x32xf32> to vector<8x32xbf16>
    %c0_33 = arith.constant 0 : index
    %c0_34 = arith.constant 0 : index
    %91 = vector.load %arg11[%c0_33, %c0_34] : memref<32x32xbf16, #tpu.memory_space<vmem>>, vector<32x32xbf16>
    %cst_35 = arith.constant dense<0.000000e+00> : vector<8x32xf32>
    %92 = tpu.matmul %90, %91, %cst_35 {dimension_numbers = #tpu.dot_dimension_numbers<[1], [0], [0], [1], [0, 0, 1, 1], [], []>} : vector<8x32xbf16>, vector<32x32xbf16>, vector<8x32xf32> -> vector<8x32xf32>
    %c0_36 = arith.constant 0 : index
    %c0_37 = arith.constant 0 : index
    %93 = vector.load %arg12[%c0_36, %c0_37] : memref<1x32xf32, #tpu.memory_space<vmem>>, vector<1x32xf32>
    %94 = vector.broadcast %93 : vector<1x32xf32> to vector<8x32xf32>
    %95 = arith.addf %92, %94 : vector<8x32xf32>
    %c0_38 = arith.constant 0 : index
    %c0_39 = arith.constant 0 : index
    %96 = vector.load %arg13[%c0_38, %c0_39] : memref<8x32xf32, #tpu.memory_space<vmem>>, vector<8x32xf32>
    tpu.vector_store %arg13[%c0_38, %c0_39], %95 {strides = array<i32>} : memref<8x32xf32, #tpu.memory_space<vmem>>, vector<8x32xf32>,
    return
  }
  func.func @transform_0(%arg0: i32) -> (i32, i32) {
    %c0_i32 = arith.constant 0 : i32
    %c0_i32_0 = arith.constant 0 : i32
    return %arg0, %c0_i32 : i32, i32
  }
  func.func @transform_1(%arg0: i32) -> (i32, i32) {
    %c0_i32 = arith.constant 0 : i32
    %c0_i32_0 = arith.constant 0 : i32
    return %arg0, %c0_i32 : i32, i32
  }
  func.func @transform_2(%arg0: i32) -> (i32, i32) {
    %c0_i32 = arith.constant 0 : i32
    %c0_i32_0 = arith.constant 0 : i32
    return %arg0, %c0_i32 : i32, i32
  }
  func.func @transform_3(%arg0: i32) -> (i32, i32, i32, i32) {
    %c0_i32 = arith.constant 0 : i32
    %c0_i32_0 = arith.constant 0 : i32
    %c0_i32_1 = arith.constant 0 : i32
    %c0_i32_2 = arith.constant 0 : i32
    return %arg0, %c0_i32, %c0_i32_0, %c0_i32_1 : i32, i32, i32, i32
  }
  func.func @transform_4(%arg0: i32) -> (i32, i32) {
    %c0_i32 = arith.constant 0 : i32
    %c0_i32_0 = arith.constant 0 : i32
    %c0_i32_1 = arith.constant 0 : i32
    return %c0_i32, %c0_i32_0 : i32, i32
  }
  func.func @transform_5(%arg0: i32) -> (i32, i32) {
    %c0_i32 = arith.constant 0 : i32
    %c0_i32_0 = arith.constant 0 : i32
    %c0_i32_1 = arith.constant 0 : i32
    return %c0_i32, %c0_i32_0 : i32, i32
  }
  func.func @transform_6(%arg0: i32) -> (i32, i32) {
    %c0_i32 = arith.constant 0 : i32
    %c0_i32_0 = arith.constant 0 : i32
    %c0_i32_1 = arith.constant 0 : i32
    return %c0_i32, %c0_i32_0 : i32, i32
  }
  func.func @transform_7(%arg0: i32) -> (i32, i32) {
    %c0_i32 = arith.constant 0 : i32
    %c0_i32_0 = arith.constant 0 : i32
    %c0_i32_1 = arith.constant 0 : i32
    return %c0_i32, %c0_i32_0 : i32, i32
  }
  func.func @transform_8(%arg0: i32) -> (i32, i32) {
    %c0_i32 = arith.constant 0 : i32
    %c0_i32_0 = arith.constant 0 : i32
    %c0_i32_1 = arith.constant 0 : i32
    return %c0_i32, %c0_i32_0 : i32, i32
  }
  func.func @transform_9(%arg0: i32) -> (i32, i32) {
    %c0_i32 = arith.constant 0 : i32
    %c0_i32_0 = arith.constant 0 : i32
    %c0_i32_1 = arith.constant 0 : i32
    return %c0_i32, %c0_i32_0 : i32, i32
  }
  func.func @transform_10(%arg0: i32) -> (i32, i32) {
    %c0_i32 = arith.constant 0 : i32
    %c0_i32_0 = arith.constant 0 : i32
    %c0_i32_1 = arith.constant 0 : i32
    return %c0_i32, %c0_i32_0 : i32, i32
  }
  func.func @transform_11(%arg0: i32) -> (i32, i32) {
    %c0_i32 = arith.constant 0 : i32
    %c0_i32_0 = arith.constant 0 : i32
    %c0_i32_1 = arith.constant 0 : i32
    return %c0_i32, %c0_i32_0 : i32, i32
  }
  func.func @transform_12(%arg0: i32) -> (i32, i32) {
    %c0_i32 = arith.constant 0 : i32
    %c0_i32_0 = arith.constant 0 : i32
    return %arg0, %c0_i32 : i32, i32
  }
  func.func @transform_13(%arg0: i32) -> (i32, i32, i32, i32) {
    %c0_i32 = arith.constant 0 : i32
    %c0_i32_0 = arith.constant 0 : i32
    %c0_i32_1 = arith.constant 0 : i32
    %c0_i32_2 = arith.constant 0 : i32
    return %arg0, %c0_i32, %c0_i32_0, %c0_i32_1 : i32, i32, i32, i32
  }
}

</mosaic_0001>

<llo_original>
// kernel: tpu_custom_call.1
$region0: #{tpu_custom_call.1}
  #allocation0 [shape = 'u32[]', space=smem, size = 0x4, offset = 0x4, fixed_abs, tag = 'smem constant byte address 0x4 - core index']
  #allocation1 [shape = 'u32[144,128]{1,0:T(1,128)}', space=vmem, size = 0x12000, scoped, tag = 'internal scratch']
  %s0 = inlined_call_operand.hbm [shape: f32[16,32], index: 0, kind: input, shape index: {}]
  %s1 = inlined_call_operand.hbm [shape: f32[16,32], index: 1, kind: input, shape index: {}]
  %s2 = inlined_call_operand.hbm [shape: f32[16,32], index: 2, kind: input, shape index: {}]
  %s3 = inlined_call_operand.hbm [shape: f32[2,4,8,8], index: 3, kind: input, shape index: {}]
  %s4 = inlined_call_operand.hbm [shape: bf16[32,32], index: 4, kind: input, shape index: {}]
  %s5 = inlined_call_operand.vmem [shape: f32[1,32], index: 5, kind: input, shape index: {}]
  %s6 = inlined_call_operand.vmem [shape: bf16[32,32], index: 6, kind: input, shape index: {}]
  %s7 = inlined_call_operand.vmem [shape: f32[1,32], index: 7, kind: input, shape index: {}]
  %s8 = inlined_call_operand.hbm [shape: bf16[32,32], index: 8, kind: input, shape index: {}]
  %s9 = inlined_call_operand.hbm [shape: f32[1,32], index: 9, kind: input, shape index: {}]
  %s10 = inlined_call_operand.vmem [shape: bf16[32,32], index: 10, kind: input, shape index: {}]
  %s11 = inlined_call_operand.vmem [shape: f32[1,32], index: 11, kind: input, shape index: {}]
  %s12 = inlined_call_operand.hbm [shape: f32[16,32], index: 12, kind: output, shape index: {0}]
  %s13 = inlined_call_operand.hbm [shape: f32[2,4,8,8], index: 13, kind: output, shape index: {1}]
  %14 = xla_tuple %s12, %s13
  %s15 = sld [smem:[#allocation0]]
  $region117: #{tpu_custom_call.1} parent=0
    _
  %s17 = ssub.s32 1, %s15
  %s18 = scalar_select 0, %s17, %s15
  $region1: #{tpu_custom_call.1} parent=0
    #allocation2 [shape = 'u8[8192]{0}', space=vmem, size = 0x2000, scoped, tag = 'input window, operand 0']
    #allocation3 [shape = 's32[2]{0}', space=sflag, size = 0x8, scoped, tag = 'scoped memory for tpu_custom_call.1']
    #allocation4 [shape = 's32[2]{0}', space=sflag, size = 0x8, scoped, tag = 'scoped memory for tpu_custom_call.1']
    #allocation5 [shape = 'u8[8192]{0}', space=vmem, size = 0x2000, scoped, tag = 'input window, operand 1']
    #allocation6 [shape = 's32[2]{0}', space=sflag, size = 0x8, scoped, tag = 'scoped memory for tpu_custom_call.1']
    #allocation7 [shape = 'u8[8192]{0}', space=vmem, size = 0x2000, scoped, tag = 'input window, operand 2']
    #allocation8 [shape = 'u8[32768]{0}', space=vmem, size = 0x8000, scoped, tag = 'input window, operand 3']
    #allocation9 [shape = 's32[2]{0}', space=sflag, size = 0x8, scoped, tag = 'scoped memory for tpu_custom_call.1']
    #allocation10 [shape = 'u8[8192]{0}', space=vmem, size = 0x2000, scoped, tag = 'input window, operand 4, single buffered']
    #allocation11 [shape = 'u8[8192]{0}', space=vmem, size = 0x2000, scoped, tag = 'input window, operand 8, single buffered']
    #allocation12 [shape = 's32[1]{0}', space=sflag, size = 0x4, scoped, tag = 'scoped memory for tpu_custom_call.1']
    #allocation13 [shape = 'u8[512]{0}', space=vmem, size = 0x400, scoped, tag = 'input window, operand 9, single buffered']
    #allocation14 [shape = 'u8[8192]{0}', space=vmem, size = 0x2000, scoped, tag = 'output window, operand 0']
    #allocation15 [shape = 'u8[32768]{0}', space=vmem, size = 0x8000, scoped, tag = 'output window, operand 1']
    #allocation16 [shape = 's32[2]{0}', space=sflag, size = 0x8, scoped, tag = 'scoped memory for tpu_custom_call.1']
    %19 = vsyncpa [#allocation3], 0
    %s20 = scalar_lea.sflag [#allocation3], 1
    %21 = vsyncpa %s20, 0
    %22 = vsyncpa [#allocation6], 0
    %s23 = scalar_lea.sflag [#allocation6], 1
    %24 = vsyncpa %s23, 0
    %25 = vsyncpa [#allocation9], 0
    %s26 = scalar_lea.sflag [#allocation9], 1
    %27 = vsyncpa %s26, 0
    %28 = vsyncpa [#allocation12], 0
    %29 = vsyncpa [#allocation4], 0
    %s30 = scalar_lea.sflag [#allocation4], 1
    %31 = vsyncpa %s30, 0
    %32 = vsyncpa [#allocation16], 0
    %s33 = scalar_lea.sflag [#allocation16], 1
    %34 = vsyncpa %s33, 0
    loop: start=0, step=1, limit=4
    $region2: #{tpu_custom_call.1} parent=1 // loop_pre_header
      _
    $region3: #{tpu_custom_call.1} parent=1 // loop_header
      %s36 = sphi 0, %s40
      %p37 = scmp.ge.s32.totalorder %s36, 4
      %s46 = sphi 0, %s48
      %s49 = sphi 0, %s46
      %s50 = sphi 0, %s49
      %s66 = sphi 0, %s50
      %s72 = sphi 0, %s74
      %s75 = sphi 0, %s72
      %s76 = sphi 0, %s75
      %s92 = sphi 0, %s76
      %s98 = sphi 0, %s100
      %s101 = sphi 0, %s98
      %s102 = sphi 0, %s101
      %s118 = sphi 0, %s102
      %s124 = sphi 0, %s126
      %s127 = sphi 0, %s124
      %s128 = sphi 0, %s127
      %s144 = sphi 0, %s128
      %s148 = sphi 0, %s148
      %s150 = sphi 0, %s148
      %s151 = sphi 0, %s150
      %s165 = sphi 0, %s151
      %s169 = sphi 0, %s169
      %s171 = sphi 0, %s169
      %s172 = sphi 0, %s171
      %s186 = sphi 0, %s172
      %s190 = sphi 0, %s190
      %s192 = sphi 0, %s190
      %s193 = sphi 0, %s192
      %s207 = sphi 0, %s193
      %s211 = sphi 0, %s211
      %s213 = sphi 0, %s211
      %s214 = sphi 0, %s213
      %s228 = sphi 0, %s214
      %s232 = sphi 0, %s232
      %s234 = sphi 0, %s232
      %s235 = sphi 0, %s234
      %s249 = sphi 0, %s235
      %s253 = sphi 0, %s253
      %s255 = sphi 0, %s253
      %s256 = sphi 0, %s255
      %s270 = sphi 0, %s256
      %s274 = sphi 0, %s274
      %s276 = sphi 0, %s274
      %s277 = sphi 0, %s276
      %s291 = sphi 0, %s277
      %s295 = sphi 0, %s295
      %s297 = sphi 0, %s295
      %s298 = sphi 0, %s297
      %s312 = sphi 0, %s298
      %s318 = sphi 0, %s320
      %s321 = sphi 0, %s318
      %s322 = sphi 0, %s321
      %s338 = sphi 0, %s322
      %s344 = sphi 0, %s346
      %s347 = sphi 0, %s344
      %s348 = sphi 0, %s347
      %s364 = sphi 0, %s348
    $region4: #{tpu_custom_call.1} parent=1 // loop_header_branch
      %39 = sbr.rel (%p37) target = $region8
    $region5: #{tpu_custom_call.1} parent=1 // loop_body
      %s41 = ssub.s32 %s36, 1
      %s42 = ssub.s32 %s36, 2
      %s43 = sadd.s32 %s36, 1
      %s44 = ssub.s32 %s36, %s43
      %p45 = scmp.eq.s32.totalorder %s44, 0
      %s47 = sadd.s32 %s46, 1
      %s48 = scalar_select %p45, %s46, %s47
      %p51 = pneg %p45
      %p52 = scmp.eq.s32.totalorder %s36, 1
      %p53 = por %p51, %p52
      %p54 = scmp.ne.s32.totalorder %s46, %s49
      %p55 = scmp.eq.s32.totalorder %s36, 0
      %p56 = por %p54, %p55
      %p57 = scmp.ne.s32.totalorder %s46, %s49
      %p58 = scmp.eq.s32.totalorder %s41, 1
      %p59 = por %p57, %p58
      %p60 = scmp.ne.s32.totalorder %s49, %s50
      %p61 = scmp.eq.s32.totalorder %s41, 0
      %p62 = por %p60, %p61
      %p63 = scmp.ne.s32.totalorder %s49, %s50
      %p64 = scmp.eq.s32.totalorder %s42, 1
      %p65 = por %p63, %p64
      %p67 = scmp.ne.s32.totalorder %s50, %s66
      %p68 = scmp.eq.s32.totalorder %s42, 0
      %p69 = por %p67, %p68
      %s70 = ssub.s32 %s36, %s43
      %p71 = scmp.eq.s32.totalorder %s70, 0
      %s73 = sadd.s32 %s72, 1
      %s74 = scalar_select %p71, %s72, %s73
      %p77 = pneg %p71
      %p78 = scmp.eq.s32.totalorder %s36, 1
      %p79 = por %p77, %p78
      %p80 = scmp.ne.s32.totalorder %s72, %s75
      %p81 = scmp.eq.s32.totalorder %s36, 0
      %p82 = por %p80, %p81
      %p83 = scmp.ne.s32.totalorder %s72, %s75
      %p84 = scmp.eq.s32.totalorder %s41, 1
      %p85 = por %p83, %p84
      %p86 = scmp.ne.s32.totalorder %s75, %s76
      %p87 = scmp.eq.s32.totalorder %s41, 0
      %p88 = por %p86, %p87
      %p89 = scmp.ne.s32.totalorder %s75, %s76
      %p90 = scmp.eq.s32.totalorder %s42, 1
      %p91 = por %p89, %p90
      %p93 = scmp.ne.s32.totalorder %s76, %s92
      %p94 = scmp.eq.s32.totalorder %s42, 0
      %p95 = por %p93, %p94
      %s96 = ssub.s32 %s36, %s43
      %p97 = scmp.eq.s32.totalorder %s96, 0
      %s99 = sadd.s32 %s98, 1
      %s100 = scalar_select %p97, %s98, %s99
      %p103 = pneg %p97
      %p104 = scmp.eq.s32.totalorder %s36, 1
      %p105 = por %p103, %p104
      %p106 = scmp.ne.s32.totalorder %s98, %s101
      %p107 = scmp.eq.s32.totalorder %s36, 0
      %p108 = por %p106, %p107
      %p109 = scmp.ne.s32.totalorder %s98, %s101
      %p110 = scmp.eq.s32.totalorder %s41, 1
      %p111 = por %p109, %p110
      %p112 = scmp.ne.s32.totalorder %s101, %s102
      %p113 = scmp.eq.s32.totalorder %s41, 0
      %p114 = por %p112, %p113
      %p115 = scmp.ne.s32.totalorder %s101, %s102
      %p116 = scmp.eq.s32.totalorder %s42, 1
      %p117 = por %p115, %p116
      %p119 = scmp.ne.s32.totalorder %s102, %s118
      %p120 = scmp.eq.s32.totalorder %s42, 0
      %p121 = por %p119, %p120
      %s122 = ssub.s32 %s36, %s43
      %p123 = scmp.eq.s32.totalorder %s122, 0
      %s125 = sadd.s32 %s124, 1
      %s126 = scalar_select %p123, %s124, %s125
      %p129 = pneg %p123
      %p130 = scmp.eq.s32.totalorder %s36, 1
      %p131 = por %p129, %p130
      %p132 = scmp.ne.s32.totalorder %s124, %s127
      %p133 = scmp.eq.s32.totalorder %s36, 0
      %p134 = por %p132, %p133
      %p135 = scmp.ne.s32.totalorder %s124, %s127
      %p136 = scmp.eq.s32.totalorder %s41, 1
      %p137 = por %p135, %p136
      %p138 = scmp.ne.s32.totalorder %s127, %s128
      %p139 = scmp.eq.s32.totalorder %s41, 0
      %p140 = por %p138, %p139
      %p141 = scmp.ne.s32.totalorder %s127, %s128
      %p142 = scmp.eq.s32.totalorder %s42, 1
      %p143 = por %p141, %p142
      %p145 = scmp.ne.s32.totalorder %s128, %s144
      %p146 = scmp.eq.s32.totalorder %s42, 0
      %p147 = por %p145, %p146
      %s149 = sadd.s32 %s148, 1
      %p152 = scmp.eq.s32.totalorder %s36, 1
      %p153 = scmp.ne.s32.totalorder %s148, %s150
      %p154 = scmp.eq.s32.totalorder %s36, 0
      %p155 = por %p153, %p154
      %p156 = scmp.ne.s32.totalorder %s148, %s150
      %p157 = scmp.eq.s32.totalorder %s41, 1
      %p158 = por %p156, %p157
      %p159 = scmp.ne.s32.totalorder %s150, %s151
      %p160 = scmp.eq.s32.totalorder %s41, 0
      %p161 = por %p159, %p160
      %p162 = scmp.ne.s32.totalorder %s150, %s151
      %p163 = scmp.eq.s32.totalorder %s42, 1
      %p164 = por %p162, %p163
      %p166 = scmp.ne.s32.totalorder %s151, %s165
      %p167 = scmp.eq.s32.totalorder %s42, 0
      %p168 = por %p166, %p167
      %s170 = sadd.s32 %s169, 1
      %p173 = scmp.eq.s32.totalorder %s36, 1
      %p174 = scmp.ne.s32.totalorder %s169, %s171
      %p175 = scmp.eq.s32.totalorder %s36, 0
      %p176 = por %p174, %p175
      %p177 = scmp.ne.s32.totalorder %s169, %s171
      %p178 = scmp.eq.s32.totalorder %s41, 1
      %p179 = por %p177, %p178
      %p180 = scmp.ne.s32.totalorder %s171, %s172
      %p181 = scmp.eq.s32.totalorder %s41, 0
      %p182 = por %p180, %p181
      %p183 = scmp.ne.s32.totalorder %s171, %s172
      %p184 = scmp.eq.s32.totalorder %s42, 1
      %p185 = por %p183, %p184
      %p187 = scmp.ne.s32.totalorder %s172, %s186
      %p188 = scmp.eq.s32.totalorder %s42, 0
      %p189 = por %p187, %p188
      %s191 = sadd.s32 %s190, 1
      %p194 = scmp.eq.s32.totalorder %s36, 1
      %p195 = scmp.ne.s32.totalorder %s190, %s192
      %p196 = scmp.eq.s32.totalorder %s36, 0
      %p197 = por %p195, %p196
      %p198 = scmp.ne.s32.totalorder %s190, %s192
      %p199 = scmp.eq.s32.totalorder %s41, 1
      %p200 = por %p198, %p199
      %p201 = scmp.ne.s32.totalorder %s192, %s193
      %p202 = scmp.eq.s32.totalorder %s41, 0
      %p203 = por %p201, %p202
      %p204 = scmp.ne.s32.totalorder %s192, %s193
      %p205 = scmp.eq.s32.totalorder %s42, 1
      %p206 = por %p204, %p205
      %p208 = scmp.ne.s32.totalorder %s193, %s207
      %p209 = scmp.eq.s32.totalorder %s42, 0
      %p210 = por %p208, %p209
      %s212 = sadd.s32 %s211, 1
      %p215 = scmp.eq.s32.totalorder %s36, 1
      %p216 = scmp.ne.s32.totalorder %s211, %s213
      %p217 = scmp.eq.s32.totalorder %s36, 0
      %p218 = por %p216, %p217
      %p219 = scmp.ne.s32.totalorder %s211, %s213
      %p220 = scmp.eq.s32.totalorder %s41, 1
      %p221 = por %p219, %p220
      %p222 = scmp.ne.s32.totalorder %s213, %s214
      %p223 = scmp.eq.s32.totalorder %s41, 0
      %p224 = por %p222, %p223
      %p225 = scmp.ne.s32.totalorder %s213, %s214
      %p226 = scmp.eq.s32.totalorder %s42, 1
      %p227 = por %p225, %p226
      %p229 = scmp.ne.s32.totalorder %s214, %s228
      %p230 = scmp.eq.s32.totalorder %s42, 0
      %p231 = por %p229, %p230
      %s233 = sadd.s32 %s232, 1
      %p236 = scmp.eq.s32.totalorder %s36, 1
      %p237 = scmp.ne.s32.totalorder %s232, %s234
      %p238 = scmp.eq.s32.totalorder %s36, 0
      %p239 = por %p237, %p238
      %p240 = scmp.ne.s32.totalorder %s232, %s234
      %p241 = scmp.eq.s32.totalorder %s41, 1
      %p242 = por %p240, %p241
      %p243 = scmp.ne.s32.totalorder %s234, %s235
      %p244 = scmp.eq.s32.totalorder %s41, 0
      %p245 = por %p243, %p244
      %p246 = scmp.ne.s32.totalorder %s234, %s235
      %p247 = scmp.eq.s32.totalorder %s42, 1
      %p248 = por %p246, %p247
      %p250 = scmp.ne.s32.totalorder %s235, %s249
      %p251 = scmp.eq.s32.totalorder %s42, 0
      %p252 = por %p250, %p251
      %s254 = sadd.s32 %s253, 1
      %p257 = scmp.eq.s32.totalorder %s36, 1
      %p258 = scmp.ne.s32.totalorder %s253, %s255
      %p259 = scmp.eq.s32.totalorder %s36, 0
      %p260 = por %p258, %p259
      %p261 = scmp.ne.s32.totalorder %s253, %s255
      %p262 = scmp.eq.s32.totalorder %s41, 1
      %p263 = por %p261, %p262
      %p264 = scmp.ne.s32.totalorder %s255, %s256
      %p265 = scmp.eq.s32.totalorder %s41, 0
      %p266 = por %p264, %p265
      %p267 = scmp.ne.s32.totalorder %s255, %s256
      %p268 = scmp.eq.s32.totalorder %s42, 1
      %p269 = por %p267, %p268
      %p271 = scmp.ne.s32.totalorder %s256, %s270
      %p272 = scmp.eq.s32.totalorder %s42, 0
      %p273 = por %p271, %p272
      %s275 = sadd.s32 %s274, 1
      %p278 = scmp.eq.s32.totalorder %s36, 1
      %p279 = scmp.ne.s32.totalorder %s274, %s276
      %p280 = scmp.eq.s32.totalorder %s36, 0
      %p281 = por %p279, %p280
      %p282 = scmp.ne.s32.totalorder %s274, %s276
      %p283 = scmp.eq.s32.totalorder %s41, 1
      %p284 = por %p282, %p283
      %p285 = scmp.ne.s32.totalorder %s276, %s277
      %p286 = scmp.eq.s32.totalorder %s41, 0
      %p287 = por %p285, %p286
      %p288 = scmp.ne.s32.totalorder %s276, %s277
      %p289 = scmp.eq.s32.totalorder %s42, 1
      %p290 = por %p288, %p289
      %p292 = scmp.ne.s32.totalorder %s277, %s291
      %p293 = scmp.eq.s32.totalorder %s42, 0
      %p294 = por %p292, %p293
      %s296 = sadd.s32 %s295, 1
      %p299 = scmp.eq.s32.totalorder %s36, 1
      %p300 = scmp.ne.s32.totalorder %s295, %s297
      %p301 = scmp.eq.s32.totalorder %s36, 0
      %p302 = por %p300, %p301
      %p303 = scmp.ne.s32.totalorder %s295, %s297
      %p304 = scmp.eq.s32.totalorder %s41, 1
      %p305 = por %p303, %p304
      %p306 = scmp.ne.s32.totalorder %s297, %s298
      %p307 = scmp.eq.s32.totalorder %s41, 0
      %p308 = por %p306, %p307
      %p309 = scmp.ne.s32.totalorder %s297, %s298
      %p310 = scmp.eq.s32.totalorder %s42, 1
      %p311 = por %p309, %p310
      %p313 = scmp.ne.s32.totalorder %s298, %s312
      %p314 = scmp.eq.s32.totalorder %s42, 0
      %p315 = por %p313, %p314
      %s316 = ssub.s32 %s36, %s43
      %p317 = scmp.eq.s32.totalorder %s316, 0
      %s319 = sadd.s32 %s318, 1
      %s320 = scalar_select %p317, %s318, %s319
      %p323 = pneg %p317
      %p324 = scmp.eq.s32.totalorder %s36, 1
      %p325 = por %p323, %p324
      %p326 = scmp.ne.s32.totalorder %s318, %s321
      %p327 = scmp.eq.s32.totalorder %s36, 0
      %p328 = por %p326, %p327
      %p329 = scmp.ne.s32.totalorder %s318, %s321
      %p330 = scmp.eq.s32.totalorder %s41, 1
      %p331 = por %p329, %p330
      %p332 = scmp.ne.s32.totalorder %s321, %s322
      %p333 = scmp.eq.s32.totalorder %s41, 0
      %p334 = por %p332, %p333
      %p335 = scmp.ne.s32.totalorder %s321, %s322
      %p336 = scmp.eq.s32.totalorder %s42, 1
      %p337 = por %p335, %p336
      %p339 = scmp.ne.s32.totalorder %s322, %s338
      %p340 = scmp.eq.s32.totalorder %s42, 0
      %p341 = por %p339, %p340
      %s342 = ssub.s32 %s36, %s43
      %p343 = scmp.eq.s32.totalorder %s342, 0
      %s345 = sadd.s32 %s344, 1
      %s346 = scalar_select %p343, %s344, %s345
      %p349 = pneg %p343
      %p350 = scmp.eq.s32.totalorder %s36, 1
      %p351 = por %p349, %p350
      %p352 = scmp.ne.s32.totalorder %s344, %s347
      %p353 = scmp.eq.s32.totalorder %s36, 0
      %p354 = por %p352, %p353
      %p355 = scmp.ne.s32.totalorder %s344, %s347
      %p356 = scmp.eq.s32.totalorder %s41, 1
      %p357 = por %p355, %p356
      %p358 = scmp.ne.s32.totalorder %s347, %s348
      %p359 = scmp.eq.s32.totalorder %s41, 0
      %p360 = por %p358, %p359
      %p361 = scmp.ne.s32.totalorder %s347, %s348
      %p362 = scmp.eq.s32.totalorder %s42, 1
      %p363 = por %p361, %p362
      %p365 = scmp.ne.s32.totalorder %s348, %s364
      %p366 = scmp.eq.s32.totalorder %s42, 0
      %p367 = por %p365, %p366
      %p368 = scmp.le.s32.totalorder 1, %s36
      %p369 = scmp.lt.s32.totalorder %s36, 3
      %p370 = pnand %p368, %p369
      %p371 = pneg %p370
      // Predicated region
      $region9: #{tpu_custom_call.1} parent=5 // pred_check
        _
      $region10: #{tpu_custom_call.1} parent=5 // pred_check_branch
        %373 = sbr.rel (%p370) target = $region12
      $region11: #{tpu_custom_call.1} parent=5 // pred_region
        %s374 = ssub.s32 %s36, 1
        // Predicated region
        $region13: #{tpu_custom_call.1} parent=11 // pred_check
          %p375 = pneg %p161
        $region14: #{tpu_custom_call.1} parent=11 // pred_check_branch
          %377 = sbr.rel (%p375) target = $region16
        $region15: #{tpu_custom_call.1} parent=11 // pred_region
          %s379 = ssub.s32 256, 256
          %380 = vsyncadd [#allocation9], %s379
          %s381 = sshll.u32 [#allocation10], 4
          %s382 = int_to_ptr.vmem [resolvable:$true] %s381
          %387 = dma.hbm_to_vmem [thread:$0]  %s4, 256, %s382, [#allocation9], 64, 64, 4
        $region16: #{tpu_custom_call.1} parent=11 // pred_fallthru
          _
        // Predicated region
        $region17: #{tpu_custom_call.1} parent=11 // pred_check
          %p388 = pneg %p182
        $region18: #{tpu_custom_call.1} parent=11 // pred_check_branch
          %390 = sbr.rel (%p388) target = $region20
        $region19: #{tpu_custom_call.1} parent=11 // pred_region
          _
        $region20: #{tpu_custom_call.1} parent=11 // pred_fallthru
          _
        // Predicated region
        $region21: #{tpu_custom_call.1} parent=11 // pred_check
          %p391 = pneg %p203
        $region22: #{tpu_custom_call.1} parent=11 // pred_check_branch
          %393 = sbr.rel (%p391) target = $region24
        $region23: #{tpu_custom_call.1} parent=11 // pred_region
          _
        $region24: #{tpu_custom_call.1} parent=11 // pred_fallthru
          _
        // Predicated region
        $region25: #{tpu_custom_call.1} parent=11 // pred_check
          %p394 = pneg %p224
        $region26: #{tpu_custom_call.1} parent=11 // pred_check_branch
          %396 = sbr.rel (%p394) target = $region28
        $region27: #{tpu_custom_call.1} parent=11 // pred_region
          _
        $region28: #{tpu_custom_call.1} parent=11 // pred_fallthru
          _
        // Predicated region
        $region29: #{tpu_custom_call.1} parent=11 // pred_check
          %p397 = pneg %p245
        $region30: #{tpu_custom_call.1} parent=11 // pred_check_branch
          %399 = sbr.rel (%p397) target = $region32
        $region31: #{tpu_custom_call.1} parent=11 // pred_region
          %s401 = ssub.s32 256, 256
          %402 = vsyncadd [#allocation12], %s401
          %s403 = sshll.u32 [#allocation11], 4
          %s404 = int_to_ptr.vmem [resolvable:$true] %s403
          %409 = dma.hbm_to_vmem [thread:$0]  %s8, 256, %s404, [#allocation12], 64, 64, 4
        $region32: #{tpu_custom_call.1} parent=11 // pred_fallthru
          _
        // Predicated region
        $region33: #{tpu_custom_call.1} parent=11 // pred_check
          %p410 = pneg %p266
        $region34: #{tpu_custom_call.1} parent=11 // pred_check_branch
          %412 = sbr.rel (%p410) target = $region36
        $region35: #{tpu_custom_call.1} parent=11 // pred_region
          %s414 = ssub.s32 16, 16
          %415 = vsyncadd [#allocation12], %s414
          %s417 = sshll.u32 [#allocation13], 4
          %s418 = int_to_ptr.vmem [resolvable:$true] %s417
          %420 = dma.hbm_to_vmem [thread:$0]  %s9, 16, %s418, [#allocation12]
        $region36: #{tpu_custom_call.1} parent=11 // pred_fallthru
          _
        // Predicated region
        $region37: #{tpu_custom_call.1} parent=11 // pred_check
          %p421 = pneg %p287
        $region38: #{tpu_custom_call.1} parent=11 // pred_check_branch
          %423 = sbr.rel (%p421) target = $region40
        $region39: #{tpu_custom_call.1} parent=11 // pred_region
          _
        $region40: #{tpu_custom_call.1} parent=11 // pred_fallthru
          _
        // Predicated region
        $region41: #{tpu_custom_call.1} parent=11 // pred_check
          %p424 = pneg %p308
        $region42: #{tpu_custom_call.1} parent=11 // pred_check_branch
          %426 = sbr.rel (%p424) target = $region44
        $region43: #{tpu_custom_call.1} parent=11 // pred_region
          _
        $region44: #{tpu_custom_call.1} parent=11 // pred_fallthru
          _
      $region12: #{tpu_custom_call.1} parent=5 // pred_fallthru
        _
      %p427 = scmp.lt.s32.totalorder %s36, 2
      // Predicated region
      $region45: #{tpu_custom_call.1} parent=5 // pred_check
        %p428 = pneg %p427
      $region46: #{tpu_custom_call.1} parent=5 // pred_check_branch
        %430 = sbr.rel (%p428) target = $region48
      $region47: #{tpu_custom_call.1} parent=5 // pred_region
        // Predicated region
        $region49: #{tpu_custom_call.1} parent=47 // pred_check
          %p431 = pneg %p56
        $region50: #{tpu_custom_call.1} parent=47 // pred_check_branch
          %433 = sbr.rel (%p431) target = $region52
        $region51: #{tpu_custom_call.1} parent=47 // pred_region
          %s434 = sand.u32 %s46, 1
          %s435 = scalar_lea.sflag [#allocation3], %s434
          %s436 = sand.u32 %s46, 1
          %s437 = smul.addr %s436, 8
          %s438 = scalar_lea.vmem [#allocation2], %s437
          %s440 = ssub.s32 128, 128
          %441 = vsyncadd %s435, %s440
          %s442 = smul.addr %s36, 128
          %s443 = scalar_lea.hbm %s0, %s442
          %s445 = sshll.u32 %s438, 4
          %s446 = int_to_ptr.vmem [resolvable:$true] %s445
          %448 = dma.hbm_to_vmem [thread:$0]  %s443, 128, %s446, %s435
        $region52: #{tpu_custom_call.1} parent=47 // pred_fallthru
          _
        // Predicated region
        $region53: #{tpu_custom_call.1} parent=47 // pred_check
          %p449 = pneg %p82
        $region54: #{tpu_custom_call.1} parent=47 // pred_check_branch
          %451 = sbr.rel (%p449) target = $region56
        $region55: #{tpu_custom_call.1} parent=47 // pred_region
          %s452 = sand.u32 %s36, 1
          %s453 = scalar_lea.sflag [#allocation6], %s452
          %s454 = sand.u32 %s72, 1
          %s455 = smul.addr %s454, 8
          %s456 = scalar_lea.vmem [#allocation5], %s455
          %s458 = ssub.s32 128, 128
          %459 = vsyncadd %s453, %s458
          %s460 = smul.addr %s36, 128
          %s461 = scalar_lea.hbm %s1, %s460
          %s463 = sshll.u32 %s456, 4
          %s464 = int_to_ptr.vmem [resolvable:$true] %s463
          %466 = dma.hbm_to_vmem [thread:$0]  %s461, 128, %s464, %s453
        $region56: #{tpu_custom_call.1} parent=47 // pred_fallthru
          _
        // Predicated region
        $region57: #{tpu_custom_call.1} parent=47 // pred_check
          %p467 = pneg %p108
        $region58: #{tpu_custom_call.1} parent=47 // pred_check_branch
          %469 = sbr.rel (%p467) target = $region60
        $region59: #{tpu_custom_call.1} parent=47 // pred_region
          %s470 = sand.u32 %s36, 1
          %s471 = scalar_lea.sflag [#allocation6], %s470
          %s472 = sand.u32 %s98, 1
          %s473 = smul.addr %s472, 8
          %s474 = scalar_lea.vmem [#allocation7], %s473
          %s476 = ssub.s32 128, 128
          %477 = vsyncadd %s471, %s476
          %s478 = smul.addr %s36, 128
          %s479 = scalar_lea.hbm %s2, %s478
          %s481 = sshll.u32 %s474, 4
          %s482 = int_to_ptr.vmem [resolvable:$true] %s481
          %484 = dma.hbm_to_vmem [thread:$0]  %s479, 128, %s482, %s471
        $region60: #{tpu_custom_call.1} parent=47 // pred_fallthru
          _
        // Predicated region
        $region61: #{tpu_custom_call.1} parent=47 // pred_check
          %p485 = pneg %p134
        $region62: #{tpu_custom_call.1} parent=47 // pred_check_branch
          %487 = sbr.rel (%p485) target = $region64
        $region63: #{tpu_custom_call.1} parent=47 // pred_region
          %s488 = sand.u32 %s36, 1
          %s489 = scalar_lea.sflag [#allocation9], %s488
          %s490 = sand.u32 %s124, 1
          %s491 = smul.addr %s490, 32
          %s492 = scalar_lea.vmem [#allocation8], %s491
          %s494 = ssub.s32 512, 512
          %495 = vsyncadd %s489, %s494
          %s496 = smul.addr %s36, 4
          %s497 = smul.addr %s496, 128
          %s498 = scalar_lea.hbm %s3, %s497
          %s499 = sshll.u32 %s492, 4
          %s500 = int_to_ptr.vmem [resolvable:$true] %s499
          %505 = dma.hbm_to_vmem [thread:$0]  %s498, 512, %s500, %s489, 128, 128, 8
        $region64: #{tpu_custom_call.1} parent=47 // pred_fallthru
          _
      $region48: #{tpu_custom_call.1} parent=5 // pred_fallthru
        _
      %p506 = scmp.le.s32.totalorder 1, %s36
      %p507 = scmp.lt.s32.totalorder %s36, 3
      %p508 = pnand %p506, %p507
      %p509 = pneg %p508
      // Predicated region
      $region65: #{tpu_custom_call.1} parent=5 // pred_check
        _
      $region66: #{tpu_custom_call.1} parent=5 // pred_check_branch
        %511 = sbr.rel (%p508) target = $region68
      $region67: #{tpu_custom_call.1} parent=5 // pred_region
        %s512 = ssub.s32 %s36, 1
        %s513 = sand.u32 %s49, 1
        %s514 = scalar_lea.sflag [#allocation3], %s513
        %s515 = sand.u32 %s49, 1
        %s516 = smul.addr %s515, 8
        %s517 = scalar_lea.vmem [#allocation2], %s516
        // Predicated region
        $region69: #{tpu_custom_call.1} parent=67 // pred_check
          %p518 = pneg %p62
        $region70: #{tpu_custom_call.1} parent=67 // pred_check_branch
          %520 = sbr.rel (%p518) target = $region72
        $region71: #{tpu_custom_call.1} parent=67 // pred_region
          %521 = dma.done %s514, 128
        $region72: #{tpu_custom_call.1} parent=67 // pred_fallthru
          _
        %s522 = sand.u32 %s41, 1
        %s523 = scalar_lea.sflag [#allocation6], %s522
        %s524 = sand.u32 %s75, 1
        %s525 = smul.addr %s524, 8
        %s526 = scalar_lea.vmem [#allocation5], %s525
        // Predicated region
        $region73: #{tpu_custom_call.1} parent=67 // pred_check
          %p527 = pneg %p88
        $region74: #{tpu_custom_call.1} parent=67 // pred_check_branch
          %529 = sbr.rel (%p527) target = $region76
        $region75: #{tpu_custom_call.1} parent=67 // pred_region
          %530 = dma.done %s523, 128
        $region76: #{tpu_custom_call.1} parent=67 // pred_fallthru
          _
        %s531 = sand.u32 %s41, 1
        %s532 = scalar_lea.sflag [#allocation6], %s531
        %s533 = sand.u32 %s101, 1
        %s534 = smul.addr %s533, 8
        %s535 = scalar_lea.vmem [#allocation7], %s534
        // Predicated region
        $region77: #{tpu_custom_call.1} parent=67 // pred_check
          %p536 = pneg %p114
        $region78: #{tpu_custom_call.1} parent=67 // pred_check_branch
          %538 = sbr.rel (%p536) target = $region80
        $region79: #{tpu_custom_call.1} parent=67 // pred_region
          %539 = dma.done %s532, 128
        $region80: #{tpu_custom_call.1} parent=67 // pred_fallthru
          _
        %s540 = sand.u32 %s41, 1
        %s541 = scalar_lea.sflag [#allocation9], %s540
        %s542 = sand.u32 %s127, 1
        %s543 = smul.addr %s542, 32
        %s544 = scalar_lea.vmem [#allocation8], %s543
        // Predicated region
        $region81: #{tpu_custom_call.1} parent=67 // pred_check
          %p545 = pneg %p140
        $region82: #{tpu_custom_call.1} parent=67 // pred_check_branch
          %547 = sbr.rel (%p545) target = $region84
        $region83: #{tpu_custom_call.1} parent=67 // pred_region
          %548 = dma.done %s541, 512
        $region84: #{tpu_custom_call.1} parent=67 // pred_fallthru
          _
        // Predicated region
        $region85: #{tpu_custom_call.1} parent=67 // pred_check
          %p549 = pneg %p161
        $region86: #{tpu_custom_call.1} parent=67 // pred_check_branch
          %551 = sbr.rel (%p549) target = $region88
        $region87: #{tpu_custom_call.1} parent=67 // pred_region
          %552 = dma.done [#allocation9], 256
        $region88: #{tpu_custom_call.1} parent=67 // pred_fallthru
          _
        // Predicated region
        $region89: #{tpu_custom_call.1} parent=67 // pred_check
          %p553 = pneg %p245
        $region90: #{tpu_custom_call.1} parent=67 // pred_check_branch
          %555 = sbr.rel (%p553) target = $region92
        $region91: #{tpu_custom_call.1} parent=67 // pred_region
          %556 = dma.done [#allocation12], 256
        $region92: #{tpu_custom_call.1} parent=67 // pred_fallthru
          _
        // Predicated region
        $region93: #{tpu_custom_call.1} parent=67 // pred_check
          %p557 = pneg %p266
        $region94: #{tpu_custom_call.1} parent=67 // pred_check_branch
          %559 = sbr.rel (%p557) target = $region96
        $region95: #{tpu_custom_call.1} parent=67 // pred_region
          %560 = dma.done [#allocation12], 16
        $region96: #{tpu_custom_call.1} parent=67 // pred_fallthru
          _
        %s561 = sand.u32 %s49, 1
        %s562 = scalar_lea.sflag [#allocation3], %s561
        %s563 = sand.u32 %s49, 1
        %s564 = smul.addr %s563, 8
        %s565 = scalar_lea.vmem [#allocation2], %s564
        %p566 = pneg %p62
        %p567 = pneg %p59
        %s568 = sand.u32 %s41, 1
        %s569 = scalar_lea.sflag [#allocation6], %s568
        %s570 = sand.u32 %s75, 1
        %s571 = smul.addr %s570, 8
        %s572 = scalar_lea.vmem [#allocation5], %s571
        %p573 = pneg %p88
        %p574 = pneg %p85
        %s575 = sand.u32 %s41, 1
        %s576 = scalar_lea.sflag [#allocation6], %s575
        %s577 = sand.u32 %s101, 1
        %s578 = smul.addr %s577, 8
        %s579 = scalar_lea.vmem [#allocation7], %s578
        %p580 = pneg %p114
        %p581 = pneg %p111
        %s582 = sand.u32 %s41, 1
        %s583 = scalar_lea.sflag [#allocation9], %s582
        %s584 = sand.u32 %s127, 1
        %s585 = smul.addr %s584, 32
        %s586 = scalar_lea.vmem [#allocation8], %s585
        %p587 = pneg %p140
        %p588 = pneg %p137
        %p589 = pneg %p161
        %p590 = pneg %p158
        %p591 = pneg %p182
        %p592 = pneg %p179
        %p593 = pneg %p203
        %p594 = pneg %p200
        %p595 = pneg %p224
        %p596 = pneg %p221
        %p597 = pneg %p245
        %p598 = pneg %p242
        %p599 = pneg %p266
        %p600 = pneg %p263
        %p601 = pneg %p287
        %p602 = pneg %p284
        %p603 = pneg %p308
        %p604 = pneg %p305
        %p605 = pneg %p334
        %p606 = pneg %p331
        %s607 = sand.u32 %s321, 1
        %s608 = scalar_lea.sflag [#allocation4], %s607
        %s609 = sand.u32 %s321, 1
        %s610 = smul.addr %s609, 8
        %s611 = scalar_lea.vmem [#allocation14], %s610
        %p612 = pneg %p360
        %p613 = pneg %p357
        %s614 = sand.u32 %s347, 1
        %s615 = scalar_lea.sflag [#allocation16], %s614
        %s616 = sand.u32 %s347, 1
        %s617 = smul.addr %s616, 32
        %s618 = scalar_lea.vmem [#allocation15], %s617
        %v620 = vld [vmem:[%s517] sm:$0xff]
        %v621 = vpack.c.bf16 %v620, %v620
        %v622 = vld [vmem:[#allocation10] sm:$0xf]
        %v623 = vld [vmem:[#allocation10 + $0x4] sm:$0xf]
        %v624 = vld [vmem:[#allocation10 + $0x8] sm:$0xf]
        %v625 = vld [vmem:[#allocation10 + $0xc] sm:$0xf]
        %v626 = vld [vmem:[%s5] sm:$0x1]
        %v628 = vlaneseq
        %v629 = vshrl.u32 %v628, 7
        %v630 = vsub.s32 0, %v629
        %v631 = vrot.slane %v626, %v630
        %v637 = vunpack.c.l.b16 %v622
        %v638 = vunpack.c.l.b16 %v623
        %v639 = vunpack.c.l.b16 %v624
        %v640 = vunpack.c.l.b16 %v625
        %v641 = vpack.c.b16 %v638, %v637
        %v642 = vpack.c.b16 %v640, %v639
        %vm645 = vcmask 261120
        %v647 = vsel %vm645, %v621, 0
        %649 = vmatprep.subr.bf16.mxu0 0
        %650 = vmatpush1.bf16.msra.mxu0 %v641
        %651 = vmatprep.subr.bf16.mxu0 0
        %652 = vmatpush1.bf16.msra.mxu0 %v642
        %653 = vmatprep.subr.bf16.mxu0 0
        %654 = vmatpush1.bf16.msra.mxu0 0
        %655 = vmatprep.subr.bf16.mxu0 0
        %656 = vmatpush1.bf16.msra.mxu0 0
        %657 = vmatprep.subr.bf16.mxu0 0
        %658 = vmatpush1.bf16.msra.mxu0 0
        %659 = vmatprep.subr.bf16.mxu0 0
        %660 = vmatpush1.bf16.msra.mxu0 0
        %661 = vmatprep.subr.bf16.mxu0 0
        %662 = vmatpush1.bf16.msra.mxu0 0
        %663 = vmatprep.subr.bf16.mxu0 0
        %664 = vmatpush1.bf16.msra.mxu0 0
        %665 = vmatprep.subr.bf16.mxu0 0
        %666 = vmatpush1.bf16.msra.mxu0 0
        %667 = vmatprep.subr.bf16.mxu0 0
        %668 = vmatpush1.bf16.msra.mxu0 0
        %669 = vmatprep.subr.bf16.mxu0 0
        %670 = vmatpush1.bf16.msra.mxu0 0
        %671 = vmatprep.subr.bf16.mxu0 0
        %672 = vmatpush1.bf16.msra.mxu0 0
        %673 = vmatprep.subr.bf16.mxu0 0
        %674 = vmatpush1.bf16.msra.mxu0 0
        %675 = vmatprep.subr.bf16.mxu0 0
        %676 = vmatpush1.bf16.msra.mxu0 0
        %677 = vmatprep.subr.bf16.mxu0 0
        %678 = vmatpush1.bf16.msra.mxu0 0
        %679 = vmatprep.subr.bf16.mxu0 0
        %680 = vmatpush1.bf16.msra.mxu0 0
        %681 = vmatprep.mubr.bf16.mxu0 0
        %682 = vmatmul.mubr.bf16.gmra.mrb[0].mxu0 %v647
        %v683 = vpop.f32.mrb[0].mxu0
        %v684 = vadd.f32 %v631, %v683
        %v685 = vpop.f32.mrb[0].mxu0
        %v686 = vpop.f32.mrb[0].mxu0
        %v687 = vpop.f32.mrb[0].mxu0
        %688 = vdwg.mxu0
        %v689 = vld [vmem:[%s526] sm:$0xff]
        %v690 = vpack.c.bf16 %v689, %v689
        %v691 = vld [vmem:[%s6] sm:$0xf]
        %v692 = vld [vmem:[%s6 + $0x4] sm:$0xf]
        %v693 = vld [vmem:[%s6 + $0x8] sm:$0xf]
        %v694 = vld [vmem:[%s6 + $0xc] sm:$0xf]
        %v695 = vld [vmem:[%s7] sm:$0x1]
        %v697 = vlaneseq
        %v698 = vshrl.u32 %v697, 7
        %v699 = vsub.s32 0, %v698
        %v700 = vrot.slane %v695, %v699
        %v706 = vunpack.c.l.b16 %v691
        %v707 = vunpack.c.l.b16 %v692
        %v708 = vunpack.c.l.b16 %v693
        %v709 = vunpack.c.l.b16 %v694
        %v710 = vpack.c.b16 %v707, %v706
        %v711 = vpack.c.b16 %v709, %v708
        %v715 = vsel %vm645, %v690, 0
        %717 = vmatprep.subr.bf16.mxu0 0
        %718 = vmatpush1.bf16.msra.mxu0 %v710
        %719 = vmatprep.subr.bf16.mxu0 0
        %720 = vmatpush1.bf16.msra.mxu0 %v711
        %721 = vmatprep.subr.bf16.mxu0 0
        %722 = vmatpush1.bf16.msra.mxu0 0
        %723 = vmatprep.subr.bf16.mxu0 0
        %724 = vmatpush1.bf16.msra.mxu0 0
        %725 = vmatprep.subr.bf16.mxu0 0
        %726 = vmatpush1.bf16.msra.mxu0 0
        %727 = vmatprep.subr.bf16.mxu0 0
        %728 = vmatpush1.bf16.msra.mxu0 0
        %729 = vmatprep.subr.bf16.mxu0 0
        %730 = vmatpush1.bf16.msra.mxu0 0
        %731 = vmatprep.subr.bf16.mxu0 0
        %732 = vmatpush1.bf16.msra.mxu0 0
        %733 = vmatprep.subr.bf16.mxu0 0
        %734 = vmatpush1.bf16.msra.mxu0 0
        %735 = vmatprep.subr.bf16.mxu0 0
        %736 = vmatpush1.bf16.msra.mxu0 0
        %737 = vmatprep.subr.bf16.mxu0 0
        %738 = vmatpush1.bf16.msra.mxu0 0
        %739 = vmatprep.subr.bf16.mxu0 0
        %740 = vmatpush1.bf16.msra.mxu0 0
        %741 = vmatprep.subr.bf16.mxu0 0
        %742 = vmatpush1.bf16.msra.mxu0 0
        %743 = vmatprep.subr.bf16.mxu0 0
        %744 = vmatpush1.bf16.msra.mxu0 0
        %745 = vmatprep.subr.bf16.mxu0 0
        %746 = vmatpush1.bf16.msra.mxu0 0
        %747 = vmatprep.subr.bf16.mxu0 0
        %748 = vmatpush1.bf16.msra.mxu0 0
        %749 = vmatprep.mubr.bf16.mxu0 0
        %750 = vmatmul.mubr.bf16.gmra.mrb[0].mxu0 %v715
        %v751 = vpop.f32.mrb[0].mxu0
        %v752 = vadd.f32 %v700, %v751
        %v753 = vpop.f32.mrb[0].mxu0
        %v754 = vpop.f32.mrb[0].mxu0
        %v755 = vpop.f32.mrb[0].mxu0
        %756 = vdwg.mxu0
        %v757 = vld [vmem:[%s535] sm:$0xff]
        %v758 = vpack.c.bf16 %v757, %v757
        %v759 = vld [vmem:[#allocation11] sm:$0xf]
        %v760 = vld [vmem:[#allocation11 + $0x4] sm:$0xf]
        %v761 = vld [vmem:[#allocation11 + $0x8] sm:$0xf]
        %v762 = vld [vmem:[#allocation11 + $0xc] sm:$0xf]
        %v763 = vld [vmem:[#allocation13] sm:$0x1]
        %v765 = vlaneseq
        %v766 = vshrl.u32 %v765, 7
        %v767 = vsub.s32 0, %v766
        %v768 = vrot.slane %v763, %v767
        %v774 = vunpack.c.l.b16 %v759
        %v775 = vunpack.c.l.b16 %v760
        %v776 = vunpack.c.l.b16 %v761
        %v777 = vunpack.c.l.b16 %v762
        %v778 = vpack.c.b16 %v775, %v774
        %v779 = vpack.c.b16 %v777, %v776
        %v783 = vsel %vm645, %v758, 0
        %785 = vmatprep.subr.bf16.mxu0 0
        %786 = vmatpush1.bf16.msra.mxu0 %v778
        %787 = vmatprep.subr.bf16.mxu0 0
        %788 = vmatpush1.bf16.msra.mxu0 %v779
        %789 = vmatprep.subr.bf16.mxu0 0
        %790 = vmatpush1.bf16.msra.mxu0 0
        %791 = vmatprep.subr.bf16.mxu0 0
        %792 = vmatpush1.bf16.msra.mxu0 0
        %793 = vmatprep.subr.bf16.mxu0 0
        %794 = vmatpush1.bf16.msra.mxu0 0
        %795 = vmatprep.subr.bf16.mxu0 0
        %796 = vmatpush1.bf16.msra.mxu0 0
        %797 = vmatprep.subr.bf16.mxu0 0
        %798 = vmatpush1.bf16.msra.mxu0 0
        %799 = vmatprep.subr.bf16.mxu0 0
        %800 = vmatpush1.bf16.msra.mxu0 0
        %801 = vmatprep.subr.bf16.mxu0 0
        %802 = vmatpush1.bf16.msra.mxu0 0
        %803 = vmatprep.subr.bf16.mxu0 0
        %804 = vmatpush1.bf16.msra.mxu0 0
        %805 = vmatprep.subr.bf16.mxu0 0
        %806 = vmatpush1.bf16.msra.mxu0 0
        %807 = vmatprep.subr.bf16.mxu0 0
        %808 = vmatpush1.bf16.msra.mxu0 0
        %809 = vmatprep.subr.bf16.mxu0 0
        %810 = vmatpush1.bf16.msra.mxu0 0
        %811 = vmatprep.subr.bf16.mxu0 0
        %812 = vmatpush1.bf16.msra.mxu0 0
        %813 = vmatprep.subr.bf16.mxu0 0
        %814 = vmatpush1.bf16.msra.mxu0 0
        %815 = vmatprep.subr.bf16.mxu0 0
        %816 = vmatpush1.bf16.msra.mxu0 0
        %817 = vmatprep.mubr.bf16.mxu0 0
        %818 = vmatmul.mubr.bf16.gmra.mrb[0].mxu0 %v783
        %v819 = vpop.f32.mrb[0].mxu0
        %v820 = vadd.f32 %v768, %v819
        %v821 = vpop.f32.mrb[0].mxu0
        %v822 = vpop.f32.mrb[0].mxu0
        %v823 = vpop.f32.mrb[0].mxu0
        %824 = vdwg.mxu0
        %v825 = vmul.f32 %v684, 0.35355338
        %827 = vrot.lane.b32.xlu0 %v825, 120
        %v828 = vpop.permute.xlu0 %827
        %830 = vrot.lane.b32.xlu0 %v825, 112
        %v831 = vpop.permute.xlu0 %830
        %833 = vrot.lane.b32.xlu0 %v825, 104
        %v834 = vpop.permute.xlu0 %833
        %v836 = vpack.c.bf16 %v825, %v825
        %v837 = vpack.c.bf16 %v828, %v828
        %v838 = vpack.c.bf16 %v831, %v831
        %v839 = vpack.c.bf16 %v834, %v834
        %841 = vrot.lane.b32.xlu0 %v752, 120
        %v842 = vpop.permute.xlu0 %841
        %844 = vrot.lane.b32.xlu0 %v752, 112
        %v845 = vpop.permute.xlu0 %844
        %847 = vrot.lane.b32.xlu0 %v752, 104
        %v848 = vpop.permute.xlu0 %847
        %v850 = vpack.c.bf16 %v752, %v752
        %v851 = vpack.c.bf16 %v842, %v842
        %v852 = vpack.c.bf16 %v845, %v845
        %v853 = vpack.c.bf16 %v848, %v848
        %855 = vrot.lane.b32.xlu0 %v820, 120
        %v856 = vpop.permute.xlu0 %855
        %858 = vrot.lane.b32.xlu0 %v820, 112
        %v859 = vpop.permute.xlu0 %858
        %861 = vrot.lane.b32.xlu0 %v820, 104
        %v862 = vpop.permute.xlu0 %861
        %v864 = vpack.c.bf16 %v820, %v820
        %v865 = vpack.c.bf16 %v856, %v856
        %v866 = vpack.c.bf16 %v859, %v859
        %v867 = vpack.c.bf16 %v862, %v862
        %vm868 = vcmask 64512
        %v870 = vsel %vm868, %v836, 0
        %v873 = vsel %vm868, %v850, 0
        %875 = vmatprep.subr.bf16.mxu0 0
        %876 = vmatpush1.bf16.xpose.msra.mxu0 %v873
        %877 = vmatprep.subr.bf16.mxu0 0
        %878 = vmatpush1.bf16.xpose.msra.mxu0 0
        %879 = vmatprep.subr.bf16.mxu0 0
        %880 = vmatpush1.bf16.xpose.msra.mxu0 0
        %881 = vmatprep.subr.bf16.mxu0 0
        %882 = vmatpush1.bf16.xpose.msra.mxu0 0
        %883 = vmatprep.subr.bf16.mxu0 0
        %884 = vmatpush1.bf16.xpose.msra.mxu0 0
        %885 = vmatprep.subr.bf16.mxu0 0
        %886 = vmatpush1.bf16.xpose.msra.mxu0 0
        %887 = vmatprep.subr.bf16.mxu0 0
        %888 = vmatpush1.bf16.xpose.msra.mxu0 0
        %889 = vmatprep.subr.bf16.mxu0 0
        %890 = vmatpush1.bf16.xpose.msra.mxu0 0
        %891 = vmatprep.subr.bf16.mxu0 0
        %892 = vmatpush1.bf16.xpose.msra.mxu0 0
        %893 = vmatprep.subr.bf16.mxu0 0
        %894 = vmatpush1.bf16.xpose.msra.mxu0 0
        %895 = vmatprep.subr.bf16.mxu0 0
        %896 = vmatpush1.bf16.xpose.msra.mxu0 0
        %897 = vmatprep.subr.bf16.mxu0 0
        %898 = vmatpush1.bf16.xpose.msra.mxu0 0
        %899 = vmatprep.subr.bf16.mxu0 0
        %900 = vmatpush1.bf16.xpose.msra.mxu0 0
        %901 = vmatprep.subr.bf16.mxu0 0
        %902 = vmatpush1.bf16.xpose.msra.mxu0 0
        %903 = vmatprep.subr.bf16.mxu0 0
        %904 = vmatpush1.bf16.xpose.msra.mxu0 0
        %905 = vmatprep.subr.bf16.mxu0 0
        %906 = vmatpush1.bf16.xpose.msra.mxu0 0
        %907 = vmatprep.mubr.bf16.mxu0 0
        %908 = vmatmul.mubr.bf16.gmra.mrb[0].mxu0 %v870
        %v909 = vpop.f32.mrb[0].mxu0
        %v910 = vadd.f32 0.0, %v909
        %v911 = vpop.f32.mrb[0].mxu0
        %v912 = vpop.f32.mrb[0].mxu0
        %v913 = vpop.f32.mrb[0].mxu0
        %914 = vdwg.mxu0
        %v916 = vsel %vm868, %v837, 0
        %v919 = vsel %vm868, %v851, 0
        %921 = vmatprep.subr.bf16.mxu0 0
        %922 = vmatpush1.bf16.xpose.msra.mxu0 %v919
        %923 = vmatprep.subr.bf16.mxu0 0
        %924 = vmatpush1.bf16.xpose.msra.mxu0 0
        %925 = vmatprep.subr.bf16.mxu0 0
        %926 = vmatpush1.bf16.xpose.msra.mxu0 0
        %927 = vmatprep.subr.bf16.mxu0 0
        %928 = vmatpush1.bf16.xpose.msra.mxu0 0
        %929 = vmatprep.subr.bf16.mxu0 0
        %930 = vmatpush1.bf16.xpose.msra.mxu0 0
        %931 = vmatprep.subr.bf16.mxu0 0
        %932 = vmatpush1.bf16.xpose.msra.mxu0 0
        %933 = vmatprep.subr.bf16.mxu0 0
        %934 = vmatpush1.bf16.xpose.msra.mxu0 0
        %935 = vmatprep.subr.bf16.mxu0 0
        %936 = vmatpush1.bf16.xpose.msra.mxu0 0
        %937 = vmatprep.subr.bf16.mxu0 0
        %938 = vmatpush1.bf16.xpose.msra.mxu0 0
        %939 = vmatprep.subr.bf16.mxu0 0
        %940 = vmatpush1.bf16.xpose.msra.mxu0 0
        %941 = vmatprep.subr.bf16.mxu0 0
        %942 = vmatpush1.bf16.xpose.msra.mxu0 0
        %943 = vmatprep.subr.bf16.mxu0 0
        %944 = vmatpush1.bf16.xpose.msra.mxu0 0
        %945 = vmatprep.subr.bf16.mxu0 0
        %946 = vmatpush1.bf16.xpose.msra.mxu0 0
        %947 = vmatprep.subr.bf16.mxu0 0
        %948 = vmatpush1.bf16.xpose.msra.mxu0 0
        %949 = vmatprep.subr.bf16.mxu0 0
        %950 = vmatpush1.bf16.xpose.msra.mxu0 0
        %951 = vmatprep.subr.bf16.mxu0 0
        %952 = vmatpush1.bf16.xpose.msra.mxu0 0
        %953 = vmatprep.mubr.bf16.mxu0 0
        %954 = vmatmul.mubr.bf16.gmra.mrb[0].mxu0 %v916
        %v955 = vpop.f32.mrb[0].mxu0
        %v956 = vadd.f32 0.0, %v955
        %v957 = vpop.f32.mrb[0].mxu0
        %v958 = vpop.f32.mrb[0].mxu0
        %v959 = vpop.f32.mrb[0].mxu0
        %960 = vdwg.mxu0
        %v962 = vsel %vm868, %v838, 0
        %v965 = vsel %vm868, %v852, 0
        %967 = vmatprep.subr.bf16.mxu0 0
        %968 = vmatpush1.bf16.xpose.msra.mxu0 %v965
        %969 = vmatprep.subr.bf16.mxu0 0
        %970 = vmatpush1.bf16.xpose.msra.mxu0 0
        %971 = vmatprep.subr.bf16.mxu0 0
        %972 = vmatpush1.bf16.xpose.msra.mxu0 0
        %973 = vmatprep.subr.bf16.mxu0 0
        %974 = vmatpush1.bf16.xpose.msra.mxu0 0
        %975 = vmatprep.subr.bf16.mxu0 0
        %976 = vmatpush1.bf16.xpose.msra.mxu0 0
        %977 = vmatprep.subr.bf16.mxu0 0
        %978 = vmatpush1.bf16.xpose.msra.mxu0 0
        %979 = vmatprep.subr.bf16.mxu0 0
        %980 = vmatpush1.bf16.xpose.msra.mxu0 0
        %981 = vmatprep.subr.bf16.mxu0 0
        %982 = vmatpush1.bf16.xpose.msra.mxu0 0
        %983 = vmatprep.subr.bf16.mxu0 0
        %984 = vmatpush1.bf16.xpose.msra.mxu0 0
        %985 = vmatprep.subr.bf16.mxu0 0
        %986 = vmatpush1.bf16.xpose.msra.mxu0 0
        %987 = vmatprep.subr.bf16.mxu0 0
        %988 = vmatpush1.bf16.xpose.msra.mxu0 0
        %989 = vmatprep.subr.bf16.mxu0 0
        %990 = vmatpush1.bf16.xpose.msra.mxu0 0
        %991 = vmatprep.subr.bf16.mxu0 0
        %992 = vmatpush1.bf16.xpose.msra.mxu0 0
        %993 = vmatprep.subr.bf16.mxu0 0
        %994 = vmatpush1.bf16.xpose.msra.mxu0 0
        %995 = vmatprep.subr.bf16.mxu0 0
        %996 = vmatpush1.bf16.xpose.msra.mxu0 0
        %997 = vmatprep.subr.bf16.mxu0 0
        %998 = vmatpush1.bf16.xpose.msra.mxu0 0
        %999 = vmatprep.mubr.bf16.mxu0 0
        %1000 = vmatmul.mubr.bf16.gmra.mrb[0].mxu0 %v962
        %v1001 = vpop.f32.mrb[0].mxu0
        %v1002 = vadd.f32 0.0, %v1001
        %v1003 = vpop.f32.mrb[0].mxu0
        %v1004 = vpop.f32.mrb[0].mxu0
        %v1005 = vpop.f32.mrb[0].mxu0
        %1006 = vdwg.mxu0
        %v1008 = vsel %vm868, %v839, 0
        %v1011 = vsel %vm868, %v853, 0
        %1013 = vmatprep.subr.bf16.mxu0 0
        %1014 = vmatpush1.bf16.xpose.msra.mxu0 %v1011
        %1015 = vmatprep.subr.bf16.mxu0 0
        %1016 = vmatpush1.bf16.xpose.msra.mxu0 0
        %1017 = vmatprep.subr.bf16.mxu0 0
        %1018 = vmatpush1.bf16.xpose.msra.mxu0 0
        %1019 = vmatprep.subr.bf16.mxu0 0
        %1020 = vmatpush1.bf16.xpose.msra.mxu0 0
        %1021 = vmatprep.subr.bf16.mxu0 0
        %1022 = vmatpush1.bf16.xpose.msra.mxu0 0
        %1023 = vmatprep.subr.bf16.mxu0 0
        %1024 = vmatpush1.bf16.xpose.msra.mxu0 0
        %1025 = vmatprep.subr.bf16.mxu0 0
        %1026 = vmatpush1.bf16.xpose.msra.mxu0 0
        %1027 = vmatprep.subr.bf16.mxu0 0
        %1028 = vmatpush1.bf16.xpose.msra.mxu0 0
        %1029 = vmatprep.subr.bf16.mxu0 0
        %1030 = vmatpush1.bf16.xpose.msra.mxu0 0
        %1031 = vmatprep.subr.bf16.mxu0 0
        %1032 = vmatpush1.bf16.xpose.msra.mxu0 0
        %1033 = vmatprep.subr.bf16.mxu0 0
        %1034 = vmatpush1.bf16.xpose.msra.mxu0 0
        %1035 = vmatprep.subr.bf16.mxu0 0
        %1036 = vmatpush1.bf16.xpose.msra.mxu0 0
        %1037 = vmatprep.subr.bf16.mxu0 0
        %1038 = vmatpush1.bf16.xpose.msra.mxu0 0
        %1039 = vmatprep.subr.bf16.mxu0 0
        %1040 = vmatpush1.bf16.xpose.msra.mxu0 0
        %1041 = vmatprep.subr.bf16.mxu0 0
        %1042 = vmatpush1.bf16.xpose.msra.mxu0 0
        %1043 = vmatprep.subr.bf16.mxu0 0
        %1044 = vmatpush1.bf16.xpose.msra.mxu0 0
        %1045 = vmatprep.mubr.bf16.mxu0 0
        %1046 = vmatmul.mubr.bf16.gmra.mrb[0].mxu0 %v1008
        %v1047 = vpop.f32.mrb[0].mxu0
        %v1048 = vadd.f32 0.0, %v1047
        %v1049 = vpop.f32.mrb[0].mxu0
        %v1050 = vpop.f32.mrb[0].mxu0
        %v1051 = vpop.f32.mrb[0].mxu0
        %1052 = vdwg.mxu0
        %v1053 = vld [vmem:[%s544] sm:$0xff]
        %v1054 = vld [vmem:[%s544 + $0x8] sm:$0xff]
        %v1055 = vld [vmem:[%s544 + $0x10] sm:$0xff]
        %v1056 = vld [vmem:[%s544 + $0x18] sm:$0xff]
        %v1057 = vmax.f32 %v1053, 1e-06
        %v1058 = vmax.f32 %v1054, 1e-06
        %v1059 = vmax.f32 %v1055, 1e-06
        %v1060 = vmax.f32 %v1056, 1e-06
        %v1061 = vlog2.pop %v1057
        %v1062 = vmul.f32 %v1061, 0.6931472
        %v1063 = vlog2.pop %v1058
        %v1064 = vmul.f32 %v1063, 0.6931472
        %v1065 = vlog2.pop %v1059
        %v1066 = vmul.f32 %v1065, 0.6931472
        %v1067 = vlog2.pop %v1060
        %v1068 = vmul.f32 %v1067, 0.6931472
        %v1069 = vadd.f32 %v1062, %v910
        %v1070 = vadd.f32 %v1064, %v956
        %v1071 = vadd.f32 %v1066, %v1002
        %v1072 = vadd.f32 %v1068, %v1048
        %v1073 = vsel %vm868, %v1069, -inf
        %1074 = vmax.xlane.f32.xlu0 %v1073
        %v1075 = vpop.xlane.xlu0 %1074
        %v1076 = vsel %vm868, %v1070, -inf
        %1077 = vmax.xlane.f32.xlu0 %v1076
        %v1078 = vpop.xlane.xlu0 %1077
        %v1079 = vsel %vm868, %v1071, -inf
        %1080 = vmax.xlane.f32.xlu0 %v1079
        %v1081 = vpop.xlane.xlu0 %1080
        %v1082 = vsel %vm868, %v1072, -inf
        %1083 = vmax.xlane.f32.xlu0 %v1082
        %v1084 = vpop.xlane.xlu0 %1083
        %v1085 = vsub.f32 %v1069, %v1075
        %v1086 = vsub.f32 %v1070, %v1078
        %v1087 = vsub.f32 %v1071, %v1081
        %v1088 = vsub.f32 %v1072, %v1084
        %v1089 = vmul.f32 %v1085, 1.442695
        %v1090 = vpow.pop %v1089
        %v1091 = vmul.f32 %v1086, 1.442695
        %v1092 = vpow.pop %v1091
        %v1093 = vmul.f32 %v1087, 1.442695
        %v1094 = vpow.pop %v1093
        %v1095 = vmul.f32 %v1088, 1.442695
        %v1096 = vpow.pop %v1095
        %v1097 = vsel %vm868, %v1090, 0.0
        %1098 = vadd.xlane.f32.xlu0 %v1097
        %v1099 = vpop.xlane.xlu0 %1098
        %v1100 = vsel %vm868, %v1092, 0.0
        %1101 = vadd.xlane.f32.xlu0 %v1100
        %v1102 = vpop.xlane.xlu0 %1101
        %v1103 = vsel %vm868, %v1094, 0.0
        %1104 = vadd.xlane.f32.xlu0 %v1103
        %v1105 = vpop.xlane.xlu0 %1104
        %v1106 = vsel %vm868, %v1096, 0.0
        %1107 = vadd.xlane.f32.xlu0 %v1106
        %v1108 = vpop.xlane.xlu0 %1107
        %v1109 = vrcp.pop %v1099
        %v1110 = vmul.f32 %v1090, %v1109
        %v1111 = vrcp.pop %v1102
        %v1112 = vmul.f32 %v1092, %v1111
        %v1113 = vrcp.pop %v1105
        %v1114 = vmul.f32 %v1094, %v1113
        %v1115 = vrcp.pop %v1108
        %v1116 = vmul.f32 %v1096, %v1115
        %1117 = vst.msk [vmem:[%s618] sm:$0xff] %vm868, %v1110
        %1118 = vst.msk [vmem:[%s618 + $0x8] sm:$0xff] %vm868, %v1112
        %1119 = vst.msk [vmem:[%s618 + $0x10] sm:$0xff] %vm868, %v1114
        %1120 = vst.msk [vmem:[%s618 + $0x18] sm:$0xff] %vm868, %v1116
        %v1121 = vpack.c.bf16 %v1110, %v1110
        %v1122 = vpack.c.bf16 %v1112, %v1112
        %v1123 = vpack.c.bf16 %v1114, %v1114
        %v1124 = vpack.c.bf16 %v1116, %v1116
        %v1126 = vsel %vm868, %v1121, 0
        %vm1128 = vcmask 1043456
        %v1130 = vsel %vm1128, %v864, 0
        %1132 = vmatprep.subr.bf16.mxu0 0
        %1133 = vmatpush1.bf16.msra.mxu0 %v1130
        %1134 = vmatprep.subr.bf16.mxu0 0
        %1135 = vmatpush1.bf16.msra.mxu0 0
        %1136 = vmatprep.subr.bf16.mxu0 0
        %1137 = vmatpush1.bf16.msra.mxu0 0
        %1138 = vmatprep.subr.bf16.mxu0 0
        %1139 = vmatpush1.bf16.msra.mxu0 0
        %1140 = vmatprep.subr.bf16.mxu0 0
        %1141 = vmatpush1.bf16.msra.mxu0 0
        %1142 = vmatprep.subr.bf16.mxu0 0
        %1143 = vmatpush1.bf16.msra.mxu0 0
        %1144 = vmatprep.subr.bf16.mxu0 0
        %1145 = vmatpush1.bf16.msra.mxu0 0
        %1146 = vmatprep.subr.bf16.mxu0 0
        %1147 = vmatpush1.bf16.msra.mxu0 0
        %1148 = vmatprep.subr.bf16.mxu0 0
        %1149 = vmatpush1.bf16.msra.mxu0 0
        %1150 = vmatprep.subr.bf16.mxu0 0
        %1151 = vmatpush1.bf16.msra.mxu0 0
        %1152 = vmatprep.subr.bf16.mxu0 0
        %1153 = vmatpush1.bf16.msra.mxu0 0
        %1154 = vmatprep.subr.bf16.mxu0 0
        %1155 = vmatpush1.bf16.msra.mxu0 0
        %1156 = vmatprep.subr.bf16.mxu0 0
        %1157 = vmatpush1.bf16.msra.mxu0 0
        %1158 = vmatprep.subr.bf16.mxu0 0
        %1159 = vmatpush1.bf16.msra.mxu0 0
        %1160 = vmatprep.subr.bf16.mxu0 0
        %1161 = vmatpush1.bf16.msra.mxu0 0
        %1162 = vmatprep.subr.bf16.mxu0 0
        %1163 = vmatpush1.bf16.msra.mxu0 0
        %1164 = vmatprep.mubr.bf16.mxu0 0
        %1165 = vmatmul.mubr.bf16.gmra.mrb[0].mxu0 %v1126
        %v1166 = vpop.f32.mrb[0].mxu0
        %v1167 = vadd.f32 0.0, %v1166
        %v1168 = vpop.f32.mrb[0].mxu0
        %v1169 = vpop.f32.mrb[0].mxu0
        %v1170 = vpop.f32.mrb[0].mxu0
        %1171 = vdwg.mxu0
        %v1173 = vsel %vm868, %v1122, 0
        %v1176 = vsel %vm1128, %v865, 0
        %1178 = vmatprep.subr.bf16.mxu0 0
        %1179 = vmatpush1.bf16.msra.mxu0 %v1176
        %1180 = vmatprep.subr.bf16.mxu0 0
        %1181 = vmatpush1.bf16.msra.mxu0 0
        %1182 = vmatprep.subr.bf16.mxu0 0
        %1183 = vmatpush1.bf16.msra.mxu0 0
        %1184 = vmatprep.subr.bf16.mxu0 0
        %1185 = vmatpush1.bf16.msra.mxu0 0
        %1186 = vmatprep.subr.bf16.mxu0 0
        %1187 = vmatpush1.bf16.msra.mxu0 0
        %1188 = vmatprep.subr.bf16.mxu0 0
        %1189 = vmatpush1.bf16.msra.mxu0 0
        %1190 = vmatprep.subr.bf16.mxu0 0
        %1191 = vmatpush1.bf16.msra.mxu0 0
        %1192 = vmatprep.subr.bf16.mxu0 0
        %1193 = vmatpush1.bf16.msra.mxu0 0
        %1194 = vmatprep.subr.bf16.mxu0 0
        %1195 = vmatpush1.bf16.msra.mxu0 0
        %1196 = vmatprep.subr.bf16.mxu0 0
        %1197 = vmatpush1.bf16.msra.mxu0 0
        %1198 = vmatprep.subr.bf16.mxu0 0
        %1199 = vmatpush1.bf16.msra.mxu0 0
        %1200 = vmatprep.subr.bf16.mxu0 0
        %1201 = vmatpush1.bf16.msra.mxu0 0
        %1202 = vmatprep.subr.bf16.mxu0 0
        %1203 = vmatpush1.bf16.msra.mxu0 0
        %1204 = vmatprep.subr.bf16.mxu0 0
        %1205 = vmatpush1.bf16.msra.mxu0 0
        %1206 = vmatprep.subr.bf16.mxu0 0
        %1207 = vmatpush1.bf16.msra.mxu0 0
        %1208 = vmatprep.subr.bf16.mxu0 0
        %1209 = vmatpush1.bf16.msra.mxu0 0
        %1210 = vmatprep.mubr.bf16.mxu0 0
        %1211 = vmatmul.mubr.bf16.gmra.mrb[0].mxu0 %v1173
        %v1212 = vpop.f32.mrb[0].mxu0
        %v1213 = vadd.f32 0.0, %v1212
        %v1214 = vpop.f32.mrb[0].mxu0
        %v1215 = vpop.f32.mrb[0].mxu0
        %v1216 = vpop.f32.mrb[0].mxu0
        %1217 = vdwg.mxu0
        %v1219 = vsel %vm868, %v1123, 0
        %v1222 = vsel %vm1128, %v866, 0
        %1224 = vmatprep.subr.bf16.mxu0 0
        %1225 = vmatpush1.bf16.msra.mxu0 %v1222
        %1226 = vmatprep.subr.bf16.mxu0 0
        %1227 = vmatpush1.bf16.msra.mxu0 0
        %1228 = vmatprep.subr.bf16.mxu0 0
        %1229 = vmatpush1.bf16.msra.mxu0 0
        %1230 = vmatprep.subr.bf16.mxu0 0
        %1231 = vmatpush1.bf16.msra.mxu0 0
        %1232 = vmatprep.subr.bf16.mxu0 0
        %1233 = vmatpush1.bf16.msra.mxu0 0
        %1234 = vmatprep.subr.bf16.mxu0 0
        %1235 = vmatpush1.bf16.msra.mxu0 0
        %1236 = vmatprep.subr.bf16.mxu0 0
        %1237 = vmatpush1.bf16.msra.mxu0 0
        %1238 = vmatprep.subr.bf16.mxu0 0
        %1239 = vmatpush1.bf16.msra.mxu0 0
        %1240 = vmatprep.subr.bf16.mxu0 0
        %1241 = vmatpush1.bf16.msra.mxu0 0
        %1242 = vmatprep.subr.bf16.mxu0 0
        %1243 = vmatpush1.bf16.msra.mxu0 0
        %1244 = vmatprep.subr.bf16.mxu0 0
        %1245 = vmatpush1.bf16.msra.mxu0 0
        %1246 = vmatprep.subr.bf16.mxu0 0
        %1247 = vmatpush1.bf16.msra.mxu0 0
        %1248 = vmatprep.subr.bf16.mxu0 0
        %1249 = vmatpush1.bf16.msra.mxu0 0
        %1250 = vmatprep.subr.bf16.mxu0 0
        %1251 = vmatpush1.bf16.msra.mxu0 0
        %1252 = vmatprep.subr.bf16.mxu0 0
        %1253 = vmatpush1.bf16.msra.mxu0 0
        %1254 = vmatprep.subr.bf16.mxu0 0
        %1255 = vmatpush1.bf16.msra.mxu0 0
        %1256 = vmatprep.mubr.bf16.mxu0 0
        %1257 = vmatmul.mubr.bf16.gmra.mrb[0].mxu0 %v1219
        %v1258 = vpop.f32.mrb[0].mxu0
        %v1259 = vadd.f32 0.0, %v1258
        %v1260 = vpop.f32.mrb[0].mxu0
        %v1261 = vpop.f32.mrb[0].mxu0
        %v1262 = vpop.f32.mrb[0].mxu0
        %1263 = vdwg.mxu0
        %v1265 = vsel %vm868, %v1124, 0
        %v1268 = vsel %vm1128, %v867, 0
        %1270 = vmatprep.subr.bf16.mxu0 0
        %1271 = vmatpush1.bf16.msra.mxu0 %v1268
        %1272 = vmatprep.subr.bf16.mxu0 0
        %1273 = vmatpush1.bf16.msra.mxu0 0
        %1274 = vmatprep.subr.bf16.mxu0 0
        %1275 = vmatpush1.bf16.msra.mxu0 0
        %1276 = vmatprep.subr.bf16.mxu0 0
        %1277 = vmatpush1.bf16.msra.mxu0 0
        %1278 = vmatprep.subr.bf16.mxu0 0
        %1279 = vmatpush1.bf16.msra.mxu0 0
        %1280 = vmatprep.subr.bf16.mxu0 0
        %1281 = vmatpush1.bf16.msra.mxu0 0
        %1282 = vmatprep.subr.bf16.mxu0 0
        %1283 = vmatpush1.bf16.msra.mxu0 0
        %1284 = vmatprep.subr.bf16.mxu0 0
        %1285 = vmatpush1.bf16.msra.mxu0 0
        %1286 = vmatprep.subr.bf16.mxu0 0
        %1287 = vmatpush1.bf16.msra.mxu0 0
        %1288 = vmatprep.subr.bf16.mxu0 0
        %1289 = vmatpush1.bf16.msra.mxu0 0
        %1290 = vmatprep.subr.bf16.mxu0 0
        %1291 = vmatpush1.bf16.msra.mxu0 0
        %1292 = vmatprep.subr.bf16.mxu0 0
        %1293 = vmatpush1.bf16.msra.mxu0 0
        %1294 = vmatprep.subr.bf16.mxu0 0
        %1295 = vmatpush1.bf16.msra.mxu0 0
        %1296 = vmatprep.subr.bf16.mxu0 0
        %1297 = vmatpush1.bf16.msra.mxu0 0
        %1298 = vmatprep.subr.bf16.mxu0 0
        %1299 = vmatpush1.bf16.msra.mxu0 0
        %1300 = vmatprep.subr.bf16.mxu0 0
        %1301 = vmatpush1.bf16.msra.mxu0 0
        %1302 = vmatprep.mubr.bf16.mxu0 0
        %1303 = vmatmul.mubr.bf16.gmra.mrb[0].mxu0 %v1265
        %v1304 = vpop.f32.mrb[0].mxu0
        %v1305 = vadd.f32 0.0, %v1304
        %v1306 = vpop.f32.mrb[0].mxu0
        %v1307 = vpop.f32.mrb[0].mxu0
        %v1308 = vpop.f32.mrb[0].mxu0
        %1309 = vdwg.mxu0
        %1311 = vrot.lane.b32.xlu0 %v1213, 8
        %v1312 = vpop.permute.xlu0 %1311
        %1315 = vrot.lane.b32.xlu0 %v1259, 16
        %v1316 = vpop.permute.xlu0 %1315
        %1319 = vrot.lane.b32.xlu0 %v1305, 24
        %v1320 = vpop.permute.xlu0 %1319
        %v1322 = vsel %vm868, %v1167, %v1312
        %vm1323 = vcmask 130048
        %v1324 = vsel %vm1323, %v1322, %v1316
        %vm1325 = vcmask 195584
        %v1326 = vsel %vm1325, %v1324, %v1320
        %v1327 = vpack.c.bf16 %v1326, %v1326
        %v1328 = vld [vmem:[%s10] sm:$0xf]
        %v1329 = vld [vmem:[%s10 + $0x4] sm:$0xf]
        %v1330 = vld [vmem:[%s10 + $0x8] sm:$0xf]
        %v1331 = vld [vmem:[%s10 + $0xc] sm:$0xf]
        %v1332 = vld [vmem:[%s11] sm:$0x1]
        %v1334 = vlaneseq
        %v1335 = vshrl.u32 %v1334, 7
        %v1336 = vsub.s32 0, %v1335
        %v1337 = vrot.slane %v1332, %v1336
        %v1343 = vunpack.c.l.b16 %v1328
        %v1344 = vunpack.c.l.b16 %v1329
        %v1345 = vunpack.c.l.b16 %v1330
        %v1346 = vunpack.c.l.b16 %v1331
        %v1347 = vpack.c.b16 %v1344, %v1343
        %v1348 = vpack.c.b16 %v1346, %v1345
        %v1352 = vsel %vm645, %v1327, 0
        %1354 = vmatprep.subr.bf16.mxu0 0
        %1355 = vmatpush1.bf16.msra.mxu0 %v1347
        %1356 = vmatprep.subr.bf16.mxu0 0
        %1357 = vmatpush1.bf16.msra.mxu0 %v1348
        %1358 = vmatprep.subr.bf16.mxu0 0
        %1359 = vmatpush1.bf16.msra.mxu0 0
        %1360 = vmatprep.subr.bf16.mxu0 0
        %1361 = vmatpush1.bf16.msra.mxu0 0
        %1362 = vmatprep.subr.bf16.mxu0 0
        %1363 = vmatpush1.bf16.msra.mxu0 0
        %1364 = vmatprep.subr.bf16.mxu0 0
        %1365 = vmatpush1.bf16.msra.mxu0 0
        %1366 = vmatprep.subr.bf16.mxu0 0
        %1367 = vmatpush1.bf16.msra.mxu0 0
        %1368 = vmatprep.subr.bf16.mxu0 0
        %1369 = vmatpush1.bf16.msra.mxu0 0
        %1370 = vmatprep.subr.bf16.mxu0 0
        %1371 = vmatpush1.bf16.msra.mxu0 0
        %1372 = vmatprep.subr.bf16.mxu0 0
        %1373 = vmatpush1.bf16.msra.mxu0 0
        %1374 = vmatprep.subr.bf16.mxu0 0
        %1375 = vmatpush1.bf16.msra.mxu0 0
        %1376 = vmatprep.subr.bf16.mxu0 0
        %1377 = vmatpush1.bf16.msra.mxu0 0
        %1378 = vmatprep.subr.bf16.mxu0 0
        %1379 = vmatpush1.bf16.msra.mxu0 0
        %1380 = vmatprep.subr.bf16.mxu0 0
        %1381 = vmatpush1.bf16.msra.mxu0 0
        %1382 = vmatprep.subr.bf16.mxu0 0
        %1383 = vmatpush1.bf16.msra.mxu0 0
        %1384 = vmatprep.subr.bf16.mxu0 0
        %1385 = vmatpush1.bf16.msra.mxu0 0
        %1386 = vmatprep.mubr.bf16.mxu0 0
        %1387 = vmatmul.mubr.bf16.gmra.mrb[0].mxu0 %v1352
        %v1388 = vpop.f32.mrb[0].mxu0
        %v1389 = vadd.f32 %v1337, %v1388
        %v1390 = vpop.f32.mrb[0].mxu0
        %v1391 = vpop.f32.mrb[0].mxu0
        %v1392 = vpop.f32.mrb[0].mxu0
        %1393 = vdwg.mxu0
        %1394 = vst.msk [vmem:[%s611] sm:$0xff] %vm645, %v1389
        %s1395 = sand.u32 %s321, 1
        %s1396 = scalar_lea.sflag [#allocation4], %s1395
        %s1397 = sand.u32 %s321, 1
        %s1398 = smul.addr %s1397, 8
        %s1399 = scalar_lea.vmem [#allocation14], %s1398
        %s1400 = sand.u32 %s347, 1
        %s1401 = scalar_lea.sflag [#allocation16], %s1400
        %s1402 = sand.u32 %s347, 1
        %s1403 = smul.addr %s1402, 32
        %s1404 = scalar_lea.vmem [#allocation15], %s1403
        // Predicated region
        $region97: #{tpu_custom_call.1} parent=67 // pred_check
          %p1405 = pneg %p331
        $region98: #{tpu_custom_call.1} parent=67 // pred_check_branch
          %1407 = sbr.rel (%p1405) target = $region100
        $region99: #{tpu_custom_call.1} parent=67 // pred_region
          %s1409 = ssub.s32 128, 128
          %1410 = vsyncadd %s1396, %s1409
          %s1411 = smul.addr %s41, 128
          %s1412 = scalar_lea.hbm %s12, %s1411
          %s1414 = sshll.u32 %s1399, 4
          %s1415 = int_to_ptr.vmem [resolvable:$true] %s1414
          %1417 = dma.vmem_to_hbm [thread:$0]  %s1415, 128, %s1412, %s1396
        $region100: #{tpu_custom_call.1} parent=67 // pred_fallthru
          _
        // Predicated region
        $region101: #{tpu_custom_call.1} parent=67 // pred_check
          %p1418 = pneg %p357
        $region102: #{tpu_custom_call.1} parent=67 // pred_check_branch
          %1420 = sbr.rel (%p1418) target = $region104
        $region103: #{tpu_custom_call.1} parent=67 // pred_region
          %s1422 = ssub.s32 512, 512
          %1423 = vsyncadd %s1401, %s1422
          %s1424 = smul.addr %s41, 4
          %s1425 = smul.addr %s1424, 128
          %s1426 = scalar_lea.hbm %s13, %s1425
          %s1427 = sshll.u32 %s1404, 4
          %s1428 = int_to_ptr.vmem [resolvable:$true] %s1427
          %1433 = dma.vmem_to_hbm [thread:$0]  %s1428, 512, %s1426, %s1401, 128, 128, 8
        $region104: #{tpu_custom_call.1} parent=67 // pred_fallthru
          _
      $region68: #{tpu_custom_call.1} parent=5 // pred_fallthru
        _
      %p1434 = scmp.le.s32.totalorder 2, %s36
      // Predicated region
      $region105: #{tpu_custom_call.1} parent=5 // pred_check
        %p1435 = pneg %p1434
      $region106: #{tpu_custom_call.1} parent=5 // pred_check_branch
        %1437 = sbr.rel (%p1435) target = $region108
      $region107: #{tpu_custom_call.1} parent=5 // pred_region
        %s1438 = ssub.s32 %s36, 2
        // Predicated region
        $region109: #{tpu_custom_call.1} parent=107 // pred_check
          %p1439 = pneg %p337
        $region110: #{tpu_custom_call.1} parent=107 // pred_check_branch
          %1441 = sbr.rel (%p1439) target = $region112
        $region111: #{tpu_custom_call.1} parent=107 // pred_region
          %s1442 = sand.u32 %s322, 1
          %s1443 = scalar_lea.sflag [#allocation4], %s1442
          %s1444 = sand.u32 %s322, 1
          %s1445 = smul.addr %s1444, 8
          %s1446 = scalar_lea.vmem [#allocation14], %s1445
          %1447 = dma.done %s1443, 128
        $region112: #{tpu_custom_call.1} parent=107 // pred_fallthru
          _
        // Predicated region
        $region113: #{tpu_custom_call.1} parent=107 // pred_check
          %p1448 = pneg %p363
        $region114: #{tpu_custom_call.1} parent=107 // pred_check_branch
          %1450 = sbr.rel (%p1448) target = $region116
        $region115: #{tpu_custom_call.1} parent=107 // pred_region
          %s1451 = sand.u32 %s348, 1
          %s1452 = scalar_lea.sflag [#allocation16], %s1451
          %s1453 = sand.u32 %s348, 1
          %s1454 = smul.addr %s1453, 32
          %s1455 = scalar_lea.vmem [#allocation15], %s1454
          %1456 = dma.done %s1452, 512
        $region116: #{tpu_custom_call.1} parent=107 // pred_fallthru
          _
      $region108: #{tpu_custom_call.1} parent=5 // pred_fallthru
        _
    $region6: #{tpu_custom_call.1} parent=1 // loop_footer
      %s40 = sadd.s32 1, %s36
    $region7: #{tpu_custom_call.1} parent=1 // loop_footer_branch
      %35 = sbr.rel target = $region3
    $region8: #{tpu_custom_call.1} parent=1 // loop_exit
      _
    %1457 = vsyncpa [#allocation3], 1
    %s1458 = scalar_lea.sflag [#allocation3], 1
    %1459 = vsyncpa %s1458, 1
    %1460 = vsyncpa [#allocation6], 1
    %s1461 = scalar_lea.sflag [#allocation6], 1
    %1462 = vsyncpa %s1461, 1
    %1463 = vsyncpa [#allocation9], 1
    %s1464 = scalar_lea.sflag [#allocation9], 1
    %1465 = vsyncpa %s1464, 1
    %1466 = vsyncpa [#allocation12], 1
    %1467 = vsyncpa [#allocation4], 1
    %s1468 = scalar_lea.sflag [#allocation4], 1
    %1469 = vsyncpa %s1468, 1
    %1470 = vsyncpa [#allocation16], 1
    %s1471 = scalar_lea.sflag [#allocation16], 1
    %1472 = vsyncpa %s1471, 1

// kernel: tpu_custom_call.1
$region0: #{tpu_custom_call.1}
  #allocation0 [shape = 'u32[]', space=smem, size = 0x4, offset = 0x4, fixed_abs, tag = 'smem constant byte address 0x4 - core index']
  #allocation1 [shape = 'u32[144,128]{1,0:T(1,128)}', space=vmem, size = 0x12000, scoped, tag = 'internal scratch']
  %s0 = inlined_call_operand.hbm [shape: f32[16,32], index: 0, kind: input, shape index: {}]
  %s1 = inlined_call_operand.hbm [shape: f32[16,32], index: 1, kind: input, shape index: {}]
  %s2 = inlined_call_operand.hbm [shape: f32[16,32], index: 2, kind: input, shape index: {}]
  %s3 = inlined_call_operand.hbm [shape: f32[2,4,8,8], index: 3, kind: input, shape index: {}]
  %s4 = inlined_call_operand.hbm [shape: bf16[32,32], index: 4, kind: input, shape index: {}]
  %s5 = inlined_call_operand.vmem [shape: f32[1,32], index: 5, kind: input, shape index: {}]
  %s6 = inlined_call_operand.vmem [shape: bf16[32,32], index: 6, kind: input, shape index: {}]
  %s7 = inlined_call_operand.vmem [shape: f32[1,32], index: 7, kind: input, shape index: {}]
  %s8 = inlined_call_operand.hbm [shape: bf16[32,32], index: 8, kind: input, shape index: {}]
  %s9 = inlined_call_operand.hbm [shape: f32[1,32], index: 9, kind: input, shape index: {}]
  %s10 = inlined_call_operand.vmem [shape: bf16[32,32], index: 10, kind: input, shape index: {}]
  %s11 = inlined_call_operand.vmem [shape: f32[1,32], index: 11, kind: input, shape index: {}]
  %s12 = inlined_call_operand.hbm [shape: f32[16,32], index: 12, kind: output, shape index: {0}]
  %s13 = inlined_call_operand.hbm [shape: f32[2,4,8,8], index: 13, kind: output, shape index: {1}]
  %14 = xla_tuple %s12, %s13
  %s15 = sld [smem:[#allocation0]]
  $region117: #{tpu_custom_call.1} parent=0
    _
  %s17 = ssub.s32 1, %s15
  %s18 = scalar_select 0, %s17, %s15
  $region1: #{tpu_custom_call.1} parent=0
    #allocation2 [shape = 'u8[8192]{0}', space=vmem, size = 0x2000, scoped, tag = 'input window, operand 0']
    #allocation3 [shape = 's32[2]{0}', space=sflag, size = 0x8, scoped, tag = 'scoped memory for tpu_custom_call.1']
    #allocation4 [shape = 's32[2]{0}', space=sflag, size = 0x8, scoped, tag = 'scoped memory for tpu_custom_call.1']
    #allocation5 [shape = 'u8[8192]{0}', space=vmem, size = 0x2000, scoped, tag = 'input window, operand 1']
    #allocation6 [shape = 's32[2]{0}', space=sflag, size = 0x8, scoped, tag = 'scoped memory for tpu_custom_call.1']
    #allocation7 [shape = 'u8[8192]{0}', space=vmem, size = 0x2000, scoped, tag = 'input window, operand 2']
    #allocation8 [shape = 'u8[32768]{0}', space=vmem, size = 0x8000, scoped, tag = 'input window, operand 3']
    #allocation9 [shape = 's32[2]{0}', space=sflag, size = 0x8, scoped, tag = 'scoped memory for tpu_custom_call.1']
    #allocation10 [shape = 'u8[8192]{0}', space=vmem, size = 0x2000, scoped, tag = 'input window, operand 4, single buffered']
    #allocation11 [shape = 'u8[8192]{0}', space=vmem, size = 0x2000, scoped, tag = 'input window, operand 8, single buffered']
    #allocation12 [shape = 's32[1]{0}', space=sflag, size = 0x4, scoped, tag = 'scoped memory for tpu_custom_call.1']
    #allocation13 [shape = 'u8[512]{0}', space=vmem, size = 0x400, scoped, tag = 'input window, operand 9, single buffered']
    #allocation14 [shape = 'u8[8192]{0}', space=vmem, size = 0x2000, scoped, tag = 'output window, operand 0']
    #allocation15 [shape = 'u8[32768]{0}', space=vmem, size = 0x8000, scoped, tag = 'output window, operand 1']
    #allocation16 [shape = 's32[2]{0}', space=sflag, size = 0x8, scoped, tag = 'scoped memory for tpu_custom_call.1']
    %19 = vsyncpa [#allocation3], 0
    %s20 = scalar_lea.sflag [#allocation3], 1
    %21 = vsyncpa %s20, 0
    %22 = vsyncpa [#allocation6], 0
    %s23 = scalar_lea.sflag [#allocation6], 1
    %24 = vsyncpa %s23, 0
    %25 = vsyncpa [#allocation9], 0
    %s26 = scalar_lea.sflag [#allocation9], 1
    %27 = vsyncpa %s26, 0
    %28 = vsyncpa [#allocation12], 0
    %29 = vsyncpa [#allocation4], 0
    %s30 = scalar_lea.sflag [#allocation4], 1
    %31 = vsyncpa %s30, 0
    %32 = vsyncpa [#allocation16], 0
    %s33 = scalar_lea.sflag [#allocation16], 1
    %34 = vsyncpa %s33, 0
    loop: start=0, step=1, limit=4
    $region2: #{tpu_custom_call.1} parent=1 // loop_pre_header
      _
    $region3: #{tpu_custom_call.1} parent=1 // loop_header
      %s36 = sphi 0, %s40
      %p37 = scmp.ge.s32.totalorder %s36, 4
      %s46 = sphi 0, %s48
      %s49 = sphi 0, %s46
      %s50 = sphi 0, %s49
      %s66 = sphi 0, %s50
      %s72 = sphi 0, %s74
      %s75 = sphi 0, %s72
      %s76 = sphi 0, %s75
      %s92 = sphi 0, %s76
      %s98 = sphi 0, %s100
      %s101 = sphi 0, %s98
      %s102 = sphi 0, %s101
      %s118 = sphi 0, %s102
      %s124 = sphi 0, %s126
      %s127 = sphi 0, %s124
      %s128 = sphi 0, %s127
      %s144 = sphi 0, %s128
      %s148 = sphi 0, %s148
      %s150 = sphi 0, %s148
      %s151 = sphi 0, %s150
      %s165 = sphi 0, %s151
      %s169 = sphi 0, %s169
      %s171 = sphi 0, %s169
      %s172 = sphi 0, %s171
      %s186 = sphi 0, %s172
      %s190 = sphi 0, %s190
      %s192 = sphi 0, %s190
      %s193 = sphi 0, %s192
      %s207 = sphi 0, %s193
      %s211 = sphi 0, %s211
      %s213 = sphi 0, %s211
      %s214 = sphi 0, %s213
      %s228 = sphi 0, %s214
      %s232 = sphi 0, %s232
      %s234 = sphi 0, %s232
      %s235 = sphi 0, %s234
      %s249 = sphi 0, %s235
      %s253 = sphi 0, %s253
      %s255 = sphi 0, %s253
      %s256 = sphi 0, %s255
      %s270 = sphi 0, %s256
      %s274 = sphi 0, %s274
      %s276 = sphi 0, %s274
      %s277 = sphi 0, %s276
      %s291 = sphi 0, %s277
      %s295 = sphi 0, %s295
      %s297 = sphi 0, %s295
      %s298 = sphi 0, %s297
      %s312 = sphi 0, %s298
      %s318 = sphi 0, %s320
      %s321 = sphi 0, %s318
      %s322 = sphi 0, %s321
      %s338 = sphi 0, %s322
      %s344 = sphi 0, %s346
      %s347 = sphi 0, %s344
      %s348 = sphi 0, %s347
      %s364 = sphi 0, %s348
    $region4: #{tpu_custom_call.1} parent=1 // loop_header_branch
      %39 = sbr.rel (%p37) target = $region8
    $region5: #{tpu_custom_call.1} parent=1 // loop_body
      %s41 = ssub.s32 %s36, 1
      %s42 = ssub.s32 %s36, 2
      %s43 = sadd.s32 %s36, 1
      %s44 = ssub.s32 %s36, %s43
      %p45 = scmp.eq.s32.totalorder %s44, 0
      %s47 = sadd.s32 %s46, 1
      %s48 = scalar_select %p45, %s46, %s47
      %p51 = pneg %p45
      %p52 = scmp.eq.s32.totalorder %s36, 1
      %p53 = por %p51, %p52
      %p54 = scmp.ne.s32.totalorder %s46, %s49
      %p55 = scmp.eq.s32.totalorder %s36, 0
      %p56 = por %p54, %p55
      %p57 = scmp.ne.s32.totalorder %s46, %s49
      %p58 = scmp.eq.s32.totalorder %s41, 1
      %p59 = por %p57, %p58
      %p60 = scmp.ne.s32.totalorder %s49, %s50
      %p61 = scmp.eq.s32.totalorder %s41, 0
      %p62 = por %p60, %p61
      %p63 = scmp.ne.s32.totalorder %s49, %s50
      %p64 = scmp.eq.s32.totalorder %s42, 1
      %p65 = por %p63, %p64
      %p67 = scmp.ne.s32.totalorder %s50, %s66
      %p68 = scmp.eq.s32.totalorder %s42, 0
      %p69 = por %p67, %p68
      %s70 = ssub.s32 %s36, %s43
      %p71 = scmp.eq.s32.totalorder %s70, 0
      %s73 = sadd.s32 %s72, 1
      %s74 = scalar_select %p71, %s72, %s73
      %p77 = pneg %p71
      %p78 = scmp.eq.s32.totalorder %s36, 1
      %p79 = por %p77, %p78
      %p80 = scmp.ne.s32.totalorder %s72, %s75
      %p81 = scmp.eq.s32.totalorder %s36, 0
      %p82 = por %p80, %p81
      %p83 = scmp.ne.s32.totalorder %s72, %s75
      %p84 = scmp.eq.s32.totalorder %s41, 1
      %p85 = por %p83, %p84
      %p86 = scmp.ne.s32.totalorder %s75, %s76
      %p87 = scmp.eq.s32.totalorder %s41, 0
      %p88 = por %p86, %p87
      %p89 = scmp.ne.s32.totalorder %s75, %s76
      %p90 = scmp.eq.s32.totalorder %s42, 1
      %p91 = por %p89, %p90
      %p93 = scmp.ne.s32.totalorder %s76, %s92
      %p94 = scmp.eq.s32.totalorder %s42, 0
      %p95 = por %p93, %p94
      %s96 = ssub.s32 %s36, %s43
      %p97 = scmp.eq.s32.totalorder %s96, 0
      %s99 = sadd.s32 %s98, 1
      %s100 = scalar_select %p97, %s98, %s99
      %p103 = pneg %p97
      %p104 = scmp.eq.s32.totalorder %s36, 1
      %p105 = por %p103, %p104
      %p106 = scmp.ne.s32.totalorder %s98, %s101
      %p107 = scmp.eq.s32.totalorder %s36, 0
      %p108 = por %p106, %p107
      %p109 = scmp.ne.s32.totalorder %s98, %s101
      %p110 = scmp.eq.s32.totalorder %s41, 1
      %p111 = por %p109, %p110
      %p112 = scmp.ne.s32.totalorder %s101, %s102
      %p113 = scmp.eq.s32.totalorder %s41, 0
      %p114 = por %p112, %p113
      %p115 = scmp.ne.s32.totalorder %s101, %s102
      %p116 = scmp.eq.s32.totalorder %s42, 1
      %p117 = por %p115, %p116
      %p119 = scmp.ne.s32.totalorder %s102, %s118
      %p120 = scmp.eq.s32.totalorder %s42, 0
      %p121 = por %p119, %p120
      %s122 = ssub.s32 %s36, %s43
      %p123 = scmp.eq.s32.totalorder %s122, 0
      %s125 = sadd.s32 %s124, 1
      %s126 = scalar_select %p123, %s124, %s125
      %p129 = pneg %p123
      %p130 = scmp.eq.s32.totalorder %s36, 1
      %p131 = por %p129, %p130
      %p132 = scmp.ne.s32.totalorder %s124, %s127
      %p133 = scmp.eq.s32.totalorder %s36, 0
      %p134 = por %p132, %p133
      %p135 = scmp.ne.s32.totalorder %s124, %s127
      %p136 = scmp.eq.s32.totalorder %s41, 1
      %p137 = por %p135, %p136
      %p138 = scmp.ne.s32.totalorder %s127, %s128
      %p139 = scmp.eq.s32.totalorder %s41, 0
      %p140 = por %p138, %p139
      %p141 = scmp.ne.s32.totalorder %s127, %s128
      %p142 = scmp.eq.s32.totalorder %s42, 1
      %p143 = por %p141, %p142
      %p145 = scmp.ne.s32.totalorder %s128, %s144
      %p146 = scmp.eq.s32.totalorder %s42, 0
      %p147 = por %p145, %p146
      %s149 = sadd.s32 %s148, 1
      %p152 = scmp.eq.s32.totalorder %s36, 1
      %p153 = scmp.ne.s32.totalorder %s148, %s150
      %p154 = scmp.eq.s32.totalorder %s36, 0
      %p155 = por %p153, %p154
      %p156 = scmp.ne.s32.totalorder %s148, %s150
      %p157 = scmp.eq.s32.totalorder %s41, 1
      %p158 = por %p156, %p157
      %p159 = scmp.ne.s32.totalorder %s150, %s151
      %p160 = scmp.eq.s32.totalorder %s41, 0
      %p161 = por %p159, %p160
      %p162 = scmp.ne.s32.totalorder %s150, %s151
      %p163 = scmp.eq.s32.totalorder %s42, 1
      %p164 = por %p162, %p163
      %p166 = scmp.ne.s32.totalorder %s151, %s165
      %p167 = scmp.eq.s32.totalorder %s42, 0
      %p168 = por %p166, %p167
      %s170 = sadd.s32 %s169, 1
      %p173 = scmp.eq.s32.totalorder %s36, 1
      %p174 = scmp.ne.s32.totalorder %s169, %s171
      %p175 = scmp.eq.s32.totalorder %s36, 0
      %p176 = por %p174, %p175
      %p177 = scmp.ne.s32.totalorder %s169, %s171
      %p178 = scmp.eq.s32.totalorder %s41, 1
      %p179 = por %p177, %p178
      %p180 = scmp.ne.s32.totalorder %s171, %s172
      %p181 = scmp.eq.s32.totalorder %s41, 0
      %p182 = por %p180, %p181
      %p183 = scmp.ne.s32.totalorder %s171, %s172
      %p184 = scmp.eq.s32.totalorder %s42, 1
      %p185 = por %p183, %p184
      %p187 = scmp.ne.s32.totalorder %s172, %s186
      %p188 = scmp.eq.s32.totalorder %s42, 0
      %p189 = por %p187, %p188
      %s191 = sadd.s32 %s190, 1
      %p194 = scmp.eq.s32.totalorder %s36, 1
      %p195 = scmp.ne.s32.totalorder %s190, %s192
      %p196 = scmp.eq.s32.totalorder %s36, 0
      %p197 = por %p195, %p196
      %p198 = scmp.ne.s32.totalorder %s190, %s192
      %p199 = scmp.eq.s32.totalorder %s41, 1
      %p200 = por %p198, %p199
      %p201 = scmp.ne.s32.totalorder %s192, %s193
      %p202 = scmp.eq.s32.totalorder %s41, 0
      %p203 = por %p201, %p202
      %p204 = scmp.ne.s32.totalorder %s192, %s193
      %p205 = scmp.eq.s32.totalorder %s42, 1
      %p206 = por %p204, %p205
      %p208 = scmp.ne.s32.totalorder %s193, %s207
      %p209 = scmp.eq.s32.totalorder %s42, 0
      %p210 = por %p208, %p209
      %s212 = sadd.s32 %s211, 1
      %p215 = scmp.eq.s32.totalorder %s36, 1
      %p216 = scmp.ne.s32.totalorder %s211, %s213
      %p217 = scmp.eq.s32.totalorder %s36, 0
      %p218 = por %p216, %p217
      %p219 = scmp.ne.s32.totalorder %s211, %s213
      %p220 = scmp.eq.s32.totalorder %s41, 1
      %p221 = por %p219, %p220
      %p222 = scmp.ne.s32.totalorder %s213, %s214
      %p223 = scmp.eq.s32.totalorder %s41, 0
      %p224 = por %p222, %p223
      %p225 = scmp.ne.s32.totalorder %s213, %s214
      %p226 = scmp.eq.s32.totalorder %s42, 1
      %p227 = por %p225, %p226
      %p229 = scmp.ne.s32.totalorder %s214, %s228
      %p230 = scmp.eq.s32.totalorder %s42, 0
      %p231 = por %p229, %p230
      %s233 = sadd.s32 %s232, 1
      %p236 = scmp.eq.s32.totalorder %s36, 1
      %p237 = scmp.ne.s32.totalorder %s232, %s234
      %p238 = scmp.eq.s32.totalorder %s36, 0
      %p239 = por %p237, %p238
      %p240 = scmp.ne.s32.totalorder %s232, %s234
      %p241 = scmp.eq.s32.totalorder %s41, 1
      %p242 = por %p240, %p241
      %p243 = scmp.ne.s32.totalorder %s234, %s235
      %p244 = scmp.eq.s32.totalorder %s41, 0
      %p245 = por %p243, %p244
      %p246 = scmp.ne.s32.totalorder %s234, %s235
      %p247 = scmp.eq.s32.totalorder %s42, 1
      %p248 = por %p246, %p247
      %p250 = scmp.ne.s32.totalorder %s235, %s249
      %p251 = scmp.eq.s32.totalorder %s42, 0
      %p252 = por %p250, %p251
      %s254 = sadd.s32 %s253, 1
      %p257 = scmp.eq.s32.totalorder %s36, 1
      %p258 = scmp.ne.s32.totalorder %s253, %s255
      %p259 = scmp.eq.s32.totalorder %s36, 0
      %p260 = por %p258, %p259
      %p261 = scmp.ne.s32.totalorder %s253, %s255
      %p262 = scmp.eq.s32.totalorder %s41, 1
      %p263 = por %p261, %p262
      %p264 = scmp.ne.s32.totalorder %s255, %s256
      %p265 = scmp.eq.s32.totalorder %s41, 0
      %p266 = por %p264, %p265
      %p267 = scmp.ne.s32.totalorder %s255, %s256
      %p268 = scmp.eq.s32.totalorder %s42, 1
      %p269 = por %p267, %p268
      %p271 = scmp.ne.s32.totalorder %s256, %s270
      %p272 = scmp.eq.s32.totalorder %s42, 0
      %p273 = por %p271, %p272
      %s275 = sadd.s32 %s274, 1
      %p278 = scmp.eq.s32.totalorder %s36, 1
      %p279 = scmp.ne.s32.totalorder %s274, %s276
      %p280 = scmp.eq.s32.totalorder %s36, 0
      %p281 = por %p279, %p280
      %p282 = scmp.ne.s32.totalorder %s274, %s276
      %p283 = scmp.eq.s32.totalorder %s41, 1
      %p284 = por %p282, %p283
      %p285 = scmp.ne.s32.totalorder %s276, %s277
      %p286 = scmp.eq.s32.totalorder %s41, 0
      %p287 = por %p285, %p286
      %p288 = scmp.ne.s32.totalorder %s276, %s277
      %p289 = scmp.eq.s32.totalorder %s42, 1
      %p290 = por %p288, %p289
      %p292 = scmp.ne.s32.totalorder %s277, %s291
      %p293 = scmp.eq.s32.totalorder %s42, 0
      %p294 = por %p292, %p293
      %s296 = sadd.s32 %s295, 1
      %p299 = scmp.eq.s32.totalorder %s36, 1
      %p300 = scmp.ne.s32.totalorder %s295, %s297
      %p301 = scmp.eq.s32.totalorder %s36, 0
      %p302 = por %p300, %p301
      %p303 = scmp.ne.s32.totalorder %s295, %s297
      %p304 = scmp.eq.s32.totalorder %s41, 1
      %p305 = por %p303, %p304
      %p306 = scmp.ne.s32.totalorder %s297, %s298
      %p307 = scmp.eq.s32.totalorder %s41, 0
      %p308 = por %p306, %p307
      %p309 = scmp.ne.s32.totalorder %s297, %s298
      %p310 = scmp.eq.s32.totalorder %s42, 1
      %p311 = por %p309, %p310
      %p313 = scmp.ne.s32.totalorder %s298, %s312
      %p314 = scmp.eq.s32.totalorder %s42, 0
      %p315 = por %p313, %p314
      %s316 = ssub.s32 %s36, %s43
      %p317 = scmp.eq.s32.totalorder %s316, 0
      %s319 = sadd.s32 %s318, 1
      %s320 = scalar_select %p317, %s318, %s319
      %p323 = pneg %p317
      %p324 = scmp.eq.s32.totalorder %s36, 1
      %p325 = por %p323, %p324
      %p326 = scmp.ne.s32.totalorder %s318, %s321
      %p327 = scmp.eq.s32.totalorder %s36, 0
      %p328 = por %p326, %p327
      %p329 = scmp.ne.s32.totalorder %s318, %s321
      %p330 = scmp.eq.s32.totalorder %s41, 1
      %p331 = por %p329, %p330
      %p332 = scmp.ne.s32.totalorder %s321, %s322
      %p333 = scmp.eq.s32.totalorder %s41, 0
      %p334 = por %p332, %p333
      %p335 = scmp.ne.s32.totalorder %s321, %s322
      %p336 = scmp.eq.s32.totalorder %s42, 1
      %p337 = por %p335, %p336
      %p339 = scmp.ne.s32.totalorder %s322, %s338
      %p340 = scmp.eq.s32.totalorder %s42, 0
      %p341 = por %p339, %p340
      %s342 = ssub.s32 %s36, %s43
      %p343 = scmp.eq.s32.totalorder %s342, 0
      %s345 = sadd.s32 %s344, 1
      %s346 = scalar_select %p343, %s344, %s345
      %p349 = pneg %p343
      %p350 = scmp.eq.s32.totalorder %s36, 1
      %p351 = por %p349, %p350
      %p352 = scmp.ne.s32.totalorder %s344, %s347
      %p353 = scmp.eq.s32.totalorder %s36, 0
      %p354 = por %p352, %p353
      %p355 = scmp.ne.s32.totalorder %s344, %s347
      %p356 = scmp.eq.s32.totalorder %s41, 1
      %p357 = por %p355, %p356
      %p358 = scmp.ne.s32.totalorder %s347, %s348
      %p359 = scmp.eq.s32.totalorder %s41, 0
      %p360 = por %p358, %p359
      %p361 = scmp.ne.s32.totalorder %s347, %s348
      %p362 = scmp.eq.s32.totalorder %s42, 1
      %p363 = por %p361, %p362
      %p365 = scmp.ne.s32.totalorder %s348, %s364
      %p366 = scmp.eq.s32.totalorder %s42, 0
      %p367 = por %p365, %p366
      %p368 = scmp.le.s32.totalorder 1, %s36
      %p369 = scmp.lt.s32.totalorder %s36, 3
      %p370 = pnand %p368, %p369
      %p371 = pneg %p370
      // Predicated region
      $region9: #{tpu_custom_call.1} parent=5 // pred_check
        _
      $region10: #{tpu_custom_call.1} parent=5 // pred_check_branch
        %373 = sbr.rel (%p370) target = $region12
      $region11: #{tpu_custom_call.1} parent=5 // pred_region
        %s374 = ssub.s32 %s36, 1
        // Predicated region
        $region13: #{tpu_custom_call.1} parent=11 // pred_check
          %p375 = pneg %p161
        $region14: #{tpu_custom_call.1} parent=11 // pred_check_branch
          %377 = sbr.rel (%p375) target = $region16
        $region15: #{tpu_custom_call.1} parent=11 // pred_region
          %s379 = ssub.s32 256, 256
          %380 = vsyncadd [#allocation9], %s379
          %s381 = sshll.u32 [#allocation10], 4
          %s382 = int_to_ptr.vmem [resolvable:$true] %s381
          %387 = dma.hbm_to_vmem [thread:$0]  %s4, 256, %s382, [#allocation9], 64, 64, 4
        $region16: #{tpu_custom_call.1} parent=11 // pred_fallthru
          _
        // Predicated region
        $region17: #{tpu_custom_call.1} parent=11 // pred_check
          %p388 = pneg %p182
        $region18: #{tpu_custom_call.1} parent=11 // pred_check_branch
          %390 = sbr.rel (%p388) target = $region20
        $region19: #{tpu_custom_call.1} parent=11 // pred_region
          _
        $region20: #{tpu_custom_call.1} parent=11 // pred_fallthru
          _
        // Predicated region
        $region21: #{tpu_custom_call.1} parent=11 // pred_check
          %p391 = pneg %p203
        $region22: #{tpu_custom_call.1} parent=11 // pred_check_branch
          %393 = sbr.rel (%p391) target = $region24
        $region23: #{tpu_custom_call.1} parent=11 // pred_region
          _
        $region24: #{tpu_custom_call.1} parent=11 // pred_fallthru
          _
        // Predicated region
        $region25: #{tpu_custom_call.1} parent=11 // pred_check
          %p394 = pneg %p224
        $region26: #{tpu_custom_call.1} parent=11 // pred_check_branch
          %396 = sbr.rel (%p394) target = $region28
        $region27: #{tpu_custom_call.1} parent=11 // pred_region
          _
        $region28: #{tpu_custom_call.1} parent=11 // pred_fallthru
          _
        // Predicated region
        $region29: #{tpu_custom_call.1} parent=11 // pred_check
          %p397 = pneg %p245
        $region30: #{tpu_custom_call.1} parent=11 // pred_check_branch
          %399 = sbr.rel (%p397) target = $region32
        $region31: #{tpu_custom_call.1} parent=11 // pred_region
          %s401 = ssub.s32 256, 256
          %402 = vsyncadd [#allocation12], %s401
          %s403 = sshll.u32 [#allocation11], 4
          %s404 = int_to_ptr.vmem [resolvable:$true] %s403
          %409 = dma.hbm_to_vmem [thread:$0]  %s8, 256, %s404, [#allocation12], 64, 64, 4
        $region32: #{tpu_custom_call.1} parent=11 // pred_fallthru
          _
        // Predicated region
        $region33: #{tpu_custom_call.1} parent=11 // pred_check
          %p410 = pneg %p266
        $region34: #{tpu_custom_call.1} parent=11 // pred_check_branch
          %412 = sbr.rel (%p410) target = $region36
        $region35: #{tpu_custom_call.1} parent=11 // pred_region
          %s414 = ssub.s32 16, 16
          %415 = vsyncadd [#allocation12], %s414
          %s417 = sshll.u32 [#allocation13], 4
          %s418 = int_to_ptr.vmem [resolvable:$true] %s417
          %420 = dma.hbm_to_vmem [thread:$0]  %s9, 16, %s418, [#allocation12]
        $region36: #{tpu_custom_call.1} parent=11 // pred_fallthru
          _
        // Predicated region
        $region37: #{tpu_custom_call.1} parent=11 // pred_check
          %p421 = pneg %p287
        $region38: #{tpu_custom_call.1} parent=11 // pred_check_branch
          %423 = sbr.rel (%p421) target = $region40
        $region39: #{tpu_custom_call.1} parent=11 // pred_region
          _
        $region40: #{tpu_custom_call.1} parent=11 // pred_fallthru
          _
        // Predicated region
        $region41: #{tpu_custom_call.1} parent=11 // pred_check
          %p424 = pneg %p308
        $region42: #{tpu_custom_call.1} parent=11 // pred_check_branch
          %426 = sbr.rel (%p424) target = $region44
        $region43: #{tpu_custom_call.1} parent=11 // pred_region
          _
        $region44: #{tpu_custom_call.1} parent=11 // pred_fallthru
          _
      $region12: #{tpu_custom_call.1} parent=5 // pred_fallthru
        _
      %p427 = scmp.lt.s32.totalorder %s36, 2
      // Predicated region
      $region45: #{tpu_custom_call.1} parent=5 // pred_check
        %p428 = pneg %p427
      $region46: #{tpu_custom_call.1} parent=5 // pred_check_branch
        %430 = sbr.rel (%p428) target = $region48
      $region47: #{tpu_custom_call.1} parent=5 // pred_region
        // Predicated region
        $region49: #{tpu_custom_call.1} parent=47 // pred_check
          %p431 = pneg %p56
        $region50: #{tpu_custom_call.1} parent=47 // pred_check_branch
          %433 = sbr.rel (%p431) target = $region52
        $region51: #{tpu_custom_call.1} parent=47 // pred_region
          %s434 = sand.u32 %s46, 1
          %s435 = scalar_lea.sflag [#allocation3], %s434
          %s436 = sand.u32 %s46, 1
          %s437 = smul.addr %s436, 8
          %s438 = scalar_lea.vmem [#allocation2], %s437
          %s440 = ssub.s32 128, 128
          %441 = vsyncadd %s435, %s440
          %s442 = smul.addr %s36, 128
          %s443 = scalar_lea.hbm %s0, %s442
          %s445 = sshll.u32 %s438, 4
          %s446 = int_to_ptr.vmem [resolvable:$true] %s445
          %448 = dma.hbm_to_vmem [thread:$0]  %s443, 128, %s446, %s435
        $region52: #{tpu_custom_call.1} parent=47 // pred_fallthru
          _
        // Predicated region
        $region53: #{tpu_custom_call.1} parent=47 // pred_check
          %p449 = pneg %p82
        $region54: #{tpu_custom_call.1} parent=47 // pred_check_branch
          %451 = sbr.rel (%p449) target = $region56
        $region55: #{tpu_custom_call.1} parent=47 // pred_region
          %s452 = sand.u32 %s36, 1
          %s453 = scalar_lea.sflag [#allocation6], %s452
          %s454 = sand.u32 %s72, 1
          %s455 = smul.addr %s454, 8
          %s456 = scalar_lea.vmem [#allocation5], %s455
          %s458 = ssub.s32 128, 128
          %459 = vsyncadd %s453, %s458
          %s460 = smul.addr %s36, 128
          %s461 = scalar_lea.hbm %s1, %s460
          %s463 = sshll.u32 %s456, 4
          %s464 = int_to_ptr.vmem [resolvable:$true] %s463
          %466 = dma.hbm_to_vmem [thread:$0]  %s461, 128, %s464, %s453
        $region56: #{tpu_custom_call.1} parent=47 // pred_fallthru
          _
        // Predicated region
        $region57: #{tpu_custom_call.1} parent=47 // pred_check
          %p467 = pneg %p108
        $region58: #{tpu_custom_call.1} parent=47 // pred_check_branch
          %469 = sbr.rel (%p467) target = $region60
        $region59: #{tpu_custom_call.1} parent=47 // pred_region
          %s470 = sand.u32 %s36, 1
          %s471 = scalar_lea.sflag [#allocation6], %s470
          %s472 = sand.u32 %s98, 1
          %s473 = smul.addr %s472, 8
          %s474 = scalar_lea.vmem [#allocation7], %s473
          %s476 = ssub.s32 128, 128
          %477 = vsyncadd %s471, %s476
          %s478 = smul.addr %s36, 128
          %s479 = scalar_lea.hbm %s2, %s478
          %s481 = sshll.u32 %s474, 4
          %s482 = int_to_ptr.vmem [resolvable:$true] %s481
          %484 = dma.hbm_to_vmem [thread:$0]  %s479, 128, %s482, %s471
        $region60: #{tpu_custom_call.1} parent=47 // pred_fallthru
          _
        // Predicated region
        $region61: #{tpu_custom_call.1} parent=47 // pred_check
          %p485 = pneg %p134
        $region62: #{tpu_custom_call.1} parent=47 // pred_check_branch
          %487 = sbr.rel (%p485) target = $region64
        $region63: #{tpu_custom_call.1} parent=47 // pred_region
          %s488 = sand.u32 %s36, 1
          %s489 = scalar_lea.sflag [#allocation9], %s488
          %s490 = sand.u32 %s124, 1
          %s491 = smul.addr %s490, 32
          %s492 = scalar_lea.vmem [#allocation8], %s491
          %s494 = ssub.s32 512, 512
          %495 = vsyncadd %s489, %s494
          %s496 = smul.addr %s36, 4
          %s497 = smul.addr %s496, 128
          %s498 = scalar_lea.hbm %s3, %s497
          %s499 = sshll.u32 %s492, 4
          %s500 = int_to_ptr.vmem [resolvable:$true] %s499
          %505 = dma.hbm_to_vmem [thread:$0]  %s498, 512, %s500, %s489, 128, 128, 8
        $region64: #{tpu_custom_call.1} parent=47 // pred_fallthru
          _
      $region48: #{tpu_custom_call.1} parent=5 // pred_fallthru
        _
      %p506 = scmp.le.s32.totalorder 1, %s36
      %p507 = scmp.lt.s32.totalorder %s36, 3
      %p508 = pnand %p506, %p507
      %p509 = pneg %p508
      // Predicated region
      $region65: #{tpu_custom_call.1} parent=5 // pred_check
        _
      $region66: #{tpu_custom_call.1} parent=5 // pred_check_branch
        %511 = sbr.rel (%p508) target = $region68
      $region67: #{tpu_custom_call.1} parent=5 // pred_region
        %s512 = ssub.s32 %s36, 1
        %s513 = sand.u32 %s49, 1
        %s514 = scalar_lea.sflag [#allocation3], %s513
        %s515 = sand.u32 %s49, 1
        %s516 = smul.addr %s515, 8
        %s517 = scalar_lea.vmem [#allocation2], %s516
        // Predicated region
        $region69: #{tpu_custom_call.1} parent=67 // pred_check
          %p518 = pneg %p62
        $region70: #{tpu_custom_call.1} parent=67 // pred_check_branch
          %520 = sbr.rel (%p518) target = $region72
        $region71: #{tpu_custom_call.1} parent=67 // pred_region
          %521 = dma.done %s514, 128
        $region72: #{tpu_custom_call.1} parent=67 // pred_fallthru
          _
        %s522 = sand.u32 %s41, 1
        %s523 = scalar_lea.sflag [#allocation6], %s522
        %s524 = sand.u32 %s75, 1
        %s525 = smul.addr %s524, 8
        %s526 = scalar_lea.vmem [#allocation5], %s525
        // Predicated region
        $region73: #{tpu_custom_call.1} parent=67 // pred_check
          %p527 = pneg %p88
        $region74: #{tpu_custom_call.1} parent=67 // pred_check_branch
          %529 = sbr.rel (%p527) target = $region76
        $region75: #{tpu_custom_call.1} parent=67 // pred_region
          %530 = dma.done %s523, 128
        $region76: #{tpu_custom_call.1} parent=67 // pred_fallthru
          _
        %s531 = sand.u32 %s41, 1
        %s532 = scalar_lea.sflag [#allocation6], %s531
        %s533 = sand.u32 %s101, 1
        %s534 = smul.addr %s533, 8
        %s535 = scalar_lea.vmem [#allocation7], %s534
        // Predicated region
        $region77: #{tpu_custom_call.1} parent=67 // pred_check
          %p536 = pneg %p114
        $region78: #{tpu_custom_call.1} parent=67 // pred_check_branch
          %538 = sbr.rel (%p536) target = $region80
        $region79: #{tpu_custom_call.1} parent=67 // pred_region
          %539 = dma.done %s532, 128
        $region80: #{tpu_custom_call.1} parent=67 // pred_fallthru
          _
        %s540 = sand.u32 %s41, 1
        %s541 = scalar_lea.sflag [#allocation9], %s540
        %s542 = sand.u32 %s127, 1
        %s543 = smul.addr %s542, 32
        %s544 = scalar_lea.vmem [#allocation8], %s543
        // Predicated region
        $region81: #{tpu_custom_call.1} parent=67 // pred_check
          %p545 = pneg %p140
        $region82: #{tpu_custom_call.1} parent=67 // pred_check_branch
          %547 = sbr.rel (%p545) target = $region84
        $region83: #{tpu_custom_call.1} parent=67 // pred_region
          %548 = dma.done %s541, 512
        $region84: #{tpu_custom_call.1} parent=67 // pred_fallthru
          _
        // Predicated region
        $region85: #{tpu_custom_call.1} parent=67 // pred_check
          %p549 = pneg %p161
        $region86: #{tpu_custom_call.1} parent=67 // pred_check_branch
          %551 = sbr.rel (%p549) target = $region88
        $region87: #{tpu_custom_call.1} parent=67 // pred_region
          %552 = dma.done [#allocation9], 256
        $region88: #{tpu_custom_call.1} parent=67 // pred_fallthru
          _
        // Predicated region
        $region89: #{tpu_custom_call.1} parent=67 // pred_check
          %p553 = pneg %p245
        $region90: #{tpu_custom_call.1} parent=67 // pred_check_branch
          %555 = sbr.rel (%p553) target = $region92
        $region91: #{tpu_custom_call.1} parent=67 // pred_region
          %556 = dma.done [#allocation12], 256
        $region92: #{tpu_custom_call.1} parent=67 // pred_fallthru
          _
        // Predicated region
        $region93: #{tpu_custom_call.1} parent=67 // pred_check
          %p557 = pneg %p266
        $region94: #{tpu_custom_call.1} parent=67 // pred_check_branch
          %559 = sbr.rel (%p557) target = $region96
        $region95: #{tpu_custom_call.1} parent=67 // pred_region
          %560 = dma.done [#allocation12], 16
        $region96: #{tpu_custom_call.1} parent=67 // pred_fallthru
          _
        %s561 = sand.u32 %s49, 1
        %s562 = scalar_lea.sflag [#allocation3], %s561
        %s563 = sand.u32 %s49, 1
        %s564 = smul.addr %s563, 8
        %s565 = scalar_lea.vmem [#allocation2], %s564
        %p566 = pneg %p62
        %p567 = pneg %p59
        %s568 = sand.u32 %s41, 1
        %s569 = scalar_lea.sflag [#allocation6], %s568
        %s570 = sand.u32 %s75, 1
        %s571 = smul.addr %s570, 8
        %s572 = scalar_lea.vmem [#allocation5], %s571
        %p573 = pneg %p88
        %p574 = pneg %p85
        %s575 = sand.u32 %s41, 1
        %s576 = scalar_lea.sflag [#allocation6], %s575
        %s577 = sand.u32 %s101, 1
        %s578 = smul.addr %s577, 8
        %s579 = scalar_lea.vmem [#allocation7], %s578
        %p580 = pneg %p114
        %p581 = pneg %p111
        %s582 = sand.u32 %s41, 1
        %s583 = scalar_lea.sflag [#allocation9], %s582
        %s584 = sand.u32 %s127, 1
        %s585 = smul.addr %s584, 32
        %s586 = scalar_lea.vmem [#allocation8], %s585
        %p587 = pneg %p140
        %p588 = pneg %p137
        %p589 = pneg %p161
        %p590 = pneg %p158
        %p591 = pneg %p182
        %p592 = pneg %p179
        %p593 = pneg %p203
        %p594 = pneg %p200
        %p595 = pneg %p224
        %p596 = pneg %p221
        %p597 = pneg %p245
        %p598 = pneg %p242
        %p599 = pneg %p266
        %p600 = pneg %p263
        %p601 = pneg %p287
        %p602 = pneg %p284
        %p603 = pneg %p308
        %p604 = pneg %p305
        %p605 = pneg %p334
        %p606 = pneg %p331
        %s607 = sand.u32 %s321, 1
        %s608 = scalar_lea.sflag [#allocation4], %s607
        %s609 = sand.u32 %s321, 1
        %s610 = smul.addr %s609, 8
        %s611 = scalar_lea.vmem [#allocation14], %s610
        %p612 = pneg %p360
        %p613 = pneg %p357
        %s614 = sand.u32 %s347, 1
        %s615 = scalar_lea.sflag [#allocation16], %s614
        %s616 = sand.u32 %s347, 1
        %s617 = smul.addr %s616, 32
        %s618 = scalar_lea.vmem [#allocation15], %s617
        %v620 = vld [vmem:[%s517] sm:$0xff]
        %v621 = vpack.c.bf16 %v620, %v620
        %v622 = vld [vmem:[#allocation10] sm:$0xf]
        %v623 = vld [vmem:[#allocation10 + $0x4] sm:$0xf]
        %v624 = vld [vmem:[#allocation10 + $0x8] sm:$0xf]
        %v625 = vld [vmem:[#allocation10 + $0xc] sm:$0xf]
        %v626 = vld [vmem:[%s5] sm:$0x1]
        %v628 = vlaneseq
        %v629 = vshrl.u32 %v628, 7
        %v630 = vsub.s32 0, %v629
        %v631 = vrot.slane %v626, %v630
        %v637 = vunpack.c.l.b16 %v622
        %v638 = vunpack.c.l.b16 %v623
        %v639 = vunpack.c.l.b16 %v624
        %v640 = vunpack.c.l.b16 %v625
        %v641 = vpack.c.b16 %v638, %v637
        %v642 = vpack.c.b16 %v640, %v639
        %vm645 = vcmask 261120
        %v647 = vsel %vm645, %v621, 0
        %649 = vmatprep.subr.bf16.mxu0 0
        %650 = vmatpush1.bf16.msra.mxu0 %v641
        %651 = vmatprep.subr.bf16.mxu0 0
        %652 = vmatpush1.bf16.msra.mxu0 %v642
        %653 = vmatprep.subr.bf16.mxu0 0
        %654 = vmatpush1.bf16.msra.mxu0 0
        %655 = vmatprep.subr.bf16.mxu0 0
        %656 = vmatpush1.bf16.msra.mxu0 0
        %657 = vmatprep.subr.bf16.mxu0 0
        %658 = vmatpush1.bf16.msra.mxu0 0
        %659 = vmatprep.subr.bf16.mxu0 0
        %660 = vmatpush1.bf16.msra.mxu0 0
        %661 = vmatprep.subr.bf16.mxu0 0
        %662 = vmatpush1.bf16.msra.mxu0 0
        %663 = vmatprep.subr.bf16.mxu0 0
        %664 = vmatpush1.bf16.msra.mxu0 0
        %665 = vmatprep.subr.bf16.mxu0 0
        %666 = vmatpush1.bf16.msra.mxu0 0
        %667 = vmatprep.subr.bf16.mxu0 0
        %668 = vmatpush1.bf16.msra.mxu0 0
        %669 = vmatprep.subr.bf16.mxu0 0
        %670 = vmatpush1.bf16.msra.mxu0 0
        %671 = vmatprep.subr.bf16.mxu0 0
        %672 = vmatpush1.bf16.msra.mxu0 0
        %673 = vmatprep.subr.bf16.mxu0 0
        %674 = vmatpush1.bf16.msra.mxu0 0
        %675 = vmatprep.subr.bf16.mxu0 0
        %676 = vmatpush1.bf16.msra.mxu0 0
        %677 = vmatprep.subr.bf16.mxu0 0
        %678 = vmatpush1.bf16.msra.mxu0 0
        %679 = vmatprep.subr.bf16.mxu0 0
        %680 = vmatpush1.bf16.msra.mxu0 0
        %681 = vmatprep.mubr.bf16.mxu0 0
        %682 = vmatmul.mubr.bf16.gmra.mrb[0].mxu0 %v647
        %v683 = vpop.f32.mrb[0].mxu0
        %v684 = vadd.f32 %v631, %v683
        %v685 = vpop.f32.mrb[0].mxu0
        %v686 = vpop.f32.mrb[0].mxu0
        %v687 = vpop.f32.mrb[0].mxu0
        %688 = vdwg.mxu0
        %v689 = vld [vmem:[%s526] sm:$0xff]
        %v690 = vpack.c.bf16 %v689, %v689
        %v691 = vld [vmem:[%s6] sm:$0xf]
        %v692 = vld [vmem:[%s6 + $0x4] sm:$0xf]
        %v693 = vld [vmem:[%s6 + $0x8] sm:$0xf]
        %v694 = vld [vmem:[%s6 + $0xc] sm:$0xf]
        %v695 = vld [vmem:[%s7] sm:$0x1]
        %v697 = vlaneseq
        %v698 = vshrl.u32 %v697, 7
        %v699 = vsub.s32 0, %v698
        %v700 = vrot.slane %v695, %v699
        %v706 = vunpack.c.l.b16 %v691
        %v707 = vunpack.c.l.b16 %v692
        %v708 = vunpack.c.l.b16 %v693
        %v709 = vunpack.c.l.b16 %v694
        %v710 = vpack.c.b16 %v707, %v706
        %v711 = vpack.c.b16 %v709, %v708
        %v715 = vsel %vm645, %v690, 0
        %717 = vmatprep.subr.bf16.mxu0 0
        %718 = vmatpush1.bf16.msra.mxu0 %v710
        %719 = vmatprep.subr.bf16.mxu0 0
        %720 = vmatpush1.bf16.msra.mxu0 %v711
        %721 = vmatprep.subr.bf16.mxu0 0
        %722 = vmatpush1.bf16.msra.mxu0 0
        %723 = vmatprep.subr.bf16.mxu0 0
        %724 = vmatpush1.bf16.msra.mxu0 0
        %725 = vmatprep.subr.bf16.mxu0 0
        %726 = vmatpush1.bf16.msra.mxu0 0
        %727 = vmatprep.subr.bf16.mxu0 0
        %728 = vmatpush1.bf16.msra.mxu0 0
        %729 = vmatprep.subr.bf16.mxu0 0
        %730 = vmatpush1.bf16.msra.mxu0 0
        %731 = vmatprep.subr.bf16.mxu0 0
        %732 = vmatpush1.bf16.msra.mxu0 0
        %733 = vmatprep.subr.bf16.mxu0 0
        %734 = vmatpush1.bf16.msra.mxu0 0
        %735 = vmatprep.subr.bf16.mxu0 0
        %736 = vmatpush1.bf16.msra.mxu0 0
        %737 = vmatprep.subr.bf16.mxu0 0
        %738 = vmatpush1.bf16.msra.mxu0 0
        %739 = vmatprep.subr.bf16.mxu0 0
        %740 = vmatpush1.bf16.msra.mxu0 0
        %741 = vmatprep.subr.bf16.mxu0 0
        %742 = vmatpush1.bf16.msra.mxu0 0
        %743 = vmatprep.subr.bf16.mxu0 0
        %744 = vmatpush1.bf16.msra.mxu0 0
        %745 = vmatprep.subr.bf16.mxu0 0
        %746 = vmatpush1.bf16.msra.mxu0 0
        %747 = vmatprep.subr.bf16.mxu0 0
        %748 = vmatpush1.bf16.msra.mxu0 0
        %749 = vmatprep.mubr.bf16.mxu0 0
        %750 = vmatmul.mubr.bf16.gmra.mrb[0].mxu0 %v715
        %v751 = vpop.f32.mrb[0].mxu0
        %v752 = vadd.f32 %v700, %v751
        %v753 = vpop.f32.mrb[0].mxu0
        %v754 = vpop.f32.mrb[0].mxu0
        %v755 = vpop.f32.mrb[0].mxu0
        %756 = vdwg.mxu0
        %v757 = vld [vmem:[%s535] sm:$0xff]
        %v758 = vpack.c.bf16 %v757, %v757
        %v759 = vld [vmem:[#allocation11] sm:$0xf]
        %v760 = vld [vmem:[#allocation11 + $0x4] sm:$0xf]
        %v761 = vld [vmem:[#allocation11 + $0x8] sm:$0xf]
        %v762 = vld [vmem:[#allocation11 + $0xc] sm:$0xf]
        %v763 = vld [vmem:[#allocation13] sm:$0x1]
        %v765 = vlaneseq
        %v766 = vshrl.u32 %v765, 7
        %v767 = vsub.s32 0, %v766
        %v768 = vrot.slane %v763, %v767
        %v774 = vunpack.c.l.b16 %v759
        %v775 = vunpack.c.l.b16 %v760
        %v776 = vunpack.c.l.b16 %v761
        %v777 = vunpack.c.l.b16 %v762
        %v778 = vpack.c.b16 %v775, %v774
        %v779 = vpack.c.b16 %v777, %v776
        %v783 = vsel %vm645, %v758, 0
        %785 = vmatprep.subr.bf16.mxu0 0
        %786 = vmatpush1.bf16.msra.mxu0 %v778
        %787 = vmatprep.subr.bf16.mxu0 0
        %788 = vmatpush1.bf16.msra.mxu0 %v779
        %789 = vmatprep.subr.bf16.mxu0 0
        %790 = vmatpush1.bf16.msra.mxu0 0
        %791 = vmatprep.subr.bf16.mxu0 0
        %792 = vmatpush1.bf16.msra.mxu0 0
        %793 = vmatprep.subr.bf16.mxu0 0
        %794 = vmatpush1.bf16.msra.mxu0 0
        %795 = vmatprep.subr.bf16.mxu0 0
        %796 = vmatpush1.bf16.msra.mxu0 0
        %797 = vmatprep.subr.bf16.mxu0 0
        %798 = vmatpush1.bf16.msra.mxu0 0
        %799 = vmatprep.subr.bf16.mxu0 0
        %800 = vmatpush1.bf16.msra.mxu0 0
        %801 = vmatprep.subr.bf16.mxu0 0
        %802 = vmatpush1.bf16.msra.mxu0 0
        %803 = vmatprep.subr.bf16.mxu0 0
        %804 = vmatpush1.bf16.msra.mxu0 0
        %805 = vmatprep.subr.bf16.mxu0 0
        %806 = vmatpush1.bf16.msra.mxu0 0
        %807 = vmatprep.subr.bf16.mxu0 0
        %808 = vmatpush1.bf16.msra.mxu0 0
        %809 = vmatprep.subr.bf16.mxu0 0
        %810 = vmatpush1.bf16.msra.mxu0 0
        %811 = vmatprep.subr.bf16.mxu0 0
        %812 = vmatpush1.bf16.msra.mxu0 0
        %813 = vmatprep.subr.bf16.mxu0 0
        %814 = vmatpush1.bf16.msra.mxu0 0
        %815 = vmatprep.subr.bf16.mxu0 0
        %816 = vmatpush1.bf16.msra.mxu0 0
        %817 = vmatprep.mubr.bf16.mxu0 0
        %818 = vmatmul.mubr.bf16.gmra.mrb[0].mxu0 %v783
        %v819 = vpop.f32.mrb[0].mxu0
        %v820 = vadd.f32 %v768, %v819
        %v821 = vpop.f32.mrb[0].mxu0
        %v822 = vpop.f32.mrb[0].mxu0
        %v823 = vpop.f32.mrb[0].mxu0
        %824 = vdwg.mxu0
        %v825 = vmul.f32 %v684, 0.35355338
        %827 = vrot.lane.b32.xlu0 %v825, 120
        %v828 = vpop.permute.xlu0 %827
        %830 = vrot.lane.b32.xlu0 %v825, 112
        %v831 = vpop.permute.xlu0 %830
        %833 = vrot.lane.b32.xlu0 %v825, 104
        %v834 = vpop.permute.xlu0 %833
        %v836 = vpack.c.bf16 %v825, %v825
        %v837 = vpack.c.bf16 %v828, %v828
        %v838 = vpack.c.bf16 %v831, %v831
        %v839 = vpack.c.bf16 %v834, %v834
        %841 = vrot.lane.b32.xlu0 %v752, 120
        %v842 = vpop.permute.xlu0 %841
        %844 = vrot.lane.b32.xlu0 %v752, 112
        %v845 = vpop.permute.xlu0 %844
        %847 = vrot.lane.b32.xlu0 %v752, 104
        %v848 = vpop.permute.xlu0 %847
        %v850 = vpack.c.bf16 %v752, %v752
        %v851 = vpack.c.bf16 %v842, %v842
        %v852 = vpack.c.bf16 %v845, %v845
        %v853 = vpack.c.bf16 %v848, %v848
        %855 = vrot.lane.b32.xlu0 %v820, 120
        %v856 = vpop.permute.xlu0 %855
        %858 = vrot.lane.b32.xlu0 %v820, 112
        %v859 = vpop.permute.xlu0 %858
        %861 = vrot.lane.b32.xlu0 %v820, 104
        %v862 = vpop.permute.xlu0 %861
        %v864 = vpack.c.bf16 %v820, %v820
        %v865 = vpack.c.bf16 %v856, %v856
        %v866 = vpack.c.bf16 %v859, %v859
        %v867 = vpack.c.bf16 %v862, %v862
        %vm868 = vcmask 64512
        %v870 = vsel %vm868, %v836, 0
        %v873 = vsel %vm868, %v850, 0
        %875 = vmatprep.subr.bf16.mxu0 0
        %876 = vmatpush1.bf16.xpose.msra.mxu0 %v873
        %877 = vmatprep.subr.bf16.mxu0 0
        %878 = vmatpush1.bf16.xpose.msra.mxu0 0
        %879 = vmatprep.subr.bf16.mxu0 0
        %880 = vmatpush1.bf16.xpose.msra.mxu0 0
        %881 = vmatprep.subr.bf16.mxu0 0
        %882 = vmatpush1.bf16.xpose.msra.mxu0 0
        %883 = vmatprep.subr.bf16.mxu0 0
        %884 = vmatpush1.bf16.xpose.msra.mxu0 0
        %885 = vmatprep.subr.bf16.mxu0 0
        %886 = vmatpush1.bf16.xpose.msra.mxu0 0
        %887 = vmatprep.subr.bf16.mxu0 0
        %888 = vmatpush1.bf16.xpose.msra.mxu0 0
        %889 = vmatprep.subr.bf16.mxu0 0
        %890 = vmatpush1.bf16.xpose.msra.mxu0 0
        %891 = vmatprep.subr.bf16.mxu0 0
        %892 = vmatpush1.bf16.xpose.msra.mxu0 0
        %893 = vmatprep.subr.bf16.mxu0 0
        %894 = vmatpush1.bf16.xpose.msra.mxu0 0
        %895 = vmatprep.subr.bf16.mxu0 0
        %896 = vmatpush1.bf16.xpose.msra.mxu0 0
        %897 = vmatprep.subr.bf16.mxu0 0
        %898 = vmatpush1.bf16.xpose.msra.mxu0 0
        %899 = vmatprep.subr.bf16.mxu0 0
        %900 = vmatpush1.bf16.xpose.msra.mxu0 0
        %901 = vmatprep.subr.bf16.mxu0 0
        %902 = vmatpush1.bf16.xpose.msra.mxu0 0
        %903 = vmatprep.subr.bf16.mxu0 0
        %904 = vmatpush1.bf16.xpose.msra.mxu0 0
        %905 = vmatprep.subr.bf16.mxu0 0
        %906 = vmatpush1.bf16.xpose.msra.mxu0 0
        %907 = vmatprep.mubr.bf16.mxu0 0
        %908 = vmatmul.mubr.bf16.gmra.mrb[0].mxu0 %v870
        %v909 = vpop.f32.mrb[0].mxu0
        %v910 = vadd.f32 0.0, %v909
        %v911 = vpop.f32.mrb[0].mxu0
        %v912 = vpop.f32.mrb[0].mxu0
        %v913 = vpop.f32.mrb[0].mxu0
        %914 = vdwg.mxu0
        %v916 = vsel %vm868, %v837, 0
        %v919 = vsel %vm868, %v851, 0
        %921 = vmatprep.subr.bf16.mxu0 0
        %922 = vmatpush1.bf16.xpose.msra.mxu0 %v919
        %923 = vmatprep.subr.bf16.mxu0 0
        %924 = vmatpush1.bf16.xpose.msra.mxu0 0
        %925 = vmatprep.subr.bf16.mxu0 0
        %926 = vmatpush1.bf16.xpose.msra.mxu0 0
        %927 = vmatprep.subr.bf16.mxu0 0
        %928 = vmatpush1.bf16.xpose.msra.mxu0 0
        %929 = vmatprep.subr.bf16.mxu0 0
        %930 = vmatpush1.bf16.xpose.msra.mxu0 0
        %931 = vmatprep.subr.bf16.mxu0 0
        %932 = vmatpush1.bf16.xpose.msra.mxu0 0
        %933 = vmatprep.subr.bf16.mxu0 0
        %934 = vmatpush1.bf16.xpose.msra.mxu0 0
        %935 = vmatprep.subr.bf16.mxu0 0
        %936 = vmatpush1.bf16.xpose.msra.mxu0 0
        %937 = vmatprep.subr.bf16.mxu0 0
        %938 = vmatpush1.bf16.xpose.msra.mxu0 0
        %939 = vmatprep.subr.bf16.mxu0 0
        %940 = vmatpush1.bf16.xpose.msra.mxu0 0
        %941 = vmatprep.subr.bf16.mxu0 0
        %942 = vmatpush1.bf16.xpose.msra.mxu0 0
        %943 = vmatprep.subr.bf16.mxu0 0
        %944 = vmatpush1.bf16.xpose.msra.mxu0 0
        %945 = vmatprep.subr.bf16.mxu0 0
        %946 = vmatpush1.bf16.xpose.msra.mxu0 0
        %947 = vmatprep.subr.bf16.mxu0 0
        %948 = vmatpush1.bf16.xpose.msra.mxu0 0
        %949 = vmatprep.subr.bf16.mxu0 0
        %950 = vmatpush1.bf16.xpose.msra.mxu0 0
        %951 = vmatprep.subr.bf16.mxu0 0
        %952 = vmatpush1.bf16.xpose.msra.mxu0 0
        %953 = vmatprep.mubr.bf16.mxu0 0
        %954 = vmatmul.mubr.bf16.gmra.mrb[0].mxu0 %v916
        %v955 = vpop.f32.mrb[0].mxu0
        %v956 = vadd.f32 0.0, %v955
        %v957 = vpop.f32.mrb[0].mxu0
        %v958 = vpop.f32.mrb[0].mxu0
        %v959 = vpop.f32.mrb[0].mxu0
        %960 = vdwg.mxu0
        %v962 = vsel %vm868, %v838, 0
        %v965 = vsel %vm868, %v852, 0
        %967 = vmatprep.subr.bf16.mxu0 0
        %968 = vmatpush1.bf16.xpose.msra.mxu0 %v965
        %969 = vmatprep.subr.bf16.mxu0 0
        %970 = vmatpush1.bf16.xpose.msra.mxu0 0
        %971 = vmatprep.subr.bf16.mxu0 0
        %972 = vmatpush1.bf16.xpose.msra.mxu0 0
        %973 = vmatprep.subr.bf16.mxu0 0
        %974 = vmatpush1.bf16.xpose.msra.mxu0 0
        %975 = vmatprep.subr.bf16.mxu0 0
        %976 = vmatpush1.bf16.xpose.msra.mxu0 0
        %977 = vmatprep.subr.bf16.mxu0 0
        %978 = vmatpush1.bf16.xpose.msra.mxu0 0
        %979 = vmatprep.subr.bf16.mxu0 0
        %980 = vmatpush1.bf16.xpose.msra.mxu0 0
        %981 = vmatprep.subr.bf16.mxu0 0
        %982 = vmatpush1.bf16.xpose.msra.mxu0 0
        %983 = vmatprep.subr.bf16.mxu0 0
        %984 = vmatpush1.bf16.xpose.msra.mxu0 0
        %985 = vmatprep.subr.bf16.mxu0 0
        %986 = vmatpush1.bf16.xpose.msra.mxu0 0
        %987 = vmatprep.subr.bf16.mxu0 0
        %988 = vmatpush1.bf16.xpose.msra.mxu0 0
        %989 = vmatprep.subr.bf16.mxu0 0
        %990 = vmatpush1.bf16.xpose.msra.mxu0 0
        %991 = vmatprep.subr.bf16.mxu0 0
        %992 = vmatpush1.bf16.xpose.msra.mxu0 0
        %993 = vmatprep.subr.bf16.mxu0 0
        %994 = vmatpush1.bf16.xpose.msra.mxu0 0
        %995 = vmatprep.subr.bf16.mxu0 0
        %996 = vmatpush1.bf16.xpose.msra.mxu0 0
        %997 = vmatprep.subr.bf16.mxu0 0
        %998 = vmatpush1.bf16.xpose.msra.mxu0 0
        %999 = vmatprep.mubr.bf16.mxu0 0
        %1000 = vmatmul.mubr.bf16.gmra.mrb[0].mxu0 %v962
        %v1001 = vpop.f32.mrb[0].mxu0
        %v1002 = vadd.f32 0.0, %v1001
        %v1003 = vpop.f32.mrb[0].mxu0
        %v1004 = vpop.f32.mrb[0].mxu0
        %v1005 = vpop.f32.mrb[0].mxu0
        %1006 = vdwg.mxu0
        %v1008 = vsel %vm868, %v839, 0
        %v1011 = vsel %vm868, %v853, 0
        %1013 = vmatprep.subr.bf16.mxu0 0
        %1014 = vmatpush1.bf16.xpose.msra.mxu0 %v1011
        %1015 = vmatprep.subr.bf16.mxu0 0
        %1016 = vmatpush1.bf16.xpose.msra.mxu0 0
        %1017 = vmatprep.subr.bf16.mxu0 0
        %1018 = vmatpush1.bf16.xpose.msra.mxu0 0
        %1019 = vmatprep.subr.bf16.mxu0 0
        %1020 = vmatpush1.bf16.xpose.msra.mxu0 0
        %1021 = vmatprep.subr.bf16.mxu0 0
        %1022 = vmatpush1.bf16.xpose.msra.mxu0 0
        %1023 = vmatprep.subr.bf16.mxu0 0
        %1024 = vmatpush1.bf16.xpose.msra.mxu0 0
        %1025 = vmatprep.subr.bf16.mxu0 0
        %1026 = vmatpush1.bf16.xpose.msra.mxu0 0
        %1027 = vmatprep.subr.bf16.mxu0 0
        %1028 = vmatpush1.bf16.xpose.msra.mxu0 0
        %1029 = vmatprep.subr.bf16.mxu0 0
        %1030 = vmatpush1.bf16.xpose.msra.mxu0 0
        %1031 = vmatprep.subr.bf16.mxu0 0
        %1032 = vmatpush1.bf16.xpose.msra.mxu0 0
        %1033 = vmatprep.subr.bf16.mxu0 0
        %1034 = vmatpush1.bf16.xpose.msra.mxu0 0
        %1035 = vmatprep.subr.bf16.mxu0 0
        %1036 = vmatpush1.bf16.xpose.msra.mxu0 0
        %1037 = vmatprep.subr.bf16.mxu0 0
        %1038 = vmatpush1.bf16.xpose.msra.mxu0 0
        %1039 = vmatprep.subr.bf16.mxu0 0
        %1040 = vmatpush1.bf16.xpose.msra.mxu0 0
        %1041 = vmatprep.subr.bf16.mxu0 0
        %1042 = vmatpush1.bf16.xpose.msra.mxu0 0
        %1043 = vmatprep.subr.bf16.mxu0 0
        %1044 = vmatpush1.bf16.xpose.msra.mxu0 0
        %1045 = vmatprep.mubr.bf16.mxu0 0
        %1046 = vmatmul.mubr.bf16.gmra.mrb[0].mxu0 %v1008
        %v1047 = vpop.f32.mrb[0].mxu0
        %v1048 = vadd.f32 0.0, %v1047
        %v1049 = vpop.f32.mrb[0].mxu0
        %v1050 = vpop.f32.mrb[0].mxu0
        %v1051 = vpop.f32.mrb[0].mxu0
        %1052 = vdwg.mxu0
        %v1053 = vld [vmem:[%s544] sm:$0xff]
        %v1054 = vld [vmem:[%s544 + $0x8] sm:$0xff]
        %v1055 = vld [vmem:[%s544 + $0x10] sm:$0xff]
        %v1056 = vld [vmem:[%s544 + $0x18] sm:$0xff]
        %v1057 = vmax.f32 %v1053, 1e-06
        %v1058 = vmax.f32 %v1054, 1e-06
        %v1059 = vmax.f32 %v1055, 1e-06
        %v1060 = vmax.f32 %v1056, 1e-06
        %v1061 = vlog2.pop %v1057
        %v1062 = vmul.f32 %v1061, 0.6931472
        %v1063 = vlog2.pop %v1058
        %v1064 = vmul.f32 %v1063, 0.6931472
        %v1065 = vlog2.pop %v1059
        %v1066 = vmul.f32 %v1065, 0.6931472
        %v1067 = vlog2.pop %v1060
        %v1068 = vmul.f32 %v1067, 0.6931472
        %v1069 = vadd.f32 %v1062, %v910
        %v1070 = vadd.f32 %v1064, %v956
        %v1071 = vadd.f32 %v1066, %v1002
        %v1072 = vadd.f32 %v1068, %v1048
        %v1073 = vsel %vm868, %v1069, -inf
        %1074 = vmax.xlane.f32.xlu0 %v1073
        %v1075 = vpop.xlane.xlu0 %1074
        %v1076 = vsel %vm868, %v1070, -inf
        %1077 = vmax.xlane.f32.xlu0 %v1076
        %v1078 = vpop.xlane.xlu0 %1077
        %v1079 = vsel %vm868, %v1071, -inf
        %1080 = vmax.xlane.f32.xlu0 %v1079
        %v1081 = vpop.xlane.xlu0 %1080
        %v1082 = vsel %vm868, %v1072, -inf
        %1083 = vmax.xlane.f32.xlu0 %v1082
        %v1084 = vpop.xlane.xlu0 %1083
        %v1085 = vsub.f32 %v1069, %v1075
        %v1086 = vsub.f32 %v1070, %v1078
        %v1087 = vsub.f32 %v1071, %v1081
        %v1088 = vsub.f32 %v1072, %v1084
        %v1089 = vmul.f32 %v1085, 1.442695
        %v1090 = vpow.pop %v1089
        %v1091 = vmul.f32 %v1086, 1.442695
        %v1092 = vpow.pop %v1091
        %v1093 = vmul.f32 %v1087, 1.442695
        %v1094 = vpow.pop %v1093
        %v1095 = vmul.f32 %v1088, 1.442695
        %v1096 = vpow.pop %v1095
        %v1097 = vsel %vm868, %v1090, 0.0
        %1098 = vadd.xlane.f32.xlu0 %v1097
        %v1099 = vpop.xlane.xlu0 %1098
        %v1100 = vsel %vm868, %v1092, 0.0
        %1101 = vadd.xlane.f32.xlu0 %v1100
        %v1102 = vpop.xlane.xlu0 %1101
        %v1103 = vsel %vm868, %v1094, 0.0
        %1104 = vadd.xlane.f32.xlu0 %v1103
        %v1105 = vpop.xlane.xlu0 %1104
        %v1106 = vsel %vm868, %v1096, 0.0
        %1107 = vadd.xlane.f32.xlu0 %v1106
        %v1108 = vpop.xlane.xlu0 %1107
        %v1109 = vrcp.pop %v1099
        %v1110 = vmul.f32 %v1090, %v1109
        %v1111 = vrcp.pop %v1102
        %v1112 = vmul.f32 %v1092, %v1111
        %v1113 = vrcp.pop %v1105
        %v1114 = vmul.f32 %v1094, %v1113
        %v1115 = vrcp.pop %v1108
        %v1116 = vmul.f32 %v1096, %v1115
        %1117 = vst.msk [vmem:[%s618] sm:$0xff] %vm868, %v1110
        %1118 = vst.msk [vmem:[%s618 + $0x8] sm:$0xff] %vm868, %v1112
        %1119 = vst.msk [vmem:[%s618 + $0x10] sm:$0xff] %vm868, %v1114
        %1120 = vst.msk [vmem:[%s618 + $0x18] sm:$0xff] %vm868, %v1116
        %v1121 = vpack.c.bf16 %v1110, %v1110
        %v1122 = vpack.c.bf16 %v1112, %v1112
        %v1123 = vpack.c.bf16 %v1114, %v1114
        %v1124 = vpack.c.bf16 %v1116, %v1116
        %v1126 = vsel %vm868, %v1121, 0
        %vm1128 = vcmask 1043456
        %v1130 = vsel %vm1128, %v864, 0
        %1132 = vmatprep.subr.bf16.mxu0 0
        %1133 = vmatpush1.bf16.msra.mxu0 %v1130
        %1134 = vmatprep.subr.bf16.mxu0 0
        %1135 = vmatpush1.bf16.msra.mxu0 0
        %1136 = vmatprep.subr.bf16.mxu0 0
        %1137 = vmatpush1.bf16.msra.mxu0 0
        %1138 = vmatprep.subr.bf16.mxu0 0
        %1139 = vmatpush1.bf16.msra.mxu0 0
        %1140 = vmatprep.subr.bf16.mxu0 0
        %1141 = vmatpush1.bf16.msra.mxu0 0
        %1142 = vmatprep.subr.bf16.mxu0 0
        %1143 = vmatpush1.bf16.msra.mxu0 0
        %1144 = vmatprep.subr.bf16.mxu0 0
        %1145 = vmatpush1.bf16.msra.mxu0 0
        %1146 = vmatprep.subr.bf16.mxu0 0
        %1147 = vmatpush1.bf16.msra.mxu0 0
        %1148 = vmatprep.subr.bf16.mxu0 0
        %1149 = vmatpush1.bf16.msra.mxu0 0
        %1150 = vmatprep.subr.bf16.mxu0 0
        %1151 = vmatpush1.bf16.msra.mxu0 0
        %1152 = vmatprep.subr.bf16.mxu0 0
        %1153 = vmatpush1.bf16.msra.mxu0 0
        %1154 = vmatprep.subr.bf16.mxu0 0
        %1155 = vmatpush1.bf16.msra.mxu0 0
        %1156 = vmatprep.subr.bf16.mxu0 0
        %1157 = vmatpush1.bf16.msra.mxu0 0
        %1158 = vmatprep.subr.bf16.mxu0 0
        %1159 = vmatpush1.bf16.msra.mxu0 0
        %1160 = vmatprep.subr.bf16.mxu0 0
        %1161 = vmatpush1.bf16.msra.mxu0 0
        %1162 = vmatprep.subr.bf16.mxu0 0
        %1163 = vmatpush1.bf16.msra.mxu0 0
        %1164 = vmatprep.mubr.bf16.mxu0 0
        %1165 = vmatmul.mubr.bf16.gmra.mrb[0].mxu0 %v1126
        %v1166 = vpop.f32.mrb[0].mxu0
        %v1167 = vadd.f32 0.0, %v1166
        %v1168 = vpop.f32.mrb[0].mxu0
        %v1169 = vpop.f32.mrb[0].mxu0
        %v1170 = vpop.f32.mrb[0].mxu0
        %1171 = vdwg.mxu0
        %v1173 = vsel %vm868, %v1122, 0
        %v1176 = vsel %vm1128, %v865, 0
        %1178 = vmatprep.subr.bf16.mxu0 0
        %1179 = vmatpush1.bf16.msra.mxu0 %v1176
        %1180 = vmatprep.subr.bf16.mxu0 0
        %1181 = vmatpush1.bf16.msra.mxu0 0
        %1182 = vmatprep.subr.bf16.mxu0 0
        %1183 = vmatpush1.bf16.msra.mxu0 0
        %1184 = vmatprep.subr.bf16.mxu0 0
        %1185 = vmatpush1.bf16.msra.mxu0 0
        %1186 = vmatprep.subr.bf16.mxu0 0
        %1187 = vmatpush1.bf16.msra.mxu0 0
        %1188 = vmatprep.subr.bf16.mxu0 0
        %1189 = vmatpush1.bf16.msra.mxu0 0
        %1190 = vmatprep.subr.bf16.mxu0 0
        %1191 = vmatpush1.bf16.msra.mxu0 0
        %1192 = vmatprep.subr.bf16.mxu0 0
        %1193 = vmatpush1.bf16.msra.mxu0 0
        %1194 = vmatprep.subr.bf16.mxu0 0
        %1195 = vmatpush1.bf16.msra.mxu0 0
        %1196 = vmatprep.subr.bf16.mxu0 0
        %1197 = vmatpush1.bf16.msra.mxu0 0
        %1198 = vmatprep.subr.bf16.mxu0 0
        %1199 = vmatpush1.bf16.msra.mxu0 0
        %1200 = vmatprep.subr.bf16.mxu0 0
        %1201 = vmatpush1.bf16.msra.mxu0 0
        %1202 = vmatprep.subr.bf16.mxu0 0
        %1203 = vmatpush1.bf16.msra.mxu0 0
        %1204 = vmatprep.subr.bf16.mxu0 0
        %1205 = vmatpush1.bf16.msra.mxu0 0
        %1206 = vmatprep.subr.bf16.mxu0 0
        %1207 = vmatpush1.bf16.msra.mxu0 0
        %1208 = vmatprep.subr.bf16.mxu0 0
        %1209 = vmatpush1.bf16.msra.mxu0 0
        %1210 = vmatprep.mubr.bf16.mxu0 0
        %1211 = vmatmul.mubr.bf16.gmra.mrb[0].mxu0 %v1173
        %v1212 = vpop.f32.mrb[0].mxu0
        %v1213 = vadd.f32 0.0, %v1212
        %v1214 = vpop.f32.mrb[0].mxu0
        %v1215 = vpop.f32.mrb[0].mxu0
        %v1216 = vpop.f32.mrb[0].mxu0
        %1217 = vdwg.mxu0
        %v1219 = vsel %vm868, %v1123, 0
        %v1222 = vsel %vm1128, %v866, 0
        %1224 = vmatprep.subr.bf16.mxu0 0
        %1225 = vmatpush1.bf16.msra.mxu0 %v1222
        %1226 = vmatprep.subr.bf16.mxu0 0
        %1227 = vmatpush1.bf16.msra.mxu0 0
        %1228 = vmatprep.subr.bf16.mxu0 0
        %1229 = vmatpush1.bf16.msra.mxu0 0
        %1230 = vmatprep.subr.bf16.mxu0 0
        %1231 = vmatpush1.bf16.msra.mxu0 0
        %1232 = vmatprep.subr.bf16.mxu0 0
        %1233 = vmatpush1.bf16.msra.mxu0 0
        %1234 = vmatprep.subr.bf16.mxu0 0
        %1235 = vmatpush1.bf16.msra.mxu0 0
        %1236 = vmatprep.subr.bf16.mxu0 0
        %1237 = vmatpush1.bf16.msra.mxu0 0
        %1238 = vmatprep.subr.bf16.mxu0 0
        %1239 = vmatpush1.bf16.msra.mxu0 0
        %1240 = vmatprep.subr.bf16.mxu0 0
        %1241 = vmatpush1.bf16.msra.mxu0 0
        %1242 = vmatprep.subr.bf16.mxu0 0
        %1243 = vmatpush1.bf16.msra.mxu0 0
        %1244 = vmatprep.subr.bf16.mxu0 0
        %1245 = vmatpush1.bf16.msra.mxu0 0
        %1246 = vmatprep.subr.bf16.mxu0 0
        %1247 = vmatpush1.bf16.msra.mxu0 0
        %1248 = vmatprep.subr.bf16.mxu0 0
        %1249 = vmatpush1.bf16.msra.mxu0 0
        %1250 = vmatprep.subr.bf16.mxu0 0
        %1251 = vmatpush1.bf16.msra.mxu0 0
        %1252 = vmatprep.subr.bf16.mxu0 0
        %1253 = vmatpush1.bf16.msra.mxu0 0
        %1254 = vmatprep.subr.bf16.mxu0 0
        %1255 = vmatpush1.bf16.msra.mxu0 0
        %1256 = vmatprep.mubr.bf16.mxu0 0
        %1257 = vmatmul.mubr.bf16.gmra.mrb[0].mxu0 %v1219
        %v1258 = vpop.f32.mrb[0].mxu0
        %v1259 = vadd.f32 0.0, %v1258
        %v1260 = vpop.f32.mrb[0].mxu0
        %v1261 = vpop.f32.mrb[0].mxu0
        %v1262 = vpop.f32.mrb[0].mxu0
        %1263 = vdwg.mxu0
        %v1265 = vsel %vm868, %v1124, 0
        %v1268 = vsel %vm1128, %v867, 0
        %1270 = vmatprep.subr.bf16.mxu0 0
        %1271 = vmatpush1.bf16.msra.mxu0 %v1268
        %1272 = vmatprep.subr.bf16.mxu0 0
        %1273 = vmatpush1.bf16.msra.mxu0 0
        %1274 = vmatprep.subr.bf16.mxu0 0
        %1275 = vmatpush1.bf16.msra.mxu0 0
        %1276 = vmatprep.subr.bf16.mxu0 0
        %1277 = vmatpush1.bf16.msra.mxu0 0
        %1278 = vmatprep.subr.bf16.mxu0 0
        %1279 = vmatpush1.bf16.msra.mxu0 0
        %1280 = vmatprep.subr.bf16.mxu0 0
        %1281 = vmatpush1.bf16.msra.mxu0 0
        %1282 = vmatprep.subr.bf16.mxu0 0
        %1283 = vmatpush1.bf16.msra.mxu0 0
        %1284 = vmatprep.subr.bf16.mxu0 0
        %1285 = vmatpush1.bf16.msra.mxu0 0
        %1286 = vmatprep.subr.bf16.mxu0 0
        %1287 = vmatpush1.bf16.msra.mxu0 0
        %1288 = vmatprep.subr.bf16.mxu0 0
        %1289 = vmatpush1.bf16.msra.mxu0 0
        %1290 = vmatprep.subr.bf16.mxu0 0
        %1291 = vmatpush1.bf16.msra.mxu0 0
        %1292 = vmatprep.subr.bf16.mxu0 0
        %1293 = vmatpush1.bf16.msra.mxu0 0
        %1294 = vmatprep.subr.bf16.mxu0 0
        %1295 = vmatpush1.bf16.msra.mxu0 0
        %1296 = vmatprep.subr.bf16.mxu0 0
        %1297 = vmatpush1.bf16.msra.mxu0 0
        %1298 = vmatprep.subr.bf16.mxu0 0
        %1299 = vmatpush1.bf16.msra.mxu0 0
        %1300 = vmatprep.subr.bf16.mxu0 0
        %1301 = vmatpush1.bf16.msra.mxu0 0
        %1302 = vmatprep.mubr.bf16.mxu0 0
        %1303 = vmatmul.mubr.bf16.gmra.mrb[0].mxu0 %v1265
        %v1304 = vpop.f32.mrb[0].mxu0
        %v1305 = vadd.f32 0.0, %v1304
        %v1306 = vpop.f32.mrb[0].mxu0
        %v1307 = vpop.f32.mrb[0].mxu0
        %v1308 = vpop.f32.mrb[0].mxu0
        %1309 = vdwg.mxu0
        %1311 = vrot.lane.b32.xlu0 %v1213, 8
        %v1312 = vpop.permute.xlu0 %1311
        %1315 = vrot.lane.b32.xlu0 %v1259, 16
        %v1316 = vpop.permute.xlu0 %1315
        %1319 = vrot.lane.b32.xlu0 %v1305, 24
        %v1320 = vpop.permute.xlu0 %1319
        %v1322 = vsel %vm868, %v1167, %v1312
        %vm1323 = vcmask 130048
        %v1324 = vsel %vm1323, %v1322, %v1316
        %vm1325 = vcmask 195584
        %v1326 = vsel %vm1325, %v1324, %v1320
        %v1327 = vpack.c.bf16 %v1326, %v1326
        %v1328 = vld [vmem:[%s10] sm:$0xf]
        %v1329 = vld [vmem:[%s10 + $0x4] sm:$0xf]
        %v1330 = vld [vmem:[%s10 + $0x8] sm:$0xf]
        %v1331 = vld [vmem:[%s10 + $0xc] sm:$0xf]
        %v1332 = vld [vmem:[%s11] sm:$0x1]
        %v1334 = vlaneseq
        %v1335 = vshrl.u32 %v1334, 7
        %v1336 = vsub.s32 0, %v1335
        %v1337 = vrot.slane %v1332, %v1336
        %v1343 = vunpack.c.l.b16 %v1328
        %v1344 = vunpack.c.l.b16 %v1329
        %v1345 = vunpack.c.l.b16 %v1330
        %v1346 = vunpack.c.l.b16 %v1331
        %v1347 = vpack.c.b16 %v1344, %v1343
        %v1348 = vpack.c.b16 %v1346, %v1345
        %v1352 = vsel %vm645, %v1327, 0
        %1354 = vmatprep.subr.bf16.mxu0 0
        %1355 = vmatpush1.bf16.msra.mxu0 %v1347
        %1356 = vmatprep.subr.bf16.mxu0 0
        %1357 = vmatpush1.bf16.msra.mxu0 %v1348
        %1358 = vmatprep.subr.bf16.mxu0 0
        %1359 = vmatpush1.bf16.msra.mxu0 0
        %1360 = vmatprep.subr.bf16.mxu0 0
        %1361 = vmatpush1.bf16.msra.mxu0 0
        %1362 = vmatprep.subr.bf16.mxu0 0
        %1363 = vmatpush1.bf16.msra.mxu0 0
        %1364 = vmatprep.subr.bf16.mxu0 0
        %1365 = vmatpush1.bf16.msra.mxu0 0
        %1366 = vmatprep.subr.bf16.mxu0 0
        %1367 = vmatpush1.bf16.msra.mxu0 0
        %1368 = vmatprep.subr.bf16.mxu0 0
        %1369 = vmatpush1.bf16.msra.mxu0 0
        %1370 = vmatprep.subr.bf16.mxu0 0
        %1371 = vmatpush1.bf16.msra.mxu0 0
        %1372 = vmatprep.subr.bf16.mxu0 0
        %1373 = vmatpush1.bf16.msra.mxu0 0
        %1374 = vmatprep.subr.bf16.mxu0 0
        %1375 = vmatpush1.bf16.msra.mxu0 0
        %1376 = vmatprep.subr.bf16.mxu0 0
        %1377 = vmatpush1.bf16.msra.mxu0 0
        %1378 = vmatprep.subr.bf16.mxu0 0
        %1379 = vmatpush1.bf16.msra.mxu0 0
        %1380 = vmatprep.subr.bf16.mxu0 0
        %1381 = vmatpush1.bf16.msra.mxu0 0
        %1382 = vmatprep.subr.bf16.mxu0 0
        %1383 = vmatpush1.bf16.msra.mxu0 0
        %1384 = vmatprep.subr.bf16.mxu0 0
        %1385 = vmatpush1.bf16.msra.mxu0 0
        %1386 = vmatprep.mubr.bf16.mxu0 0
        %1387 = vmatmul.mubr.bf16.gmra.mrb[0].mxu0 %v1352
        %v1388 = vpop.f32.mrb[0].mxu0
        %v1389 = vadd.f32 %v1337, %v1388
        %v1390 = vpop.f32.mrb[0].mxu0
        %v1391 = vpop.f32.mrb[0].mxu0
        %v1392 = vpop.f32.mrb[0].mxu0
        %1393 = vdwg.mxu0
        %1394 = vst.msk [vmem:[%s611] sm:$0xff] %vm645, %v1389
        %s1395 = sand.u32 %s321, 1
        %s1396 = scalar_lea.sflag [#allocation4], %s1395
        %s1397 = sand.u32 %s321, 1
        %s1398 = smul.addr %s1397, 8
        %s1399 = scalar_lea.vmem [#allocation14], %s1398
        %s1400 = sand.u32 %s347, 1
        %s1401 = scalar_lea.sflag [#allocation16], %s1400
        %s1402 = sand.u32 %s347, 1
        %s1403 = smul.addr %s1402, 32
        %s1404 = scalar_lea.vmem [#allocation15], %s1403
        // Predicated region
        $region97: #{tpu_custom_call.1} parent=67 // pred_check
          %p1405 = pneg %p331
        $region98: #{tpu_custom_call.1} parent=67 // pred_check_branch
          %1407 = sbr.rel (%p1405) target = $region100
        $region99: #{tpu_custom_call.1} parent=67 // pred_region
          %s1409 = ssub.s32 128, 128
          %1410 = vsyncadd %s1396, %s1409
          %s1411 = smul.addr %s41, 128
          %s1412 = scalar_lea.hbm %s12, %s1411
          %s1414 = sshll.u32 %s1399, 4
          %s1415 = int_to_ptr.vmem [resolvable:$true] %s1414
          %1417 = dma.vmem_to_hbm [thread:$0]  %s1415, 128, %s1412, %s1396
        $region100: #{tpu_custom_call.1} parent=67 // pred_fallthru
          _
        // Predicated region
        $region101: #{tpu_custom_call.1} parent=67 // pred_check
          %p1418 = pneg %p357
        $region102: #{tpu_custom_call.1} parent=67 // pred_check_branch
          %1420 = sbr.rel (%p1418) target = $region104
        $region103: #{tpu_custom_call.1} parent=67 // pred_region
          %s1422 = ssub.s32 512, 512
          %1423 = vsyncadd %s1401, %s1422
          %s1424 = smul.addr %s41, 4
          %s1425 = smul.addr %s1424, 128
          %s1426 = scalar_lea.hbm %s13, %s1425
          %s1427 = sshll.u32 %s1404, 4
          %s1428 = int_to_ptr.vmem [resolvable:$true] %s1427
          %1433 = dma.vmem_to_hbm [thread:$0]  %s1428, 512, %s1426, %s1401, 128, 128, 8
        $region104: #{tpu_custom_call.1} parent=67 // pred_fallthru
          _
      $region68: #{tpu_custom_call.1} parent=5 // pred_fallthru
        _
      %p1434 = scmp.le.s32.totalorder 2, %s36
      // Predicated region
      $region105: #{tpu_custom_call.1} parent=5 // pred_check
        %p1435 = pneg %p1434
      $region106: #{tpu_custom_call.1} parent=5 // pred_check_branch
        %1437 = sbr.rel (%p1435) target = $region108
      $region107: #{tpu_custom_call.1} parent=5 // pred_region
        %s1438 = ssub.s32 %s36, 2
        // Predicated region
        $region109: #{tpu_custom_call.1} parent=107 // pred_check
          %p1439 = pneg %p337
        $region110: #{tpu_custom_call.1} parent=107 // pred_check_branch
          %1441 = sbr.rel (%p1439) target = $region112
        $region111: #{tpu_custom_call.1} parent=107 // pred_region
          %s1442 = sand.u32 %s322, 1
          %s1443 = scalar_lea.sflag [#allocation4], %s1442
          %s1444 = sand.u32 %s322, 1
          %s1445 = smul.addr %s1444, 8
          %s1446 = scalar_lea.vmem [#allocation14], %s1445
          %1447 = dma.done %s1443, 128
        $region112: #{tpu_custom_call.1} parent=107 // pred_fallthru
          _
        // Predicated region
        $region113: #{tpu_custom_call.1} parent=107 // pred_check
          %p1448 = pneg %p363
        $region114: #{tpu_custom_call.1} parent=107 // pred_check_branch
          %1450 = sbr.rel (%p1448) target = $region116
        $region115: #{tpu_custom_call.1} parent=107 // pred_region
          %s1451 = sand.u32 %s348, 1
          %s1452 = scalar_lea.sflag [#allocation16], %s1451
          %s1453 = sand.u32 %s348, 1
          %s1454 = smul.addr %s1453, 32
          %s1455 = scalar_lea.vmem [#allocation15], %s1454
          %1456 = dma.done %s1452, 512
        $region116: #{tpu_custom_call.1} parent=107 // pred_fallthru
          _
      $region108: #{tpu_custom_call.1} parent=5 // pred_fallthru
        _
    $region6: #{tpu_custom_call.1} parent=1 // loop_footer
      %s40 = sadd.s32 1, %s36
    $region7: #{tpu_custom_call.1} parent=1 // loop_footer_branch
      %35 = sbr.rel target = $region3
    $region8: #{tpu_custom_call.1} parent=1 // loop_exit
      _
    %1457 = vsyncpa [#allocation3], 1
    %s1458 = scalar_lea.sflag [#allocation3], 1
    %1459 = vsyncpa %s1458, 1
    %1460 = vsyncpa [#allocation6], 1
    %s1461 = scalar_lea.sflag [#allocation6], 1
    %1462 = vsyncpa %s1461, 1
    %1463 = vsyncpa [#allocation9], 1
    %s1464 = scalar_lea.sflag [#allocation9], 1
    %1465 = vsyncpa %s1464, 1
    %1466 = vsyncpa [#allocation12], 1
    %1467 = vsyncpa [#allocation4], 1
    %s1468 = scalar_lea.sflag [#allocation4], 1
    %1469 = vsyncpa %s1468, 1
    %1470 = vsyncpa [#allocation16], 1
    %s1471 = scalar_lea.sflag [#allocation16], 1
    %1472 = vsyncpa %s1471, 1

</llo_original>
